<compile_context>
chip_gen: v7x
topology: tpu7x:2x2x1
jax: 0.10.0
libtpu: 0.0.40
codegen_flags: <defaults>
</compile_context>

<pallas_src>
import functools

import numpy as np
import jax
import jax.numpy as jnp
from jax import lax
from jax.experimental import pallas as pl
from jax.experimental.pallas import tpu as pltpu

LN_EPS = 1e-6          # ViT-style LayerNorm epsilon
DIM_OF_DATA = 30       # forced: Propensity_net_NN.fc1 expects 30 input features
DOWN_OUT_DIMS = 30     # forced: matmul(embedding, weight) requires == dim_of_data
N_PS_CLASSES = 2       # Propensity_net_NN.ps_out out_features
PACKED_ROWS = DOWN_OUT_DIMS + N_PS_CLASSES   # 32 rows = exact 8-sublane multiple
PREDICT_DIMS = 4       # sizes the unused `predict` layer only
EMBED_DIM = 1          # forced by the transpose in TransformerEncoder.forward
N_HEADS = 1            # head_dim = embed_dim // n_heads must be >= 1
DEPTH = 3

MXU_PREC = lax.Precision.HIGHEST   # kernel is HBM-bound; extra MXU passes are free
REF_PREC = lax.Precision.HIGHEST


def _gelu(x):
    # TODO(synk): `Block` is not given; assuming GELU activation in the MLP.
    # Exact erf form matches PyTorch nn.GELU's default; runs host-side only
    # (constant folding), never inside the Pallas kernel.
    return jax.nn.gelu(x, approximate=False)


def _kernel(x_ref, weff_ref, beff_ref, w1_ref, b1_ref,
            wfc2_ref, bfc2_ref, wout_ref, bout_ref, out_ref):
    """One batch tile.

    x_ref   : (TB, 30)  batch-major input tile, exactly as it lives in HBM.
    out_ref : (32, TB)  feature-major packed output (batch on the 128-lane axis,
              so every store is lane-dense): rows 0..29 embedding, 30..31 logits.
    """
    x = x_ref[...]                                               # (TB, 30)

    # Feature-major matmuls contracting the 30-feature axis of the batch-major
    # tile directly (q @ k.T style) -- no host transpose, no explicit XLU node.
    def feat_dot(w, b):                                          # (30,30)x(TB,30)->(30,TB)
        return lax.dot_general(
            w, x, dimension_numbers=(((1,), (1,)), ((), ())),
            precision=MXU_PREC, preferred_element_type=jnp.float32) + b

    # Fused (transformer blocks + down + subspace) affine map.
    emb = feat_dot(weff_ref[...], beff_ref[...])                 # (30, TB)
    # Propensity net; fc1 was host-fused with the input map so this matmul is
    # independent of `emb` (two independent MXU ops at the head of the chain).
    h = jnp.maximum(feat_dot(w1_ref[...], b1_ref[...]), 0.0)     # (30, TB)
    h = jnp.maximum(
        jnp.dot(wfc2_ref[...], h, precision=MXU_PREC,
                preferred_element_type=jnp.float32) + bfc2_ref[...], 0.0)
    pred = jnp.dot(wout_ref[...], h, precision=MXU_PREC,
                   preferred_element_type=jnp.float32) + bout_ref[...]   # (2, TB)

    out_ref[0:DOWN_OUT_DIMS, :] = emb
    out_ref[DOWN_OUT_DIMS:PACKED_ROWS, :] = pred


def _block_constant(params):
    """x-independent offset contributed by the transformer blocks.

    With embed_dim == 1, LayerNorm returns its bias (the centered input is
    exactly 0), q/k/v are scalars, softmax over equal scores is uniform, and
    the MLP input is constant -> each Block is exactly `x += c_d`."""
    c = jnp.float32(0.0)
    for b in params["blocks"]:
        n1 = b["ln1_b"][0].astype(jnp.float32)                   # LN1 output
        v = n1 * b["qkv_w"][2, 0] + b["qkv_b"][2]                # value scalar
        c_attn = v * b["proj_w"][0, 0] + b["proj_b"][0]          # uniform attn -> v
        n2 = b["ln2_b"][0].astype(jnp.float32)                   # LN2 output
        mid = _gelu(n2 * b["fc1_w"][:, 0] + b["fc1_b"])          # (2,)
        c_mlp = jnp.dot(mid, b["fc2_w"][0, :]) + b["fc2_b"][0]
        c = c + c_attn + c_mlp
    return c


def _choose_batch_tile(n, tb):
    """128-lane-aligned batch tile; keep >=2 grid steps when possible (v7x has
    two TensorCores and the batch axis is marked "parallel")."""
    if n <= 128:
        return n                                  # single full block (== array dims)
    tb = max(128, (int(tb) // 128) * 128)
    tb = min(tb, pl.cdiv(n, 128) * 128)           # never exceed the padded batch
    if pl.cdiv(n, tb) < 2:
        tb = max(128, pl.cdiv(pl.cdiv(n, 2), 128) * 128)
    return tb


@functools.partial(jax.jit, static_argnums=(2,))
def _forward_jit(x, params, tb):
    if x.ndim == 3:
        xb = jnp.squeeze(x, axis=1)
    else:
        xb = x
    xb = xb.astype(jnp.float32)
    n, d = xb.shape
    assert d == DIM_OF_DATA

    # ---- host-side constant folding / weight fusion (tiny, one-time) ----
    c_total = _block_constant(params)
    down_w = params["down_w"].astype(jnp.float32)                # (30, 30)  (out, in)
    sub_w = params["sub_w"].astype(jnp.float32)                  # (30, 30)
    w_eff = jnp.matmul(down_w.T, sub_w, precision=REF_PREC)      # emb = x @ w_eff + b_eff
    b_eff = (jnp.matmul(params["down_b"].astype(jnp.float32), sub_w, precision=REF_PREC)
             + c_total * jnp.sum(w_eff, axis=0))                 # block const folded in
    w_eff_t = w_eff.T                                            # emb.T = w_eff_t @ x.T

    wfc1 = params["ps_fc1_w"].astype(jnp.float32)                # (30, 30)  (out, in)
    wfc2 = params["ps_fc2_w"].astype(jnp.float32)
    wout = params["ps_out_w"].astype(jnp.float32)                # (2, 30)
    # fc1 folded into the input affine map: pre1.T = w1_t @ x.T + b1
    w1_t = jnp.matmul(wfc1, w_eff_t, precision=REF_PREC)         # (30, 30)
    b1 = jnp.matmul(wfc1, b_eff, precision=REF_PREC) + params["ps_fc1_b"].astype(jnp.float32)

    beff_c = b_eff[:, None]                                      # (30, 1) column biases
    b1_c = b1[:, None]
    bfc2_c = params["ps_fc2_b"].astype(jnp.float32)[:, None]
    bout_c = params["ps_out_b"].astype(jnp.float32)[:, None]     # (2, 1)

    tb = _choose_batch_tile(n, tb)
    grid = (pl.cdiv(n, tb),)

    def rep(arr):
        nd = arr.ndim
        return pl.BlockSpec(arr.shape, lambda i, _nd=nd: (0,) * _nd)

    cost = pl.CostEstimate(
        flops=2 * n * DIM_OF_DATA * (3 * DOWN_OUT_DIMS + N_PS_CLASSES),
        bytes_accessed=4 * n * (DIM_OF_DATA + PACKED_ROWS) + 16_000,
        transcendentals=0)

    packed = pl.pallas_call(
        _kernel,
        out_shape=jax.ShapeDtypeStruct((PACKED_ROWS, n), jnp.float32),
        grid=grid,
        in_specs=[
            pl.BlockSpec((tb, DIM_OF_DATA), lambda i: (i, 0)),   # x, batch-major, no pad
            rep(w_eff_t), rep(beff_c),
            rep(w1_t), rep(b1_c),
            rep(wfc2), rep(bfc2_c),
            rep(wout), rep(bout_c),
        ],
        out_specs=pl.BlockSpec((PACKED_ROWS, tb), lambda i: (0, i)),
        compiler_params=pltpu.CompilerParams(dimension_semantics=("parallel",)),
        cost_estimate=cost,
    )(xb, w_eff_t, beff_c, w1_t, b1_c, wfc2, bfc2_c, wout, bout_c)

    # Un-pack to the module's output shapes inside the same jit so XLA fuses the
    # transpose/reshape into one copy pass.
    emb = packed[:DOWN_OUT_DIMS, :].T[:, None, :]                # (n, 1, 30)
    pred = packed[DOWN_OUT_DIMS:, :].T[:, None, :]               # (n, 1, 2)
    return emb, pred


def sub_trans_casual_forward(x, params, *, tb=2048):
    """x: (n, dims) or (n, 1, dims). Returns (embedding, prediction) of shapes
    (n, 1, 30) and (n, 1, 2), matching the PyTorch module."""
    return _forward_jit(x, params, tb)


def init_params(key):
    """Deterministic synthetic parameters matching the module's shapes."""
    ks = iter(jax.random.split(key, 64))

    def u(shape, s=0.5):
        return jax.random.uniform(next(ks), shape, jnp.float32, -s, s)

    blocks = []
    for _ in range(DEPTH):
        blocks.append(dict(
            ln1_w=u((EMBED_DIM,)) + 1.0, ln1_b=u((EMBED_DIM,)),
            qkv_w=u((3 * EMBED_DIM, EMBED_DIM)), qkv_b=u((3 * EMBED_DIM,)),
            proj_w=u((EMBED_DIM, EMBED_DIM)), proj_b=u((EMBED_DIM,)),
            ln2_w=u((EMBED_DIM,)) + 1.0, ln2_b=u((EMBED_DIM,)),
            fc1_w=u((2 * EMBED_DIM, EMBED_DIM)), fc1_b=u((2 * EMBED_DIM,)),  # mlp_ratio=2.0
            fc2_w=u((EMBED_DIM, 2 * EMBED_DIM)), fc2_b=u((EMBED_DIM,)),
        ))
    return dict(
        blocks=blocks,
        down_w=u((DOWN_OUT_DIMS, DIM_OF_DATA)), down_b=u((DOWN_OUT_DIMS,)),
        sub_w=jax.random.uniform(next(ks), (DIM_OF_DATA, DOWN_OUT_DIMS), jnp.float32),  # torch.rand
        ps_fc1_w=u((30, 30)), ps_fc1_b=u((30,)),
        ps_fc2_w=u((30, 30)), ps_fc2_b=u((30,)),
        ps_out_w=u((N_PS_CLASSES, 30)), ps_out_b=u((N_PS_CLASSES,)),
    )


def reference_forward(x, params):
    """Pure-JAX mirror of the PyTorch forward (general (N, T, C) formulation):
    validates the constant-folding and weight fusion end-to-end."""
    if x.ndim == 2:
        x = x[:, None, :]
    h = jnp.transpose(x.astype(jnp.float32), (0, 2, 1))           # (N, D, 1)
    scale = float(EMBED_DIM // N_HEADS) ** -0.5
    for b in params["blocks"]:
        mu = jnp.mean(h, axis=-1, keepdims=True)
        var = jnp.mean((h - mu) ** 2, axis=-1, keepdims=True)
        n1 = (h - mu) * lax.rsqrt(var + LN_EPS) * b["ln1_w"] + b["ln1_b"]
        qkv = n1 @ b["qkv_w"].T + b["qkv_b"]                      # (N, D, 3)
        q, k, v = qkv[..., 0:1], qkv[..., 1:2], qkv[..., 2:3]
        scores = (q @ jnp.swapaxes(k, -1, -2)) * scale            # (N, D, D)
        attn = jax.nn.softmax(scores, axis=-1)
        h = h + ((attn @ v) @ b["proj_w"].T + b["proj_b"])
        mu2 = jnp.mean(h, axis=-1, keepdims=True)
        var2 = jnp.mean((h - mu2) ** 2, axis=-1, keepdims=True)
        n2 = (h - mu2) * lax.rsqrt(var2 + LN_EPS) * b["ln2_w"] + b["ln2_b"]
        mid = _gelu(n2 @ b["fc1_w"].T + b["fc1_b"])
        h = h + (mid @ b["fc2_w"].T + b["fc2_b"])
    h = jnp.transpose(h, (0, 2, 1))                               # (N, 1, D)
    emb = jnp.matmul(h, params["down_w"].T, precision=REF_PREC) + params["down_b"]
    emb = jnp.squeeze(emb, axis=1)                                # (N, 30)
    emb = jnp.matmul(emb, params["sub_w"], precision=REF_PREC)
    emb = emb[:, None, :]                                         # (N, 1, 30)
    a = jax.nn.relu(jnp.matmul(emb, params["ps_fc1_w"].T, precision=REF_PREC) + params["ps_fc1_b"])
    a = jax.nn.relu(jnp.matmul(a, params["ps_fc2_w"].T, precision=REF_PREC) + params["ps_fc2_b"])
    pred = jnp.matmul(a, params["ps_out_w"].T, precision=REF_PREC) + params["ps_out_b"]
    return emb, pred


if __name__ == "__main__":
    key = jax.random.PRNGKey(0)
    pkey, xkey = jax.random.split(key)
    params = init_params(pkey)

    # n not a multiple of the tile -> exercises the masked partial last block;
    # the auto tile chooser picks tb=256 -> a 2-step "parallel" grid (v7x megacore).
    n_samples = 300
    x = jax.random.normal(xkey, (n_samples, 1, DIM_OF_DATA), jnp.float32)

    emb, pred = sub_trans_casual_forward(x, params)
    emb = jax.block_until_ready(emb)
    pred = jax.block_until_ready(pred)

    assert emb.shape == (n_samples, 1, DOWN_OUT_DIMS)
    assert pred.shape == (n_samples, 1, N_PS_CLASSES)

    ref_emb, ref_pred = reference_forward(x, params)
    np.testing.assert_allclose(np.asarray(emb), np.asarray(ref_emb), rtol=2e-3, atol=2e-3)
    np.testing.assert_allclose(np.asarray(pred), np.asarray(ref_pred), rtol=2e-3, atol=2e-3)

    print("KERNEL_OK")
</pallas_src>

<mosaic_0001>
module attributes {stable_mosaic.version = 11 : i64} {
  func.func @_kernel(%arg0: i32, %arg1: memref<256x30xf32, #tpu.memory_space<vmem>>, %arg2: memref<30x30xf32, #tpu.memory_space<vmem>>, %arg3: memref<30x1xf32, #tpu.memory_space<vmem>>, %arg4: memref<30x30xf32, #tpu.memory_space<vmem>>, %arg5: memref<30x1xf32, #tpu.memory_space<vmem>>, %arg6: memref<30x30xf32, #tpu.memory_space<vmem>>, %arg7: memref<30x1xf32, #tpu.memory_space<vmem>>, %arg8: memref<2x30xf32, #tpu.memory_space<vmem>>, %arg9: memref<2x1xf32, #tpu.memory_space<vmem>>, %arg10: memref<32x256xf32, #tpu.memory_space<vmem>>) attributes {dimension_semantics = [#tpu.dimension_semantics<parallel>], iteration_bounds = array<i64: 2>, scalar_prefetch = 0 : i64, scratch_operands = 0 : i64, tpu.core_type = #tpu.core_type<tc>, window_params = [{transform_indices = @transform_0, window_bounds = array<i64: 256, 30>}, {pipeline_mode = #tpu.pipeline_mode<synchronous>, transform_indices = @transform_1, window_bounds = array<i64: 30, 30>}, {pipeline_mode = #tpu.pipeline_mode<synchronous>, transform_indices = @transform_2, window_bounds = array<i64: 30, 1>}, {pipeline_mode = #tpu.pipeline_mode<synchronous>, transform_indices = @transform_3, window_bounds = array<i64: 30, 30>}, {pipeline_mode = #tpu.pipeline_mode<synchronous>, transform_indices = @transform_4, window_bounds = array<i64: 30, 1>}, {pipeline_mode = #tpu.pipeline_mode<synchronous>, transform_indices = @transform_5, window_bounds = array<i64: 30, 30>}, {pipeline_mode = #tpu.pipeline_mode<synchronous>, transform_indices = @transform_6, window_bounds = array<i64: 30, 1>}, {pipeline_mode = #tpu.pipeline_mode<synchronous>, transform_indices = @transform_7, window_bounds = array<i64: 2, 30>}, {pipeline_mode = #tpu.pipeline_mode<synchronous>, transform_indices = @transform_8, window_bounds = array<i64: 2, 1>}, {transform_indices = @transform_9, window_bounds = array<i64: 32, 256>}]} {
    %c0 = arith.constant 0 : index
    %c0_0 = arith.constant 0 : index
    %0 = vector.load %arg1[%c0, %c0_0] : memref<256x30xf32, #tpu.memory_space<vmem>>, vector<256x30xf32>
    %c0_1 = arith.constant 0 : index
    %c0_2 = arith.constant 0 : index
    %1 = vector.load %arg2[%c0_1, %c0_2] : memref<30x30xf32, #tpu.memory_space<vmem>>, vector<30x30xf32>
    %c0_3 = arith.constant 0 : index
    %c0_4 = arith.constant 0 : index
    %2 = vector.load %arg3[%c0_3, %c0_4] : memref<30x1xf32, #tpu.memory_space<vmem>>, vector<30x1xf32>
    %cst = arith.constant dense<0.000000e+00> : vector<30x256xf32>
    %3 = tpu.matmul %1, %0, %cst {dimension_numbers = #tpu.dot_dimension_numbers<[1], [1], [0], [0], [0, 0, 1, 0], [], []>, precision = #tpu.contract_precision<fp32>} : vector<30x30xf32>, vector<256x30xf32>, vector<30x256xf32> -> vector<30x256xf32>
    %4 = vector.broadcast %2 : vector<30x1xf32> to vector<30x256xf32>
    %5 = arith.addf %3, %4 : vector<30x256xf32>
    %c0_5 = arith.constant 0 : index
    %c0_6 = arith.constant 0 : index
    %6 = vector.load %arg4[%c0_5, %c0_6] : memref<30x30xf32, #tpu.memory_space<vmem>>, vector<30x30xf32>
    %c0_7 = arith.constant 0 : index
    %c0_8 = arith.constant 0 : index
    %7 = vector.load %arg5[%c0_7, %c0_8] : memref<30x1xf32, #tpu.memory_space<vmem>>, vector<30x1xf32>
    %cst_9 = arith.constant dense<0.000000e+00> : vector<30x256xf32>
    %8 = tpu.matmul %6, %0, %cst_9 {dimension_numbers = #tpu.dot_dimension_numbers<[1], [1], [0], [0], [0, 0, 1, 0], [], []>, precision = #tpu.contract_precision<fp32>} : vector<30x30xf32>, vector<256x30xf32>, vector<30x256xf32> -> vector<30x256xf32>
    %9 = vector.broadcast %7 : vector<30x1xf32> to vector<30x256xf32>
    %10 = arith.addf %8, %9 : vector<30x256xf32>
    %cst_10 = arith.constant 0.000000e+00 : f32
    %11 = vector.broadcast %cst_10 : f32 to vector<30x256xf32>
    %12 = arith.maximumf %10, %11 : vector<30x256xf32>
    %c0_11 = arith.constant 0 : index
    %c0_12 = arith.constant 0 : index
    %13 = vector.load %arg6[%c0_11, %c0_12] : memref<30x30xf32, #tpu.memory_space<vmem>>, vector<30x30xf32>
    %cst_13 = arith.constant dense<0.000000e+00> : vector<30x256xf32>
    %14 = tpu.matmul %13, %12, %cst_13 {dimension_numbers = #tpu.dot_dimension_numbers<[1], [0], [0], [1], [0, 0, 1, 1], [], []>, precision = #tpu.contract_precision<fp32>} : vector<30x30xf32>, vector<30x256xf32>, vector<30x256xf32> -> vector<30x256xf32>
    %c0_14 = arith.constant 0 : index
    %c0_15 = arith.constant 0 : index
    %15 = vector.load %arg7[%c0_14, %c0_15] : memref<30x1xf32, #tpu.memory_space<vmem>>, vector<30x1xf32>
    %16 = vector.broadcast %15 : vector<30x1xf32> to vector<30x256xf32>
    %17 = arith.addf %14, %16 : vector<30x256xf32>
    %cst_16 = arith.constant 0.000000e+00 : f32
    %18 = vector.broadcast %cst_16 : f32 to vector<30x256xf32>
    %19 = arith.maximumf %17, %18 : vector<30x256xf32>
    %c0_17 = arith.constant 0 : index
    %c0_18 = arith.constant 0 : index
    %20 = vector.load %arg8[%c0_17, %c0_18] : memref<2x30xf32, #tpu.memory_space<vmem>>, vector<2x30xf32>
    %cst_19 = arith.constant dense<0.000000e+00> : vector<2x256xf32>
    %21 = tpu.matmul %20, %19, %cst_19 {dimension_numbers = #tpu.dot_dimension_numbers<[1], [0], [0], [1], [0, 0, 1, 1], [], []>, precision = #tpu.contract_precision<fp32>} : vector<2x30xf32>, vector<30x256xf32>, vector<2x256xf32> -> vector<2x256xf32>
    %c0_20 = arith.constant 0 : index
    %c0_21 = arith.constant 0 : index
    %22 = vector.load %arg9[%c0_20, %c0_21] : memref<2x1xf32, #tpu.memory_space<vmem>>, vector<2x1xf32>
    %23 = vector.broadcast %22 : vector<2x1xf32> to vector<2x256xf32>
    %24 = arith.addf %21, %23 : vector<2x256xf32>
    %c0_22 = arith.constant 0 : index
    %c0_23 = arith.constant 0 : index
    %25 = vector.load %arg10[%c0_22, %c0_23] : memref<32x256xf32, #tpu.memory_space<vmem>>, vector<30x256xf32>
    tpu.vector_store %arg10[%c0_22, %c0_23], %5 {strides = array<i32>} : memref<32x256xf32, #tpu.memory_space<vmem>>, vector<30x256xf32>,
    %c30 = arith.constant 30 : index
    %c0_24 = arith.constant 0 : index
    %26 = vector.load %arg10[%c30, %c0_24] : memref<32x256xf32, #tpu.memory_space<vmem>>, vector<2x256xf32>
    tpu.vector_store %arg10[%c30, %c0_24], %24 {strides = array<i32>} : memref<32x256xf32, #tpu.memory_space<vmem>>, vector<2x256xf32>,
    return
  }
  func.func @transform_0(%arg0: i32) -> (i32, i32) {
    %c0_i32 = arith.constant 0 : i32
    %c0_i32_0 = arith.constant 0 : i32
    return %arg0, %c0_i32 : i32, i32
  }
  func.func @transform_1(%arg0: i32) -> (i32, i32) {
    %c0_i32 = arith.constant 0 : i32
    %c0_i32_0 = arith.constant 0 : i32
    %c0_i32_1 = arith.constant 0 : i32
    return %c0_i32, %c0_i32_0 : i32, i32
  }
  func.func @transform_2(%arg0: i32) -> (i32, i32) {
    %c0_i32 = arith.constant 0 : i32
    %c0_i32_0 = arith.constant 0 : i32
    %c0_i32_1 = arith.constant 0 : i32
    return %c0_i32, %c0_i32_0 : i32, i32
  }
  func.func @transform_3(%arg0: i32) -> (i32, i32) {
    %c0_i32 = arith.constant 0 : i32
    %c0_i32_0 = arith.constant 0 : i32
    %c0_i32_1 = arith.constant 0 : i32
    return %c0_i32, %c0_i32_0 : i32, i32
  }
  func.func @transform_4(%arg0: i32) -> (i32, i32) {
    %c0_i32 = arith.constant 0 : i32
    %c0_i32_0 = arith.constant 0 : i32
    %c0_i32_1 = arith.constant 0 : i32
    return %c0_i32, %c0_i32_0 : i32, i32
  }
  func.func @transform_5(%arg0: i32) -> (i32, i32) {
    %c0_i32 = arith.constant 0 : i32
    %c0_i32_0 = arith.constant 0 : i32
    %c0_i32_1 = arith.constant 0 : i32
    return %c0_i32, %c0_i32_0 : i32, i32
  }
  func.func @transform_6(%arg0: i32) -> (i32, i32) {
    %c0_i32 = arith.constant 0 : i32
    %c0_i32_0 = arith.constant 0 : i32
    %c0_i32_1 = arith.constant 0 : i32
    return %c0_i32, %c0_i32_0 : i32, i32
  }
  func.func @transform_7(%arg0: i32) -> (i32, i32) {
    %c0_i32 = arith.constant 0 : i32
    %c0_i32_0 = arith.constant 0 : i32
    %c0_i32_1 = arith.constant 0 : i32
    return %c0_i32, %c0_i32_0 : i32, i32
  }
  func.func @transform_8(%arg0: i32) -> (i32, i32) {
    %c0_i32 = arith.constant 0 : i32
    %c0_i32_0 = arith.constant 0 : i32
    %c0_i32_1 = arith.constant 0 : i32
    return %c0_i32, %c0_i32_0 : i32, i32
  }
  func.func @transform_9(%arg0: i32) -> (i32, i32) {
    %c0_i32 = arith.constant 0 : i32
    %c0_i32_0 = arith.constant 0 : i32
    return %c0_i32, %arg0 : i32, i32
  }
}

</mosaic_0001>

<llo_original>
// kernel: _forward_jit.1
$region0: #{_forward_jit.1}
  #allocation0 [shape = 'u32[]', space=smem, size = 0x4, offset = 0x4, fixed_abs, tag = 'smem constant byte address 0x4 - core index']
  #allocation1 [shape = 'u32[144,128]{1,0:T(1,128)}', space=vmem, size = 0x12000, scoped, tag = 'internal scratch']
  %s0 = inlined_call_operand.vmem [shape: f32[300,30], index: 0, kind: input, shape index: {}]
  %s1 = inlined_call_operand.vmem [shape: f32[30,30], index: 1, kind: input, shape index: {}]
  %s2 = inlined_call_operand.vmem [shape: f32[30,1], index: 2, kind: input, shape index: {}]
  %s3 = inlined_call_operand.vmem [shape: f32[30,30], index: 3, kind: input, shape index: {}]
  %s4 = inlined_call_operand.vmem [shape: f32[30,1], index: 4, kind: input, shape index: {}]
  %s5 = inlined_call_operand.vmem [shape: f32[30,30], index: 5, kind: input, shape index: {}]
  %s6 = inlined_call_operand.vmem [shape: f32[30,1], index: 6, kind: input, shape index: {}]
  %s7 = inlined_call_operand.vmem [shape: f32[2,30], index: 7, kind: input, shape index: {}]
  %s8 = inlined_call_operand.vmem [shape: f32[2,1], index: 8, kind: input, shape index: {}]
  %s9 = inlined_call_operand.vmem [shape: f32[32,300], index: 9, kind: output, shape index: {}]
  %s10 = sld [smem:[#allocation0]]
  $region131: #{_forward_jit.1} parent=0
    _
  %s12 = ssub.s32 1, %s10
  %s13 = scalar_select 0, %s12, %s10
  $region1: #{_forward_jit.1} parent=0
    #allocation2 [shape = 'u8[65536]{0}', space=vmem, size = 0x10000, scoped, tag = 'output window, operand 0']
    loop: start=0, step=1, limit=4
    $region2: #{_forward_jit.1} parent=1 // loop_pre_header
      _
    $region3: #{_forward_jit.1} parent=1 // loop_header
      %s15 = sphi 0, %s19
      %p16 = scmp.ge.s32.totalorder %s15, 4
      %s25 = sphi 0, %s27
      %s28 = sphi 0, %s25
      %s29 = sphi 0, %s28
      %s45 = sphi 0, %s29
      %s49 = sphi 0, %s49
      %s51 = sphi 0, %s49
      %s52 = sphi 0, %s51
      %s66 = sphi 0, %s52
      %s70 = sphi 0, %s70
      %s72 = sphi 0, %s70
      %s73 = sphi 0, %s72
      %s87 = sphi 0, %s73
      %s91 = sphi 0, %s91
      %s93 = sphi 0, %s91
      %s94 = sphi 0, %s93
      %s108 = sphi 0, %s94
      %s112 = sphi 0, %s112
      %s114 = sphi 0, %s112
      %s115 = sphi 0, %s114
      %s129 = sphi 0, %s115
      %s133 = sphi 0, %s133
      %s135 = sphi 0, %s133
      %s136 = sphi 0, %s135
      %s150 = sphi 0, %s136
      %s154 = sphi 0, %s154
      %s156 = sphi 0, %s154
      %s157 = sphi 0, %s156
      %s171 = sphi 0, %s157
      %s175 = sphi 0, %s175
      %s177 = sphi 0, %s175
      %s178 = sphi 0, %s177
      %s192 = sphi 0, %s178
      %s196 = sphi 0, %s196
      %s198 = sphi 0, %s196
      %s199 = sphi 0, %s198
      %s213 = sphi 0, %s199
      %s219 = sphi 0, %s221
      %s222 = sphi 0, %s219
      %s223 = sphi 0, %s222
      %s239 = sphi 0, %s223
    $region4: #{_forward_jit.1} parent=1 // loop_header_branch
      %18 = sbr.rel (%p16) target = $region8
    $region5: #{_forward_jit.1} parent=1 // loop_body
      %s20 = ssub.s32 %s15, 1
      %s21 = ssub.s32 %s15, 2
      %s22 = sadd.s32 %s15, 1
      %s23 = ssub.s32 %s15, %s22
      %p24 = scmp.eq.s32.totalorder %s23, 0
      %s26 = sadd.s32 %s25, 1
      %s27 = scalar_select %p24, %s25, %s26
      %p30 = pneg %p24
      %p31 = scmp.eq.s32.totalorder %s15, 1
      %p32 = por %p30, %p31
      %p33 = scmp.ne.s32.totalorder %s25, %s28
      %p34 = scmp.eq.s32.totalorder %s15, 0
      %p35 = por %p33, %p34
      %p36 = scmp.ne.s32.totalorder %s25, %s28
      %p37 = scmp.eq.s32.totalorder %s20, 1
      %p38 = por %p36, %p37
      %p39 = scmp.ne.s32.totalorder %s28, %s29
      %p40 = scmp.eq.s32.totalorder %s20, 0
      %p41 = por %p39, %p40
      %p42 = scmp.ne.s32.totalorder %s28, %s29
      %p43 = scmp.eq.s32.totalorder %s21, 1
      %p44 = por %p42, %p43
      %p46 = scmp.ne.s32.totalorder %s29, %s45
      %p47 = scmp.eq.s32.totalorder %s21, 0
      %p48 = por %p46, %p47
      %s50 = sadd.s32 %s49, 1
      %p53 = scmp.eq.s32.totalorder %s15, 1
      %p54 = scmp.ne.s32.totalorder %s49, %s51
      %p55 = scmp.eq.s32.totalorder %s15, 0
      %p56 = por %p54, %p55
      %p57 = scmp.ne.s32.totalorder %s49, %s51
      %p58 = scmp.eq.s32.totalorder %s20, 1
      %p59 = por %p57, %p58
      %p60 = scmp.ne.s32.totalorder %s51, %s52
      %p61 = scmp.eq.s32.totalorder %s20, 0
      %p62 = por %p60, %p61
      %p63 = scmp.ne.s32.totalorder %s51, %s52
      %p64 = scmp.eq.s32.totalorder %s21, 1
      %p65 = por %p63, %p64
      %p67 = scmp.ne.s32.totalorder %s52, %s66
      %p68 = scmp.eq.s32.totalorder %s21, 0
      %p69 = por %p67, %p68
      %s71 = sadd.s32 %s70, 1
      %p74 = scmp.eq.s32.totalorder %s15, 1
      %p75 = scmp.ne.s32.totalorder %s70, %s72
      %p76 = scmp.eq.s32.totalorder %s15, 0
      %p77 = por %p75, %p76
      %p78 = scmp.ne.s32.totalorder %s70, %s72
      %p79 = scmp.eq.s32.totalorder %s20, 1
      %p80 = por %p78, %p79
      %p81 = scmp.ne.s32.totalorder %s72, %s73
      %p82 = scmp.eq.s32.totalorder %s20, 0
      %p83 = por %p81, %p82
      %p84 = scmp.ne.s32.totalorder %s72, %s73
      %p85 = scmp.eq.s32.totalorder %s21, 1
      %p86 = por %p84, %p85
      %p88 = scmp.ne.s32.totalorder %s73, %s87
      %p89 = scmp.eq.s32.totalorder %s21, 0
      %p90 = por %p88, %p89
      %s92 = sadd.s32 %s91, 1
      %p95 = scmp.eq.s32.totalorder %s15, 1
      %p96 = scmp.ne.s32.totalorder %s91, %s93
      %p97 = scmp.eq.s32.totalorder %s15, 0
      %p98 = por %p96, %p97
      %p99 = scmp.ne.s32.totalorder %s91, %s93
      %p100 = scmp.eq.s32.totalorder %s20, 1
      %p101 = por %p99, %p100
      %p102 = scmp.ne.s32.totalorder %s93, %s94
      %p103 = scmp.eq.s32.totalorder %s20, 0
      %p104 = por %p102, %p103
      %p105 = scmp.ne.s32.totalorder %s93, %s94
      %p106 = scmp.eq.s32.totalorder %s21, 1
      %p107 = por %p105, %p106
      %p109 = scmp.ne.s32.totalorder %s94, %s108
      %p110 = scmp.eq.s32.totalorder %s21, 0
      %p111 = por %p109, %p110
      %s113 = sadd.s32 %s112, 1
      %p116 = scmp.eq.s32.totalorder %s15, 1
      %p117 = scmp.ne.s32.totalorder %s112, %s114
      %p118 = scmp.eq.s32.totalorder %s15, 0
      %p119 = por %p117, %p118
      %p120 = scmp.ne.s32.totalorder %s112, %s114
      %p121 = scmp.eq.s32.totalorder %s20, 1
      %p122 = por %p120, %p121
      %p123 = scmp.ne.s32.totalorder %s114, %s115
      %p124 = scmp.eq.s32.totalorder %s20, 0
      %p125 = por %p123, %p124
      %p126 = scmp.ne.s32.totalorder %s114, %s115
      %p127 = scmp.eq.s32.totalorder %s21, 1
      %p128 = por %p126, %p127
      %p130 = scmp.ne.s32.totalorder %s115, %s129
      %p131 = scmp.eq.s32.totalorder %s21, 0
      %p132 = por %p130, %p131
      %s134 = sadd.s32 %s133, 1
      %p137 = scmp.eq.s32.totalorder %s15, 1
      %p138 = scmp.ne.s32.totalorder %s133, %s135
      %p139 = scmp.eq.s32.totalorder %s15, 0
      %p140 = por %p138, %p139
      %p141 = scmp.ne.s32.totalorder %s133, %s135
      %p142 = scmp.eq.s32.totalorder %s20, 1
      %p143 = por %p141, %p142
      %p144 = scmp.ne.s32.totalorder %s135, %s136
      %p145 = scmp.eq.s32.totalorder %s20, 0
      %p146 = por %p144, %p145
      %p147 = scmp.ne.s32.totalorder %s135, %s136
      %p148 = scmp.eq.s32.totalorder %s21, 1
      %p149 = por %p147, %p148
      %p151 = scmp.ne.s32.totalorder %s136, %s150
      %p152 = scmp.eq.s32.totalorder %s21, 0
      %p153 = por %p151, %p152
      %s155 = sadd.s32 %s154, 1
      %p158 = scmp.eq.s32.totalorder %s15, 1
      %p159 = scmp.ne.s32.totalorder %s154, %s156
      %p160 = scmp.eq.s32.totalorder %s15, 0
      %p161 = por %p159, %p160
      %p162 = scmp.ne.s32.totalorder %s154, %s156
      %p163 = scmp.eq.s32.totalorder %s20, 1
      %p164 = por %p162, %p163
      %p165 = scmp.ne.s32.totalorder %s156, %s157
      %p166 = scmp.eq.s32.totalorder %s20, 0
      %p167 = por %p165, %p166
      %p168 = scmp.ne.s32.totalorder %s156, %s157
      %p169 = scmp.eq.s32.totalorder %s21, 1
      %p170 = por %p168, %p169
      %p172 = scmp.ne.s32.totalorder %s157, %s171
      %p173 = scmp.eq.s32.totalorder %s21, 0
      %p174 = por %p172, %p173
      %s176 = sadd.s32 %s175, 1
      %p179 = scmp.eq.s32.totalorder %s15, 1
      %p180 = scmp.ne.s32.totalorder %s175, %s177
      %p181 = scmp.eq.s32.totalorder %s15, 0
      %p182 = por %p180, %p181
      %p183 = scmp.ne.s32.totalorder %s175, %s177
      %p184 = scmp.eq.s32.totalorder %s20, 1
      %p185 = por %p183, %p184
      %p186 = scmp.ne.s32.totalorder %s177, %s178
      %p187 = scmp.eq.s32.totalorder %s20, 0
      %p188 = por %p186, %p187
      %p189 = scmp.ne.s32.totalorder %s177, %s178
      %p190 = scmp.eq.s32.totalorder %s21, 1
      %p191 = por %p189, %p190
      %p193 = scmp.ne.s32.totalorder %s178, %s192
      %p194 = scmp.eq.s32.totalorder %s21, 0
      %p195 = por %p193, %p194
      %s197 = sadd.s32 %s196, 1
      %p200 = scmp.eq.s32.totalorder %s15, 1
      %p201 = scmp.ne.s32.totalorder %s196, %s198
      %p202 = scmp.eq.s32.totalorder %s15, 0
      %p203 = por %p201, %p202
      %p204 = scmp.ne.s32.totalorder %s196, %s198
      %p205 = scmp.eq.s32.totalorder %s20, 1
      %p206 = por %p204, %p205
      %p207 = scmp.ne.s32.totalorder %s198, %s199
      %p208 = scmp.eq.s32.totalorder %s20, 0
      %p209 = por %p207, %p208
      %p210 = scmp.ne.s32.totalorder %s198, %s199
      %p211 = scmp.eq.s32.totalorder %s21, 1
      %p212 = por %p210, %p211
      %p214 = scmp.ne.s32.totalorder %s199, %s213
      %p215 = scmp.eq.s32.totalorder %s21, 0
      %p216 = por %p214, %p215
      %s217 = ssub.s32 %s15, %s22
      %p218 = scmp.eq.s32.totalorder %s217, 0
      %s220 = sadd.s32 %s219, 1
      %s221 = scalar_select %p218, %s219, %s220
      %p224 = pneg %p218
      %p225 = scmp.eq.s32.totalorder %s15, 1
      %p226 = por %p224, %p225
      %p227 = scmp.ne.s32.totalorder %s219, %s222
      %p228 = scmp.eq.s32.totalorder %s15, 0
      %p229 = por %p227, %p228
      %p230 = scmp.ne.s32.totalorder %s219, %s222
      %p231 = scmp.eq.s32.totalorder %s20, 1
      %p232 = por %p230, %p231
      %p233 = scmp.ne.s32.totalorder %s222, %s223
      %p234 = scmp.eq.s32.totalorder %s20, 0
      %p235 = por %p233, %p234
      %p236 = scmp.ne.s32.totalorder %s222, %s223
      %p237 = scmp.eq.s32.totalorder %s21, 1
      %p238 = por %p236, %p237
      %p240 = scmp.ne.s32.totalorder %s223, %s239
      %p241 = scmp.eq.s32.totalorder %s21, 0
      %p242 = por %p240, %p241
      %p243 = scmp.le.s32.totalorder 1, %s15
      %p244 = scmp.lt.s32.totalorder %s15, 3
      %p245 = pnand %p243, %p244
      %p246 = pneg %p245
      // Predicated region
      $region9: #{_forward_jit.1} parent=5 // pred_check
        _
      $region10: #{_forward_jit.1} parent=5 // pred_check_branch
        %248 = sbr.rel (%p245) target = $region12
      $region11: #{_forward_jit.1} parent=5 // pred_region
        %s249 = ssub.s32 %s15, 1
        // Predicated region
        $region13: #{_forward_jit.1} parent=11 // pred_check
          %p250 = pneg %p62
        $region14: #{_forward_jit.1} parent=11 // pred_check_branch
          %252 = sbr.rel (%p250) target = $region16
        $region15: #{_forward_jit.1} parent=11 // pred_region
          _
        $region16: #{_forward_jit.1} parent=11 // pred_fallthru
          _
        // Predicated region
        $region17: #{_forward_jit.1} parent=11 // pred_check
          %p253 = pneg %p83
        $region18: #{_forward_jit.1} parent=11 // pred_check_branch
          %255 = sbr.rel (%p253) target = $region20
        $region19: #{_forward_jit.1} parent=11 // pred_region
          _
        $region20: #{_forward_jit.1} parent=11 // pred_fallthru
          _
        // Predicated region
        $region21: #{_forward_jit.1} parent=11 // pred_check
          %p256 = pneg %p104
        $region22: #{_forward_jit.1} parent=11 // pred_check_branch
          %258 = sbr.rel (%p256) target = $region24
        $region23: #{_forward_jit.1} parent=11 // pred_region
          _
        $region24: #{_forward_jit.1} parent=11 // pred_fallthru
          _
        // Predicated region
        $region25: #{_forward_jit.1} parent=11 // pred_check
          %p259 = pneg %p125
        $region26: #{_forward_jit.1} parent=11 // pred_check_branch
          %261 = sbr.rel (%p259) target = $region28
        $region27: #{_forward_jit.1} parent=11 // pred_region
          _
        $region28: #{_forward_jit.1} parent=11 // pred_fallthru
          _
        // Predicated region
        $region29: #{_forward_jit.1} parent=11 // pred_check
          %p262 = pneg %p146
        $region30: #{_forward_jit.1} parent=11 // pred_check_branch
          %264 = sbr.rel (%p262) target = $region32
        $region31: #{_forward_jit.1} parent=11 // pred_region
          _
        $region32: #{_forward_jit.1} parent=11 // pred_fallthru
          _
        // Predicated region
        $region33: #{_forward_jit.1} parent=11 // pred_check
          %p265 = pneg %p167
        $region34: #{_forward_jit.1} parent=11 // pred_check_branch
          %267 = sbr.rel (%p265) target = $region36
        $region35: #{_forward_jit.1} parent=11 // pred_region
          _
        $region36: #{_forward_jit.1} parent=11 // pred_fallthru
          _
        // Predicated region
        $region37: #{_forward_jit.1} parent=11 // pred_check
          %p268 = pneg %p188
        $region38: #{_forward_jit.1} parent=11 // pred_check_branch
          %270 = sbr.rel (%p268) target = $region40
        $region39: #{_forward_jit.1} parent=11 // pred_region
          _
        $region40: #{_forward_jit.1} parent=11 // pred_fallthru
          _
        // Predicated region
        $region41: #{_forward_jit.1} parent=11 // pred_check
          %p271 = pneg %p209
        $region42: #{_forward_jit.1} parent=11 // pred_check_branch
          %273 = sbr.rel (%p271) target = $region44
        $region43: #{_forward_jit.1} parent=11 // pred_region
          _
        $region44: #{_forward_jit.1} parent=11 // pred_fallthru
          _
      $region12: #{_forward_jit.1} parent=5 // pred_fallthru
        _
      %p274 = scmp.lt.s32.totalorder %s15, 2
      // Predicated region
      $region45: #{_forward_jit.1} parent=5 // pred_check
        %p275 = pneg %p274
      $region46: #{_forward_jit.1} parent=5 // pred_check_branch
        %277 = sbr.rel (%p275) target = $region48
      $region47: #{_forward_jit.1} parent=5 // pred_region
        // Predicated region
        $region49: #{_forward_jit.1} parent=47 // pred_check
          %p278 = pneg %p35
        $region50: #{_forward_jit.1} parent=47 // pred_check_branch
          %280 = sbr.rel (%p278) target = $region52
        $region51: #{_forward_jit.1} parent=47 // pred_region
          %s281 = smul.u32 32, %s15
          %s282 = ssub.s32 38, %s281
          %p283 = scmp.lt.s32.totalorder %s282, 32
          %s284 = scalar_select %p283, %s282, 32
          %s285 = smul.u32 128, %s284
          %p286 = scmp.lt.s32.totalorder %s281, 37
          %s287 = scalar_select %p286, %s281, 37
          %s288 = smul.addr %s287, 8
          %s289 = scalar_lea.vmem %s0, %s288
          %s290 = smul.u32 32, %s15
          %s291 = ssub.s32 38, %s290
          %p292 = scmp.lt.s32.totalorder %s291, 32
          %s293 = scalar_select %p292, %s291, 32
          %s294 = smul.u32 128, %s293
        $region52: #{_forward_jit.1} parent=47 // pred_fallthru
          _
      $region48: #{_forward_jit.1} parent=5 // pred_fallthru
        _
      %p295 = scmp.le.s32.totalorder 1, %s15
      %p296 = scmp.lt.s32.totalorder %s15, 3
      %p297 = pnand %p295, %p296
      %p298 = pneg %p297
      // Predicated region
      $region53: #{_forward_jit.1} parent=5 // pred_check
        _
      $region54: #{_forward_jit.1} parent=5 // pred_check_branch
        %300 = sbr.rel (%p297) target = $region56
      $region55: #{_forward_jit.1} parent=5 // pred_region
        %s301 = ssub.s32 %s15, 1
        %s302 = smul.u32 32, %s20
        %s303 = ssub.s32 38, %s302
        %p304 = scmp.lt.s32.totalorder %s303, 32
        %s305 = scalar_select %p304, %s303, 32
        %s306 = smul.u32 128, %s305
        %p307 = scmp.lt.s32.totalorder %s302, 37
        %s308 = scalar_select %p307, %s302, 37
        %s309 = smul.addr %s308, 8
        %s310 = scalar_lea.vmem %s0, %s309
        %p311 = pneg %p41
        %p312 = pneg %p38
        %p313 = pneg %p62
        %p314 = pneg %p59
        %p315 = pneg %p83
        %p316 = pneg %p80
        %p317 = pneg %p104
        %p318 = pneg %p101
        %p319 = pneg %p125
        %p320 = pneg %p122
        %p321 = pneg %p146
        %p322 = pneg %p143
        %p323 = pneg %p167
        %p324 = pneg %p164
        %p325 = pneg %p188
        %p326 = pneg %p185
        %p327 = pneg %p209
        %p328 = pneg %p206
        %p329 = pneg %p235
        %p330 = pneg %p232
        %s331 = sand.u32 %s222, 1
        %s332 = sand.u32 %s222, 1
        %s333 = smul.addr %s332, 64
        %s334 = scalar_lea.vmem [#allocation2], %s333
        %s335 = smul.u32 32, %s20
        %s336 = ssub.s32 38, %s335
        %p337 = scmp.lt.s32.totalorder %s336, 32
        %s338 = scalar_select %p337, %s336, 32
        %s339 = smul.u32 128, %s338
        %p340 = scmp.lt.s32.totalorder %s335, 37
        %s341 = scalar_select %p340, %s335, 37
        %s342 = smul.addr %s341, 8
        %s343 = scalar_lea.vmem %s0, %s342
        %s344 = smul.u32 32, %s20
        %s345 = ssub.s32 38, %s344
        %p346 = scmp.lt.s32.totalorder %s345, 32
        %s347 = scalar_select %p346, %s345, 32
        %s348 = smul.u32 128, %s347
        %s349 = smul.u32 2, %s20
        %s350 = ssub.s32 3, %s349
        %p351 = scmp.lt.s32.totalorder %s350, 2
        %s352 = scalar_select %p351, %s350, 2
        %s353 = smul.u32 512, %s352
        %v354 = vld [vmem:[%s343] sm:$0xff]
        %v355 = vld [vmem:[%s343 + $0x8] sm:$0xff]
        %v356 = vld [vmem:[%s343 + $0x10] sm:$0xff]
        %v357 = vld [vmem:[%s343 + $0x18] sm:$0xff]
        %v358 = vld [vmem:[%s343 + $0x20] sm:$0xff]
        %v359 = vld [vmem:[%s343 + $0x28] sm:$0xff]
        %v360 = vld [vmem:[%s343 + $0x30] sm:$0xff]
        %v361 = vld [vmem:[%s343 + $0x38] sm:$0xff]
        %v362 = vld [vmem:[%s343 + $0x40] sm:$0xff]
        %v363 = vld [vmem:[%s343 + $0x48] sm:$0xff]
        %v364 = vld [vmem:[%s343 + $0x50] sm:$0xff]
        %v365 = vld [vmem:[%s343 + $0x58] sm:$0xff]
        %v366 = vld [vmem:[%s343 + $0x60] sm:$0xff]
        %v367 = vld [vmem:[%s343 + $0x68] sm:$0xff]
        %v368 = vld [vmem:[%s343 + $0x70] sm:$0xff]
        %v369 = vld [vmem:[%s343 + $0x78] sm:$0xff]
        %v370 = vld [vmem:[%s343 + $0x80] sm:$0xff]
        %v371 = vld [vmem:[%s343 + $0x88] sm:$0xff]
        %v372 = vld [vmem:[%s343 + $0x90] sm:$0xff]
        %v373 = vld [vmem:[%s343 + $0x98] sm:$0xff]
        %v374 = vld [vmem:[%s343 + $0xa0] sm:$0xff]
        %v375 = vld [vmem:[%s343 + $0xa8] sm:$0xff]
        %v376 = vld [vmem:[%s343 + $0xb0] sm:$0xff]
        %v377 = vld [vmem:[%s343 + $0xb8] sm:$0xff]
        %v378 = vld [vmem:[%s343 + $0xc0] sm:$0xff]
        %v379 = vld [vmem:[%s343 + $0xc8] sm:$0xff]
        %v380 = vld [vmem:[%s343 + $0xd0] sm:$0xff]
        %v381 = vld [vmem:[%s343 + $0xd8] sm:$0xff]
        %v382 = vld [vmem:[%s343 + $0xe0] sm:$0xff]
        %v383 = vld [vmem:[%s343 + $0xe8] sm:$0xff]
        %v384 = vld [vmem:[%s343 + $0xf0] sm:$0xff]
        %v385 = vld [vmem:[%s343 + $0xf8] sm:$0xff]
        %v386 = vld [vmem:[%s1] sm:$0xff]
        %v387 = vld [vmem:[%s1 + $0x8] sm:$0xff]
        %v388 = vld [vmem:[%s1 + $0x10] sm:$0xff]
        %v389 = vld [vmem:[%s1 + $0x18] sm:$0x3f]
        %v390 = vld [vmem:[%s2] sm:$0xff]
        %v391 = vld [vmem:[%s2 + $0x8] sm:$0xff]
        %v392 = vld [vmem:[%s2 + $0x10] sm:$0xff]
        %v393 = vld [vmem:[%s2 + $0x18] sm:$0x3f]
        %395 = vset.pattern.permute.xlu0 0
        %396 = vperm.xlu0 %395, %v390
        %v397 = vpop.permute.xlu0 %396
        %400 = vset.pattern.permute.xlu0 0
        %401 = vperm.xlu0 %400, %v391
        %v402 = vpop.permute.xlu0 %401
        %405 = vset.pattern.permute.xlu0 0
        %406 = vperm.xlu0 %405, %v392
        %v407 = vpop.permute.xlu0 %406
        %410 = vset.pattern.permute.xlu0 0
        %411 = vperm.xlu0 %410, %v393
        %v412 = vpop.permute.xlu0 %411
        %vm414 = vcmask 244736
        %v416 = vsel %vm414, %v386, 0
        %v419 = vsel %vm414, %v387, 0
        %v422 = vsel %vm414, %v388, 0
        %v425 = vsel %vm414, %v389, 0
        %v428 = vsel %vm414, %v354, 0
        %v431 = vsel %vm414, %v355, 0
        %v434 = vsel %vm414, %v356, 0
        %v437 = vsel %vm414, %v357, 0
        %v440 = vsel %vm414, %v358, 0
        %v443 = vsel %vm414, %v359, 0
        %v446 = vsel %vm414, %v360, 0
        %v449 = vsel %vm414, %v361, 0
        %v452 = vsel %vm414, %v362, 0
        %v455 = vsel %vm414, %v363, 0
        %v458 = vsel %vm414, %v364, 0
        %v461 = vsel %vm414, %v365, 0
        %v464 = vsel %vm414, %v366, 0
        %v467 = vsel %vm414, %v367, 0
        %v470 = vsel %vm414, %v368, 0
        %v473 = vsel %vm414, %v369, 0
        %v476 = vsel %vm414, %v370, 0
        %v479 = vsel %vm414, %v371, 0
        %v482 = vsel %vm414, %v372, 0
        %v485 = vsel %vm414, %v373, 0
        %v488 = vsel %vm414, %v374, 0
        %v491 = vsel %vm414, %v375, 0
        %v494 = vsel %vm414, %v376, 0
        %v497 = vsel %vm414, %v377, 0
        %v500 = vsel %vm414, %v378, 0
        %v503 = vsel %vm414, %v379, 0
        %v506 = vsel %vm414, %v380, 0
        %v509 = vsel %vm414, %v381, 0
        %v512 = vsel %vm414, %v382, 0
        %v515 = vsel %vm414, %v383, 0
        %v518 = vsel %vm414, %v384, 0
        %v521 = vsel %vm414, %v385, 0
        %523 = vmatprep.subr.mxu0 0.0
        %v524 = vand.u32 %v428, 4294901760
        %525 = vmatpush1.xpose.msra.mxu0 %v524
        %526 = vmatprep.subr.mxu0 0.0
        %v527 = vand.u32 %v431, 4294901760
        %528 = vmatpush1.xpose.msra.mxu0 %v527
        %529 = vmatprep.subr.mxu0 0.0
        %v530 = vand.u32 %v434, 4294901760
        %531 = vmatpush1.xpose.msra.mxu0 %v530
        %532 = vmatprep.subr.mxu0 0.0
        %v533 = vand.u32 %v437, 4294901760
        %534 = vmatpush1.xpose.msra.mxu0 %v533
        %535 = vmatprep.subr.mxu0 0.0
        %v536 = vand.u32 %v440, 4294901760
        %537 = vmatpush1.xpose.msra.mxu0 %v536
        %538 = vmatprep.subr.mxu0 0.0
        %v539 = vand.u32 %v443, 4294901760
        %540 = vmatpush1.xpose.msra.mxu0 %v539
        %541 = vmatprep.subr.mxu0 0.0
        %v542 = vand.u32 %v446, 4294901760
        %543 = vmatpush1.xpose.msra.mxu0 %v542
        %544 = vmatprep.subr.mxu0 0.0
        %v545 = vand.u32 %v449, 4294901760
        %546 = vmatpush1.xpose.msra.mxu0 %v545
        %547 = vmatprep.subr.mxu0 0.0
        %v548 = vand.u32 %v452, 4294901760
        %549 = vmatpush1.xpose.msra.mxu0 %v548
        %550 = vmatprep.subr.mxu0 0.0
        %v551 = vand.u32 %v455, 4294901760
        %552 = vmatpush1.xpose.msra.mxu0 %v551
        %553 = vmatprep.subr.mxu0 0.0
        %v554 = vand.u32 %v458, 4294901760
        %555 = vmatpush1.xpose.msra.mxu0 %v554
        %556 = vmatprep.subr.mxu0 0.0
        %v557 = vand.u32 %v461, 4294901760
        %558 = vmatpush1.xpose.msra.mxu0 %v557
        %559 = vmatprep.subr.mxu0 0.0
        %v560 = vand.u32 %v464, 4294901760
        %561 = vmatpush1.xpose.msra.mxu0 %v560
        %562 = vmatprep.subr.mxu0 0.0
        %v563 = vand.u32 %v467, 4294901760
        %564 = vmatpush1.xpose.msra.mxu0 %v563
        %565 = vmatprep.subr.mxu0 0.0
        %v566 = vand.u32 %v470, 4294901760
        %567 = vmatpush1.xpose.msra.mxu0 %v566
        %568 = vmatprep.subr.mxu0 0.0
        %v569 = vand.u32 %v473, 4294901760
        %570 = vmatpush1.xpose.msra.mxu0 %v569
        %571 = vmatprep.subr.mxu0 0.0
        %v572 = vand.u32 %v476, 4294901760
        %573 = vmatpush1.xpose.msra.mxu0 %v572
        %574 = vmatprep.subr.mxu0 0.0
        %v575 = vand.u32 %v479, 4294901760
        %576 = vmatpush1.xpose.msra.mxu0 %v575
        %577 = vmatprep.subr.mxu0 0.0
        %v578 = vand.u32 %v482, 4294901760
        %579 = vmatpush1.xpose.msra.mxu0 %v578
        %580 = vmatprep.subr.mxu0 0.0
        %v581 = vand.u32 %v485, 4294901760
        %582 = vmatpush1.xpose.msra.mxu0 %v581
        %583 = vmatprep.subr.mxu0 0.0
        %v584 = vand.u32 %v488, 4294901760
        %585 = vmatpush1.xpose.msra.mxu0 %v584
        %586 = vmatprep.subr.mxu0 0.0
        %v587 = vand.u32 %v491, 4294901760
        %588 = vmatpush1.xpose.msra.mxu0 %v587
        %589 = vmatprep.subr.mxu0 0.0
        %v590 = vand.u32 %v494, 4294901760
        %591 = vmatpush1.xpose.msra.mxu0 %v590
        %592 = vmatprep.subr.mxu0 0.0
        %v593 = vand.u32 %v497, 4294901760
        %594 = vmatpush1.xpose.msra.mxu0 %v593
        %595 = vmatprep.subr.mxu0 0.0
        %v596 = vand.u32 %v500, 4294901760
        %597 = vmatpush1.xpose.msra.mxu0 %v596
        %598 = vmatprep.subr.mxu0 0.0
        %v599 = vand.u32 %v503, 4294901760
        %600 = vmatpush1.xpose.msra.mxu0 %v599
        %601 = vmatprep.subr.mxu0 0.0
        %v602 = vand.u32 %v506, 4294901760
        %603 = vmatpush1.xpose.msra.mxu0 %v602
        %604 = vmatprep.subr.mxu0 0.0
        %v605 = vand.u32 %v509, 4294901760
        %606 = vmatpush1.xpose.msra.mxu0 %v605
        %607 = vmatprep.subr.mxu0 0.0
        %v608 = vand.u32 %v512, 4294901760
        %609 = vmatpush1.xpose.msra.mxu0 %v608
        %610 = vmatprep.subr.mxu0 0.0
        %v611 = vand.u32 %v515, 4294901760
        %612 = vmatpush1.xpose.msra.mxu0 %v611
        %613 = vmatprep.subr.mxu0 0.0
        %v614 = vand.u32 %v518, 4294901760
        %615 = vmatpush1.xpose.msra.mxu0 %v614
        %616 = vmatprep.subr.mxu0 0.0
        %v617 = vand.u32 %v521, 4294901760
        %618 = vmatpush1.xpose.msra.mxu0 %v617
        %619 = vmatprep.mubr.f32.mxu0 0.0
        %v620 = vand.u32 %v416, 4294901760
        %v621 = vsub.f32 %v416, %v620
        %v622 = vand.u32 %v621, 4294901760
        %v623 = vsub.f32 %v621, %v622
        %v624 = vand.u32 %v623, 4294901760
        %625 = vmatmul.mubr.f32.gmra.mrb[0].mxu0 %v624
        %v626 = vpop.f32.mrb[0].mxu0
        %v627 = vadd.f32 %v397, %v626
        %v628 = vpop.f32.mrb[0].mxu0
        %v629 = vadd.f32 %v397, %v628
        %630 = vmatprep.mubr.f32.mxu0 0.0
        %v631 = vand.u32 %v419, 4294901760
        %v632 = vsub.f32 %v419, %v631
        %v633 = vand.u32 %v632, 4294901760
        %v634 = vsub.f32 %v632, %v633
        %v635 = vand.u32 %v634, 4294901760
        %636 = vmatmul.mubr.f32.gmra.mrb[0].mxu0 %v635
        %v637 = vpop.f32.mrb[0].mxu0
        %v638 = vadd.f32 %v402, %v637
        %v639 = vpop.f32.mrb[0].mxu0
        %v640 = vadd.f32 %v402, %v639
        %641 = vmatprep.mubr.f32.mxu0 0.0
        %v642 = vand.u32 %v422, 4294901760
        %v643 = vsub.f32 %v422, %v642
        %v644 = vand.u32 %v643, 4294901760
        %v645 = vsub.f32 %v643, %v644
        %v646 = vand.u32 %v645, 4294901760
        %647 = vmatmul.mubr.f32.gmra.mrb[0].mxu0 %v646
        %v648 = vpop.f32.mrb[0].mxu0
        %v649 = vadd.f32 %v407, %v648
        %v650 = vpop.f32.mrb[0].mxu0
        %v651 = vadd.f32 %v407, %v650
        %652 = vmatprep.mubr.f32.mxu0 0.0
        %v653 = vand.u32 %v425, 4294901760
        %v654 = vsub.f32 %v425, %v653
        %v655 = vand.u32 %v654, 4294901760
        %v656 = vsub.f32 %v654, %v655
        %v657 = vand.u32 %v656, 4294901760
        %658 = vmatmul.mubr.f32.gmra.mrb[0].mxu0 %v657
        %v659 = vpop.f32.mrb[0].mxu0
        %v660 = vadd.f32 %v412, %v659
        %v661 = vpop.f32.mrb[0].mxu0
        %v662 = vadd.f32 %v412, %v661
        %663 = vdwg.mxu0
        %664 = vmatprep.subr.mxu0 0.0
        %v665 = vand.u32 %v428, 4294901760
        %v666 = vsub.f32 %v428, %v665
        %v667 = vand.u32 %v666, 4294901760
        %v668 = vsub.f32 %v666, %v667
        %v669 = vand.u32 %v668, 4294901760
        %670 = vmatpush1.xpose.msra.mxu0 %v669
        %671 = vmatprep.subr.mxu0 0.0
        %v672 = vand.u32 %v431, 4294901760
        %v673 = vsub.f32 %v431, %v672
        %v674 = vand.u32 %v673, 4294901760
        %v675 = vsub.f32 %v673, %v674
        %v676 = vand.u32 %v675, 4294901760
        %677 = vmatpush1.xpose.msra.mxu0 %v676
        %678 = vmatprep.subr.mxu0 0.0
        %v679 = vand.u32 %v434, 4294901760
        %v680 = vsub.f32 %v434, %v679
        %v681 = vand.u32 %v680, 4294901760
        %v682 = vsub.f32 %v680, %v681
        %v683 = vand.u32 %v682, 4294901760
        %684 = vmatpush1.xpose.msra.mxu0 %v683
        %685 = vmatprep.subr.mxu0 0.0
        %v686 = vand.u32 %v437, 4294901760
        %v687 = vsub.f32 %v437, %v686
        %v688 = vand.u32 %v687, 4294901760
        %v689 = vsub.f32 %v687, %v688
        %v690 = vand.u32 %v689, 4294901760
        %691 = vmatpush1.xpose.msra.mxu0 %v690
        %692 = vmatprep.subr.mxu0 0.0
        %v693 = vand.u32 %v440, 4294901760
        %v694 = vsub.f32 %v440, %v693
        %v695 = vand.u32 %v694, 4294901760
        %v696 = vsub.f32 %v694, %v695
        %v697 = vand.u32 %v696, 4294901760
        %698 = vmatpush1.xpose.msra.mxu0 %v697
        %699 = vmatprep.subr.mxu0 0.0
        %v700 = vand.u32 %v443, 4294901760
        %v701 = vsub.f32 %v443, %v700
        %v702 = vand.u32 %v701, 4294901760
        %v703 = vsub.f32 %v701, %v702
        %v704 = vand.u32 %v703, 4294901760
        %705 = vmatpush1.xpose.msra.mxu0 %v704
        %706 = vmatprep.subr.mxu0 0.0
        %v707 = vand.u32 %v446, 4294901760
        %v708 = vsub.f32 %v446, %v707
        %v709 = vand.u32 %v708, 4294901760
        %v710 = vsub.f32 %v708, %v709
        %v711 = vand.u32 %v710, 4294901760
        %712 = vmatpush1.xpose.msra.mxu0 %v711
        %713 = vmatprep.subr.mxu0 0.0
        %v714 = vand.u32 %v449, 4294901760
        %v715 = vsub.f32 %v449, %v714
        %v716 = vand.u32 %v715, 4294901760
        %v717 = vsub.f32 %v715, %v716
        %v718 = vand.u32 %v717, 4294901760
        %719 = vmatpush1.xpose.msra.mxu0 %v718
        %720 = vmatprep.subr.mxu0 0.0
        %v721 = vand.u32 %v452, 4294901760
        %v722 = vsub.f32 %v452, %v721
        %v723 = vand.u32 %v722, 4294901760
        %v724 = vsub.f32 %v722, %v723
        %v725 = vand.u32 %v724, 4294901760
        %726 = vmatpush1.xpose.msra.mxu0 %v725
        %727 = vmatprep.subr.mxu0 0.0
        %v728 = vand.u32 %v455, 4294901760
        %v729 = vsub.f32 %v455, %v728
        %v730 = vand.u32 %v729, 4294901760
        %v731 = vsub.f32 %v729, %v730
        %v732 = vand.u32 %v731, 4294901760
        %733 = vmatpush1.xpose.msra.mxu0 %v732
        %734 = vmatprep.subr.mxu0 0.0
        %v735 = vand.u32 %v458, 4294901760
        %v736 = vsub.f32 %v458, %v735
        %v737 = vand.u32 %v736, 4294901760
        %v738 = vsub.f32 %v736, %v737
        %v739 = vand.u32 %v738, 4294901760
        %740 = vmatpush1.xpose.msra.mxu0 %v739
        %741 = vmatprep.subr.mxu0 0.0
        %v742 = vand.u32 %v461, 4294901760
        %v743 = vsub.f32 %v461, %v742
        %v744 = vand.u32 %v743, 4294901760
        %v745 = vsub.f32 %v743, %v744
        %v746 = vand.u32 %v745, 4294901760
        %747 = vmatpush1.xpose.msra.mxu0 %v746
        %748 = vmatprep.subr.mxu0 0.0
        %v749 = vand.u32 %v464, 4294901760
        %v750 = vsub.f32 %v464, %v749
        %v751 = vand.u32 %v750, 4294901760
        %v752 = vsub.f32 %v750, %v751
        %v753 = vand.u32 %v752, 4294901760
        %754 = vmatpush1.xpose.msra.mxu0 %v753
        %755 = vmatprep.subr.mxu0 0.0
        %v756 = vand.u32 %v467, 4294901760
        %v757 = vsub.f32 %v467, %v756
        %v758 = vand.u32 %v757, 4294901760
        %v759 = vsub.f32 %v757, %v758
        %v760 = vand.u32 %v759, 4294901760
        %761 = vmatpush1.xpose.msra.mxu0 %v760
        %762 = vmatprep.subr.mxu0 0.0
        %v763 = vand.u32 %v470, 4294901760
        %v764 = vsub.f32 %v470, %v763
        %v765 = vand.u32 %v764, 4294901760
        %v766 = vsub.f32 %v764, %v765
        %v767 = vand.u32 %v766, 4294901760
        %768 = vmatpush1.xpose.msra.mxu0 %v767
        %769 = vmatprep.subr.mxu0 0.0
        %v770 = vand.u32 %v473, 4294901760
        %v771 = vsub.f32 %v473, %v770
        %v772 = vand.u32 %v771, 4294901760
        %v773 = vsub.f32 %v771, %v772
        %v774 = vand.u32 %v773, 4294901760
        %775 = vmatpush1.xpose.msra.mxu0 %v774
        %776 = vmatprep.subr.mxu0 0.0
        %v777 = vand.u32 %v476, 4294901760
        %v778 = vsub.f32 %v476, %v777
        %v779 = vand.u32 %v778, 4294901760
        %v780 = vsub.f32 %v778, %v779
        %v781 = vand.u32 %v780, 4294901760
        %782 = vmatpush1.xpose.msra.mxu0 %v781
        %783 = vmatprep.subr.mxu0 0.0
        %v784 = vand.u32 %v479, 4294901760
        %v785 = vsub.f32 %v479, %v784
        %v786 = vand.u32 %v785, 4294901760
        %v787 = vsub.f32 %v785, %v786
        %v788 = vand.u32 %v787, 4294901760
        %789 = vmatpush1.xpose.msra.mxu0 %v788
        %790 = vmatprep.subr.mxu0 0.0
        %v791 = vand.u32 %v482, 4294901760
        %v792 = vsub.f32 %v482, %v791
        %v793 = vand.u32 %v792, 4294901760
        %v794 = vsub.f32 %v792, %v793
        %v795 = vand.u32 %v794, 4294901760
        %796 = vmatpush1.xpose.msra.mxu0 %v795
        %797 = vmatprep.subr.mxu0 0.0
        %v798 = vand.u32 %v485, 4294901760
        %v799 = vsub.f32 %v485, %v798
        %v800 = vand.u32 %v799, 4294901760
        %v801 = vsub.f32 %v799, %v800
        %v802 = vand.u32 %v801, 4294901760
        %803 = vmatpush1.xpose.msra.mxu0 %v802
        %804 = vmatprep.subr.mxu0 0.0
        %v805 = vand.u32 %v488, 4294901760
        %v806 = vsub.f32 %v488, %v805
        %v807 = vand.u32 %v806, 4294901760
        %v808 = vsub.f32 %v806, %v807
        %v809 = vand.u32 %v808, 4294901760
        %810 = vmatpush1.xpose.msra.mxu0 %v809
        %811 = vmatprep.subr.mxu0 0.0
        %v812 = vand.u32 %v491, 4294901760
        %v813 = vsub.f32 %v491, %v812
        %v814 = vand.u32 %v813, 4294901760
        %v815 = vsub.f32 %v813, %v814
        %v816 = vand.u32 %v815, 4294901760
        %817 = vmatpush1.xpose.msra.mxu0 %v816
        %818 = vmatprep.subr.mxu0 0.0
        %v819 = vand.u32 %v494, 4294901760
        %v820 = vsub.f32 %v494, %v819
        %v821 = vand.u32 %v820, 4294901760
        %v822 = vsub.f32 %v820, %v821
        %v823 = vand.u32 %v822, 4294901760
        %824 = vmatpush1.xpose.msra.mxu0 %v823
        %825 = vmatprep.subr.mxu0 0.0
        %v826 = vand.u32 %v497, 4294901760
        %v827 = vsub.f32 %v497, %v826
        %v828 = vand.u32 %v827, 4294901760
        %v829 = vsub.f32 %v827, %v828
        %v830 = vand.u32 %v829, 4294901760
        %831 = vmatpush1.xpose.msra.mxu0 %v830
        %832 = vmatprep.subr.mxu0 0.0
        %v833 = vand.u32 %v500, 4294901760
        %v834 = vsub.f32 %v500, %v833
        %v835 = vand.u32 %v834, 4294901760
        %v836 = vsub.f32 %v834, %v835
        %v837 = vand.u32 %v836, 4294901760
        %838 = vmatpush1.xpose.msra.mxu0 %v837
        %839 = vmatprep.subr.mxu0 0.0
        %v840 = vand.u32 %v503, 4294901760
        %v841 = vsub.f32 %v503, %v840
        %v842 = vand.u32 %v841, 4294901760
        %v843 = vsub.f32 %v841, %v842
        %v844 = vand.u32 %v843, 4294901760
        %845 = vmatpush1.xpose.msra.mxu0 %v844
        %846 = vmatprep.subr.mxu0 0.0
        %v847 = vand.u32 %v506, 4294901760
        %v848 = vsub.f32 %v506, %v847
        %v849 = vand.u32 %v848, 4294901760
        %v850 = vsub.f32 %v848, %v849
        %v851 = vand.u32 %v850, 4294901760
        %852 = vmatpush1.xpose.msra.mxu0 %v851
        %853 = vmatprep.subr.mxu0 0.0
        %v854 = vand.u32 %v509, 4294901760
        %v855 = vsub.f32 %v509, %v854
        %v856 = vand.u32 %v855, 4294901760
        %v857 = vsub.f32 %v855, %v856
        %v858 = vand.u32 %v857, 4294901760
        %859 = vmatpush1.xpose.msra.mxu0 %v858
        %860 = vmatprep.subr.mxu0 0.0
        %v861 = vand.u32 %v512, 4294901760
        %v862 = vsub.f32 %v512, %v861
        %v863 = vand.u32 %v862, 4294901760
        %v864 = vsub.f32 %v862, %v863
        %v865 = vand.u32 %v864, 4294901760
        %866 = vmatpush1.xpose.msra.mxu0 %v865
        %867 = vmatprep.subr.mxu0 0.0
        %v868 = vand.u32 %v515, 4294901760
        %v869 = vsub.f32 %v515, %v868
        %v870 = vand.u32 %v869, 4294901760
        %v871 = vsub.f32 %v869, %v870
        %v872 = vand.u32 %v871, 4294901760
        %873 = vmatpush1.xpose.msra.mxu0 %v872
        %874 = vmatprep.subr.mxu0 0.0
        %v875 = vand.u32 %v518, 4294901760
        %v876 = vsub.f32 %v518, %v875
        %v877 = vand.u32 %v876, 4294901760
        %v878 = vsub.f32 %v876, %v877
        %v879 = vand.u32 %v878, 4294901760
        %880 = vmatpush1.xpose.msra.mxu0 %v879
        %881 = vmatprep.subr.mxu0 0.0
        %v882 = vand.u32 %v521, 4294901760
        %v883 = vsub.f32 %v521, %v882
        %v884 = vand.u32 %v883, 4294901760
        %v885 = vsub.f32 %v883, %v884
        %v886 = vand.u32 %v885, 4294901760
        %887 = vmatpush1.xpose.msra.mxu0 %v886
        %888 = vmatprep.mubr.f32.mxu0 0.0
        %v889 = vand.u32 %v416, 4294901760
        %890 = vmatmul.mubr.f32.gmra.mrb[0].mxu0 %v889
        %v891 = vpop.f32.mrb[0].mxu0
        %v892 = vadd.f32 %v627, %v891
        %v893 = vpop.f32.mrb[0].mxu0
        %v894 = vadd.f32 %v629, %v893
        %895 = vmatprep.mubr.f32.mxu0 0.0
        %v896 = vand.u32 %v419, 4294901760
        %897 = vmatmul.mubr.f32.gmra.mrb[0].mxu0 %v896
        %v898 = vpop.f32.mrb[0].mxu0
        %v899 = vadd.f32 %v638, %v898
        %v900 = vpop.f32.mrb[0].mxu0
        %v901 = vadd.f32 %v640, %v900
        %902 = vmatprep.mubr.f32.mxu0 0.0
        %v903 = vand.u32 %v422, 4294901760
        %904 = vmatmul.mubr.f32.gmra.mrb[0].mxu0 %v903
        %v905 = vpop.f32.mrb[0].mxu0
        %v906 = vadd.f32 %v649, %v905
        %v907 = vpop.f32.mrb[0].mxu0
        %v908 = vadd.f32 %v651, %v907
        %909 = vmatprep.mubr.f32.mxu0 0.0
        %v910 = vand.u32 %v425, 4294901760
        %911 = vmatmul.mubr.f32.gmra.mrb[0].mxu0 %v910
        %v912 = vpop.f32.mrb[0].mxu0
        %v913 = vadd.f32 %v660, %v912
        %v914 = vpop.f32.mrb[0].mxu0
        %v915 = vadd.f32 %v662, %v914
        %916 = vdwg.mxu0
        %917 = vmatprep.subr.mxu0 0.0
        %v918 = vand.u32 %v428, 4294901760
        %v919 = vsub.f32 %v428, %v918
        %920 = vmatpush1.xpose.msra.mxu0 %v919
        %921 = vmatprep.subr.mxu0 0.0
        %v922 = vand.u32 %v431, 4294901760
        %v923 = vsub.f32 %v431, %v922
        %924 = vmatpush1.xpose.msra.mxu0 %v923
        %925 = vmatprep.subr.mxu0 0.0
        %v926 = vand.u32 %v434, 4294901760
        %v927 = vsub.f32 %v434, %v926
        %928 = vmatpush1.xpose.msra.mxu0 %v927
        %929 = vmatprep.subr.mxu0 0.0
        %v930 = vand.u32 %v437, 4294901760
        %v931 = vsub.f32 %v437, %v930
        %932 = vmatpush1.xpose.msra.mxu0 %v931
        %933 = vmatprep.subr.mxu0 0.0
        %v934 = vand.u32 %v440, 4294901760
        %v935 = vsub.f32 %v440, %v934
        %936 = vmatpush1.xpose.msra.mxu0 %v935
        %937 = vmatprep.subr.mxu0 0.0
        %v938 = vand.u32 %v443, 4294901760
        %v939 = vsub.f32 %v443, %v938
        %940 = vmatpush1.xpose.msra.mxu0 %v939
        %941 = vmatprep.subr.mxu0 0.0
        %v942 = vand.u32 %v446, 4294901760
        %v943 = vsub.f32 %v446, %v942
        %944 = vmatpush1.xpose.msra.mxu0 %v943
        %945 = vmatprep.subr.mxu0 0.0
        %v946 = vand.u32 %v449, 4294901760
        %v947 = vsub.f32 %v449, %v946
        %948 = vmatpush1.xpose.msra.mxu0 %v947
        %949 = vmatprep.subr.mxu0 0.0
        %v950 = vand.u32 %v452, 4294901760
        %v951 = vsub.f32 %v452, %v950
        %952 = vmatpush1.xpose.msra.mxu0 %v951
        %953 = vmatprep.subr.mxu0 0.0
        %v954 = vand.u32 %v455, 4294901760
        %v955 = vsub.f32 %v455, %v954
        %956 = vmatpush1.xpose.msra.mxu0 %v955
        %957 = vmatprep.subr.mxu0 0.0
        %v958 = vand.u32 %v458, 4294901760
        %v959 = vsub.f32 %v458, %v958
        %960 = vmatpush1.xpose.msra.mxu0 %v959
        %961 = vmatprep.subr.mxu0 0.0
        %v962 = vand.u32 %v461, 4294901760
        %v963 = vsub.f32 %v461, %v962
        %964 = vmatpush1.xpose.msra.mxu0 %v963
        %965 = vmatprep.subr.mxu0 0.0
        %v966 = vand.u32 %v464, 4294901760
        %v967 = vsub.f32 %v464, %v966
        %968 = vmatpush1.xpose.msra.mxu0 %v967
        %969 = vmatprep.subr.mxu0 0.0
        %v970 = vand.u32 %v467, 4294901760
        %v971 = vsub.f32 %v467, %v970
        %972 = vmatpush1.xpose.msra.mxu0 %v971
        %973 = vmatprep.subr.mxu0 0.0
        %v974 = vand.u32 %v470, 4294901760
        %v975 = vsub.f32 %v470, %v974
        %976 = vmatpush1.xpose.msra.mxu0 %v975
        %977 = vmatprep.subr.mxu0 0.0
        %v978 = vand.u32 %v473, 4294901760
        %v979 = vsub.f32 %v473, %v978
        %980 = vmatpush1.xpose.msra.mxu0 %v979
        %981 = vmatprep.subr.mxu0 0.0
        %v982 = vand.u32 %v476, 4294901760
        %v983 = vsub.f32 %v476, %v982
        %984 = vmatpush1.xpose.msra.mxu0 %v983
        %985 = vmatprep.subr.mxu0 0.0
        %v986 = vand.u32 %v479, 4294901760
        %v987 = vsub.f32 %v479, %v986
        %988 = vmatpush1.xpose.msra.mxu0 %v987
        %989 = vmatprep.subr.mxu0 0.0
        %v990 = vand.u32 %v482, 4294901760
        %v991 = vsub.f32 %v482, %v990
        %992 = vmatpush1.xpose.msra.mxu0 %v991
        %993 = vmatprep.subr.mxu0 0.0
        %v994 = vand.u32 %v485, 4294901760
        %v995 = vsub.f32 %v485, %v994
        %996 = vmatpush1.xpose.msra.mxu0 %v995
        %997 = vmatprep.subr.mxu0 0.0
        %v998 = vand.u32 %v488, 4294901760
        %v999 = vsub.f32 %v488, %v998
        %1000 = vmatpush1.xpose.msra.mxu0 %v999
        %1001 = vmatprep.subr.mxu0 0.0
        %v1002 = vand.u32 %v491, 4294901760
        %v1003 = vsub.f32 %v491, %v1002
        %1004 = vmatpush1.xpose.msra.mxu0 %v1003
        %1005 = vmatprep.subr.mxu0 0.0
        %v1006 = vand.u32 %v494, 4294901760
        %v1007 = vsub.f32 %v494, %v1006
        %1008 = vmatpush1.xpose.msra.mxu0 %v1007
        %1009 = vmatprep.subr.mxu0 0.0
        %v1010 = vand.u32 %v497, 4294901760
        %v1011 = vsub.f32 %v497, %v1010
        %1012 = vmatpush1.xpose.msra.mxu0 %v1011
        %1013 = vmatprep.subr.mxu0 0.0
        %v1014 = vand.u32 %v500, 4294901760
        %v1015 = vsub.f32 %v500, %v1014
        %1016 = vmatpush1.xpose.msra.mxu0 %v1015
        %1017 = vmatprep.subr.mxu0 0.0
        %v1018 = vand.u32 %v503, 4294901760
        %v1019 = vsub.f32 %v503, %v1018
        %1020 = vmatpush1.xpose.msra.mxu0 %v1019
        %1021 = vmatprep.subr.mxu0 0.0
        %v1022 = vand.u32 %v506, 4294901760
        %v1023 = vsub.f32 %v506, %v1022
        %1024 = vmatpush1.xpose.msra.mxu0 %v1023
        %1025 = vmatprep.subr.mxu0 0.0
        %v1026 = vand.u32 %v509, 4294901760
        %v1027 = vsub.f32 %v509, %v1026
        %1028 = vmatpush1.xpose.msra.mxu0 %v1027
        %1029 = vmatprep.subr.mxu0 0.0
        %v1030 = vand.u32 %v512, 4294901760
        %v1031 = vsub.f32 %v512, %v1030
        %1032 = vmatpush1.xpose.msra.mxu0 %v1031
        %1033 = vmatprep.subr.mxu0 0.0
        %v1034 = vand.u32 %v515, 4294901760
        %v1035 = vsub.f32 %v515, %v1034
        %1036 = vmatpush1.xpose.msra.mxu0 %v1035
        %1037 = vmatprep.subr.mxu0 0.0
        %v1038 = vand.u32 %v518, 4294901760
        %v1039 = vsub.f32 %v518, %v1038
        %1040 = vmatpush1.xpose.msra.mxu0 %v1039
        %1041 = vmatprep.subr.mxu0 0.0
        %v1042 = vand.u32 %v521, 4294901760
        %v1043 = vsub.f32 %v521, %v1042
        %1044 = vmatpush1.xpose.msra.mxu0 %v1043
        %1045 = vmatprep.mubr.f32.mxu0 0.0
        %v1046 = vand.u32 %v416, 4294901760
        %v1047 = vsub.f32 %v416, %v1046
        %1048 = vmatmul.mubr.f32.gmra.mrb[0].mxu0 %v1047
        %v1049 = vpop.f32.mrb[0].mxu0
        %v1050 = vadd.f32 %v892, %v1049
        %v1051 = vpop.f32.mrb[0].mxu0
        %v1052 = vadd.f32 %v894, %v1051
        %1053 = vmatprep.mubr.f32.mxu0 0.0
        %v1054 = vand.u32 %v419, 4294901760
        %v1055 = vsub.f32 %v419, %v1054
        %1056 = vmatmul.mubr.f32.gmra.mrb[0].mxu0 %v1055
        %v1057 = vpop.f32.mrb[0].mxu0
        %v1058 = vadd.f32 %v899, %v1057
        %v1059 = vpop.f32.mrb[0].mxu0
        %v1060 = vadd.f32 %v901, %v1059
        %1061 = vmatprep.mubr.f32.mxu0 0.0
        %v1062 = vand.u32 %v422, 4294901760
        %v1063 = vsub.f32 %v422, %v1062
        %1064 = vmatmul.mubr.f32.gmra.mrb[0].mxu0 %v1063
        %v1065 = vpop.f32.mrb[0].mxu0
        %v1066 = vadd.f32 %v906, %v1065
        %v1067 = vpop.f32.mrb[0].mxu0
        %v1068 = vadd.f32 %v908, %v1067
        %1069 = vmatprep.mubr.f32.mxu0 0.0
        %v1070 = vand.u32 %v425, 4294901760
        %v1071 = vsub.f32 %v425, %v1070
        %1072 = vmatmul.mubr.f32.gmra.mrb[0].mxu0 %v1071
        %v1073 = vpop.f32.mrb[0].mxu0
        %v1074 = vadd.f32 %v913, %v1073
        %v1075 = vpop.f32.mrb[0].mxu0
        %v1076 = vadd.f32 %v915, %v1075
        %1077 = vdwg.mxu0
        %1078 = vmatprep.subr.mxu0 0.0
        %v1079 = vand.u32 %v428, 4294901760
        %1080 = vmatpush1.xpose.msra.mxu0 %v1079
        %1081 = vmatprep.subr.mxu0 0.0
        %v1082 = vand.u32 %v431, 4294901760
        %1083 = vmatpush1.xpose.msra.mxu0 %v1082
        %1084 = vmatprep.subr.mxu0 0.0
        %v1085 = vand.u32 %v434, 4294901760
        %1086 = vmatpush1.xpose.msra.mxu0 %v1085
        %1087 = vmatprep.subr.mxu0 0.0
        %v1088 = vand.u32 %v437, 4294901760
        %1089 = vmatpush1.xpose.msra.mxu0 %v1088
        %1090 = vmatprep.subr.mxu0 0.0
        %v1091 = vand.u32 %v440, 4294901760
        %1092 = vmatpush1.xpose.msra.mxu0 %v1091
        %1093 = vmatprep.subr.mxu0 0.0
        %v1094 = vand.u32 %v443, 4294901760
        %1095 = vmatpush1.xpose.msra.mxu0 %v1094
        %1096 = vmatprep.subr.mxu0 0.0
        %v1097 = vand.u32 %v446, 4294901760
        %1098 = vmatpush1.xpose.msra.mxu0 %v1097
        %1099 = vmatprep.subr.mxu0 0.0
        %v1100 = vand.u32 %v449, 4294901760
        %1101 = vmatpush1.xpose.msra.mxu0 %v1100
        %1102 = vmatprep.subr.mxu0 0.0
        %v1103 = vand.u32 %v452, 4294901760
        %1104 = vmatpush1.xpose.msra.mxu0 %v1103
        %1105 = vmatprep.subr.mxu0 0.0
        %v1106 = vand.u32 %v455, 4294901760
        %1107 = vmatpush1.xpose.msra.mxu0 %v1106
        %1108 = vmatprep.subr.mxu0 0.0
        %v1109 = vand.u32 %v458, 4294901760
        %1110 = vmatpush1.xpose.msra.mxu0 %v1109
        %1111 = vmatprep.subr.mxu0 0.0
        %v1112 = vand.u32 %v461, 4294901760
        %1113 = vmatpush1.xpose.msra.mxu0 %v1112
        %1114 = vmatprep.subr.mxu0 0.0
        %v1115 = vand.u32 %v464, 4294901760
        %1116 = vmatpush1.xpose.msra.mxu0 %v1115
        %1117 = vmatprep.subr.mxu0 0.0
        %v1118 = vand.u32 %v467, 4294901760
        %1119 = vmatpush1.xpose.msra.mxu0 %v1118
        %1120 = vmatprep.subr.mxu0 0.0
        %v1121 = vand.u32 %v470, 4294901760
        %1122 = vmatpush1.xpose.msra.mxu0 %v1121
        %1123 = vmatprep.subr.mxu0 0.0
        %v1124 = vand.u32 %v473, 4294901760
        %1125 = vmatpush1.xpose.msra.mxu0 %v1124
        %1126 = vmatprep.subr.mxu0 0.0
        %v1127 = vand.u32 %v476, 4294901760
        %1128 = vmatpush1.xpose.msra.mxu0 %v1127
        %1129 = vmatprep.subr.mxu0 0.0
        %v1130 = vand.u32 %v479, 4294901760
        %1131 = vmatpush1.xpose.msra.mxu0 %v1130
        %1132 = vmatprep.subr.mxu0 0.0
        %v1133 = vand.u32 %v482, 4294901760
        %1134 = vmatpush1.xpose.msra.mxu0 %v1133
        %1135 = vmatprep.subr.mxu0 0.0
        %v1136 = vand.u32 %v485, 4294901760
        %1137 = vmatpush1.xpose.msra.mxu0 %v1136
        %1138 = vmatprep.subr.mxu0 0.0
        %v1139 = vand.u32 %v488, 4294901760
        %1140 = vmatpush1.xpose.msra.mxu0 %v1139
        %1141 = vmatprep.subr.mxu0 0.0
        %v1142 = vand.u32 %v491, 4294901760
        %1143 = vmatpush1.xpose.msra.mxu0 %v1142
        %1144 = vmatprep.subr.mxu0 0.0
        %v1145 = vand.u32 %v494, 4294901760
        %1146 = vmatpush1.xpose.msra.mxu0 %v1145
        %1147 = vmatprep.subr.mxu0 0.0
        %v1148 = vand.u32 %v497, 4294901760
        %1149 = vmatpush1.xpose.msra.mxu0 %v1148
        %1150 = vmatprep.subr.mxu0 0.0
        %v1151 = vand.u32 %v500, 4294901760
        %1152 = vmatpush1.xpose.msra.mxu0 %v1151
        %1153 = vmatprep.subr.mxu0 0.0
        %v1154 = vand.u32 %v503, 4294901760
        %1155 = vmatpush1.xpose.msra.mxu0 %v1154
        %1156 = vmatprep.subr.mxu0 0.0
        %v1157 = vand.u32 %v506, 4294901760
        %1158 = vmatpush1.xpose.msra.mxu0 %v1157
        %1159 = vmatprep.subr.mxu0 0.0
        %v1160 = vand.u32 %v509, 4294901760
        %1161 = vmatpush1.xpose.msra.mxu0 %v1160
        %1162 = vmatprep.subr.mxu0 0.0
        %v1163 = vand.u32 %v512, 4294901760
        %1164 = vmatpush1.xpose.msra.mxu0 %v1163
        %1165 = vmatprep.subr.mxu0 0.0
        %v1166 = vand.u32 %v515, 4294901760
        %1167 = vmatpush1.xpose.msra.mxu0 %v1166
        %1168 = vmatprep.subr.mxu0 0.0
        %v1169 = vand.u32 %v518, 4294901760
        %1170 = vmatpush1.xpose.msra.mxu0 %v1169
        %1171 = vmatprep.subr.mxu0 0.0
        %v1172 = vand.u32 %v521, 4294901760
        %1173 = vmatpush1.xpose.msra.mxu0 %v1172
        %1174 = vmatprep.mubr.f32.mxu0 0.0
        %v1175 = vand.u32 %v416, 4294901760
        %v1176 = vsub.f32 %v416, %v1175
        %v1177 = vand.u32 %v1176, 4294901760
        %1178 = vmatmul.mubr.f32.gmra.mrb[0].mxu0 %v1177
        %v1179 = vpop.f32.mrb[0].mxu0
        %v1180 = vadd.f32 %v1050, %v1179
        %v1181 = vpop.f32.mrb[0].mxu0
        %v1182 = vadd.f32 %v1052, %v1181
        %1183 = vmatprep.mubr.f32.mxu0 0.0
        %v1184 = vand.u32 %v419, 4294901760
        %v1185 = vsub.f32 %v419, %v1184
        %v1186 = vand.u32 %v1185, 4294901760
        %1187 = vmatmul.mubr.f32.gmra.mrb[0].mxu0 %v1186
        %v1188 = vpop.f32.mrb[0].mxu0
        %v1189 = vadd.f32 %v1058, %v1188
        %v1190 = vpop.f32.mrb[0].mxu0
        %v1191 = vadd.f32 %v1060, %v1190
        %1192 = vmatprep.mubr.f32.mxu0 0.0
        %v1193 = vand.u32 %v422, 4294901760
        %v1194 = vsub.f32 %v422, %v1193
        %v1195 = vand.u32 %v1194, 4294901760
        %1196 = vmatmul.mubr.f32.gmra.mrb[0].mxu0 %v1195
        %v1197 = vpop.f32.mrb[0].mxu0
        %v1198 = vadd.f32 %v1066, %v1197
        %v1199 = vpop.f32.mrb[0].mxu0
        %v1200 = vadd.f32 %v1068, %v1199
        %1201 = vmatprep.mubr.f32.mxu0 0.0
        %v1202 = vand.u32 %v425, 4294901760
        %v1203 = vsub.f32 %v425, %v1202
        %v1204 = vand.u32 %v1203, 4294901760
        %1205 = vmatmul.mubr.f32.gmra.mrb[0].mxu0 %v1204
        %v1206 = vpop.f32.mrb[0].mxu0
        %v1207 = vadd.f32 %v1074, %v1206
        %v1208 = vpop.f32.mrb[0].mxu0
        %v1209 = vadd.f32 %v1076, %v1208
        %1210 = vdwg.mxu0
        %1211 = vmatprep.subr.mxu0 0.0
        %v1212 = vand.u32 %v428, 4294901760
        %v1213 = vsub.f32 %v428, %v1212
        %v1214 = vand.u32 %v1213, 4294901760
        %1215 = vmatpush1.xpose.msra.mxu0 %v1214
        %1216 = vmatprep.subr.mxu0 0.0
        %v1217 = vand.u32 %v431, 4294901760
        %v1218 = vsub.f32 %v431, %v1217
        %v1219 = vand.u32 %v1218, 4294901760
        %1220 = vmatpush1.xpose.msra.mxu0 %v1219
        %1221 = vmatprep.subr.mxu0 0.0
        %v1222 = vand.u32 %v434, 4294901760
        %v1223 = vsub.f32 %v434, %v1222
        %v1224 = vand.u32 %v1223, 4294901760
        %1225 = vmatpush1.xpose.msra.mxu0 %v1224
        %1226 = vmatprep.subr.mxu0 0.0
        %v1227 = vand.u32 %v437, 4294901760
        %v1228 = vsub.f32 %v437, %v1227
        %v1229 = vand.u32 %v1228, 4294901760
        %1230 = vmatpush1.xpose.msra.mxu0 %v1229
        %1231 = vmatprep.subr.mxu0 0.0
        %v1232 = vand.u32 %v440, 4294901760
        %v1233 = vsub.f32 %v440, %v1232
        %v1234 = vand.u32 %v1233, 4294901760
        %1235 = vmatpush1.xpose.msra.mxu0 %v1234
        %1236 = vmatprep.subr.mxu0 0.0
        %v1237 = vand.u32 %v443, 4294901760
        %v1238 = vsub.f32 %v443, %v1237
        %v1239 = vand.u32 %v1238, 4294901760
        %1240 = vmatpush1.xpose.msra.mxu0 %v1239
        %1241 = vmatprep.subr.mxu0 0.0
        %v1242 = vand.u32 %v446, 4294901760
        %v1243 = vsub.f32 %v446, %v1242
        %v1244 = vand.u32 %v1243, 4294901760
        %1245 = vmatpush1.xpose.msra.mxu0 %v1244
        %1246 = vmatprep.subr.mxu0 0.0
        %v1247 = vand.u32 %v449, 4294901760
        %v1248 = vsub.f32 %v449, %v1247
        %v1249 = vand.u32 %v1248, 4294901760
        %1250 = vmatpush1.xpose.msra.mxu0 %v1249
        %1251 = vmatprep.subr.mxu0 0.0
        %v1252 = vand.u32 %v452, 4294901760
        %v1253 = vsub.f32 %v452, %v1252
        %v1254 = vand.u32 %v1253, 4294901760
        %1255 = vmatpush1.xpose.msra.mxu0 %v1254
        %1256 = vmatprep.subr.mxu0 0.0
        %v1257 = vand.u32 %v455, 4294901760
        %v1258 = vsub.f32 %v455, %v1257
        %v1259 = vand.u32 %v1258, 4294901760
        %1260 = vmatpush1.xpose.msra.mxu0 %v1259
        %1261 = vmatprep.subr.mxu0 0.0
        %v1262 = vand.u32 %v458, 4294901760
        %v1263 = vsub.f32 %v458, %v1262
        %v1264 = vand.u32 %v1263, 4294901760
        %1265 = vmatpush1.xpose.msra.mxu0 %v1264
        %1266 = vmatprep.subr.mxu0 0.0
        %v1267 = vand.u32 %v461, 4294901760
        %v1268 = vsub.f32 %v461, %v1267
        %v1269 = vand.u32 %v1268, 4294901760
        %1270 = vmatpush1.xpose.msra.mxu0 %v1269
        %1271 = vmatprep.subr.mxu0 0.0
        %v1272 = vand.u32 %v464, 4294901760
        %v1273 = vsub.f32 %v464, %v1272
        %v1274 = vand.u32 %v1273, 4294901760
        %1275 = vmatpush1.xpose.msra.mxu0 %v1274
        %1276 = vmatprep.subr.mxu0 0.0
        %v1277 = vand.u32 %v467, 4294901760
        %v1278 = vsub.f32 %v467, %v1277
        %v1279 = vand.u32 %v1278, 4294901760
        %1280 = vmatpush1.xpose.msra.mxu0 %v1279
        %1281 = vmatprep.subr.mxu0 0.0
        %v1282 = vand.u32 %v470, 4294901760
        %v1283 = vsub.f32 %v470, %v1282
        %v1284 = vand.u32 %v1283, 4294901760
        %1285 = vmatpush1.xpose.msra.mxu0 %v1284
        %1286 = vmatprep.subr.mxu0 0.0
        %v1287 = vand.u32 %v473, 4294901760
        %v1288 = vsub.f32 %v473, %v1287
        %v1289 = vand.u32 %v1288, 4294901760
        %1290 = vmatpush1.xpose.msra.mxu0 %v1289
        %1291 = vmatprep.subr.mxu0 0.0
        %v1292 = vand.u32 %v476, 4294901760
        %v1293 = vsub.f32 %v476, %v1292
        %v1294 = vand.u32 %v1293, 4294901760
        %1295 = vmatpush1.xpose.msra.mxu0 %v1294
        %1296 = vmatprep.subr.mxu0 0.0
        %v1297 = vand.u32 %v479, 4294901760
        %v1298 = vsub.f32 %v479, %v1297
        %v1299 = vand.u32 %v1298, 4294901760
        %1300 = vmatpush1.xpose.msra.mxu0 %v1299
        %1301 = vmatprep.subr.mxu0 0.0
        %v1302 = vand.u32 %v482, 4294901760
        %v1303 = vsub.f32 %v482, %v1302
        %v1304 = vand.u32 %v1303, 4294901760
        %1305 = vmatpush1.xpose.msra.mxu0 %v1304
        %1306 = vmatprep.subr.mxu0 0.0
        %v1307 = vand.u32 %v485, 4294901760
        %v1308 = vsub.f32 %v485, %v1307
        %v1309 = vand.u32 %v1308, 4294901760
        %1310 = vmatpush1.xpose.msra.mxu0 %v1309
        %1311 = vmatprep.subr.mxu0 0.0
        %v1312 = vand.u32 %v488, 4294901760
        %v1313 = vsub.f32 %v488, %v1312
        %v1314 = vand.u32 %v1313, 4294901760
        %1315 = vmatpush1.xpose.msra.mxu0 %v1314
        %1316 = vmatprep.subr.mxu0 0.0
        %v1317 = vand.u32 %v491, 4294901760
        %v1318 = vsub.f32 %v491, %v1317
        %v1319 = vand.u32 %v1318, 4294901760
        %1320 = vmatpush1.xpose.msra.mxu0 %v1319
        %1321 = vmatprep.subr.mxu0 0.0
        %v1322 = vand.u32 %v494, 4294901760
        %v1323 = vsub.f32 %v494, %v1322
        %v1324 = vand.u32 %v1323, 4294901760
        %1325 = vmatpush1.xpose.msra.mxu0 %v1324
        %1326 = vmatprep.subr.mxu0 0.0
        %v1327 = vand.u32 %v497, 4294901760
        %v1328 = vsub.f32 %v497, %v1327
        %v1329 = vand.u32 %v1328, 4294901760
        %1330 = vmatpush1.xpose.msra.mxu0 %v1329
        %1331 = vmatprep.subr.mxu0 0.0
        %v1332 = vand.u32 %v500, 4294901760
        %v1333 = vsub.f32 %v500, %v1332
        %v1334 = vand.u32 %v1333, 4294901760
        %1335 = vmatpush1.xpose.msra.mxu0 %v1334
        %1336 = vmatprep.subr.mxu0 0.0
        %v1337 = vand.u32 %v503, 4294901760
        %v1338 = vsub.f32 %v503, %v1337
        %v1339 = vand.u32 %v1338, 4294901760
        %1340 = vmatpush1.xpose.msra.mxu0 %v1339
        %1341 = vmatprep.subr.mxu0 0.0
        %v1342 = vand.u32 %v506, 4294901760
        %v1343 = vsub.f32 %v506, %v1342
        %v1344 = vand.u32 %v1343, 4294901760
        %1345 = vmatpush1.xpose.msra.mxu0 %v1344
        %1346 = vmatprep.subr.mxu0 0.0
        %v1347 = vand.u32 %v509, 4294901760
        %v1348 = vsub.f32 %v509, %v1347
        %v1349 = vand.u32 %v1348, 4294901760
        %1350 = vmatpush1.xpose.msra.mxu0 %v1349
        %1351 = vmatprep.subr.mxu0 0.0
        %v1352 = vand.u32 %v512, 4294901760
        %v1353 = vsub.f32 %v512, %v1352
        %v1354 = vand.u32 %v1353, 4294901760
        %1355 = vmatpush1.xpose.msra.mxu0 %v1354
        %1356 = vmatprep.subr.mxu0 0.0
        %v1357 = vand.u32 %v515, 4294901760
        %v1358 = vsub.f32 %v515, %v1357
        %v1359 = vand.u32 %v1358, 4294901760
        %1360 = vmatpush1.xpose.msra.mxu0 %v1359
        %1361 = vmatprep.subr.mxu0 0.0
        %v1362 = vand.u32 %v518, 4294901760
        %v1363 = vsub.f32 %v518, %v1362
        %v1364 = vand.u32 %v1363, 4294901760
        %1365 = vmatpush1.xpose.msra.mxu0 %v1364
        %1366 = vmatprep.subr.mxu0 0.0
        %v1367 = vand.u32 %v521, 4294901760
        %v1368 = vsub.f32 %v521, %v1367
        %v1369 = vand.u32 %v1368, 4294901760
        %1370 = vmatpush1.xpose.msra.mxu0 %v1369
        %1371 = vmatprep.mubr.f32.mxu0 0.0
        %v1372 = vand.u32 %v416, 4294901760
        %1373 = vmatmul.mubr.f32.gmra.mrb[0].mxu0 %v1372
        %v1374 = vpop.f32.mrb[0].mxu0
        %v1375 = vadd.f32 %v1180, %v1374
        %v1376 = vpop.f32.mrb[0].mxu0
        %v1377 = vadd.f32 %v1182, %v1376
        %1378 = vmatprep.mubr.f32.mxu0 0.0
        %v1379 = vand.u32 %v419, 4294901760
        %1380 = vmatmul.mubr.f32.gmra.mrb[0].mxu0 %v1379
        %v1381 = vpop.f32.mrb[0].mxu0
        %v1382 = vadd.f32 %v1189, %v1381
        %v1383 = vpop.f32.mrb[0].mxu0
        %v1384 = vadd.f32 %v1191, %v1383
        %1385 = vmatprep.mubr.f32.mxu0 0.0
        %v1386 = vand.u32 %v422, 4294901760
        %1387 = vmatmul.mubr.f32.gmra.mrb[0].mxu0 %v1386
        %v1388 = vpop.f32.mrb[0].mxu0
        %v1389 = vadd.f32 %v1198, %v1388
        %v1390 = vpop.f32.mrb[0].mxu0
        %v1391 = vadd.f32 %v1200, %v1390
        %1392 = vmatprep.mubr.f32.mxu0 0.0
        %v1393 = vand.u32 %v425, 4294901760
        %1394 = vmatmul.mubr.f32.gmra.mrb[0].mxu0 %v1393
        %v1395 = vpop.f32.mrb[0].mxu0
        %v1396 = vadd.f32 %v1207, %v1395
        %v1397 = vpop.f32.mrb[0].mxu0
        %v1398 = vadd.f32 %v1209, %v1397
        %1399 = vdwg.mxu0
        %1400 = vmatprep.subr.mxu0 0.0
        %v1401 = vand.u32 %v428, 4294901760
        %1402 = vmatpush1.xpose.msra.mxu0 %v1401
        %1403 = vmatprep.subr.mxu0 0.0
        %v1404 = vand.u32 %v431, 4294901760
        %1405 = vmatpush1.xpose.msra.mxu0 %v1404
        %1406 = vmatprep.subr.mxu0 0.0
        %v1407 = vand.u32 %v434, 4294901760
        %1408 = vmatpush1.xpose.msra.mxu0 %v1407
        %1409 = vmatprep.subr.mxu0 0.0
        %v1410 = vand.u32 %v437, 4294901760
        %1411 = vmatpush1.xpose.msra.mxu0 %v1410
        %1412 = vmatprep.subr.mxu0 0.0
        %v1413 = vand.u32 %v440, 4294901760
        %1414 = vmatpush1.xpose.msra.mxu0 %v1413
        %1415 = vmatprep.subr.mxu0 0.0
        %v1416 = vand.u32 %v443, 4294901760
        %1417 = vmatpush1.xpose.msra.mxu0 %v1416
        %1418 = vmatprep.subr.mxu0 0.0
        %v1419 = vand.u32 %v446, 4294901760
        %1420 = vmatpush1.xpose.msra.mxu0 %v1419
        %1421 = vmatprep.subr.mxu0 0.0
        %v1422 = vand.u32 %v449, 4294901760
        %1423 = vmatpush1.xpose.msra.mxu0 %v1422
        %1424 = vmatprep.subr.mxu0 0.0
        %v1425 = vand.u32 %v452, 4294901760
        %1426 = vmatpush1.xpose.msra.mxu0 %v1425
        %1427 = vmatprep.subr.mxu0 0.0
        %v1428 = vand.u32 %v455, 4294901760
        %1429 = vmatpush1.xpose.msra.mxu0 %v1428
        %1430 = vmatprep.subr.mxu0 0.0
        %v1431 = vand.u32 %v458, 4294901760
        %1432 = vmatpush1.xpose.msra.mxu0 %v1431
        %1433 = vmatprep.subr.mxu0 0.0
        %v1434 = vand.u32 %v461, 4294901760
        %1435 = vmatpush1.xpose.msra.mxu0 %v1434
        %1436 = vmatprep.subr.mxu0 0.0
        %v1437 = vand.u32 %v464, 4294901760
        %1438 = vmatpush1.xpose.msra.mxu0 %v1437
        %1439 = vmatprep.subr.mxu0 0.0
        %v1440 = vand.u32 %v467, 4294901760
        %1441 = vmatpush1.xpose.msra.mxu0 %v1440
        %1442 = vmatprep.subr.mxu0 0.0
        %v1443 = vand.u32 %v470, 4294901760
        %1444 = vmatpush1.xpose.msra.mxu0 %v1443
        %1445 = vmatprep.subr.mxu0 0.0
        %v1446 = vand.u32 %v473, 4294901760
        %1447 = vmatpush1.xpose.msra.mxu0 %v1446
        %1448 = vmatprep.subr.mxu0 0.0
        %v1449 = vand.u32 %v476, 4294901760
        %1450 = vmatpush1.xpose.msra.mxu0 %v1449
        %1451 = vmatprep.subr.mxu0 0.0
        %v1452 = vand.u32 %v479, 4294901760
        %1453 = vmatpush1.xpose.msra.mxu0 %v1452
        %1454 = vmatprep.subr.mxu0 0.0
        %v1455 = vand.u32 %v482, 4294901760
        %1456 = vmatpush1.xpose.msra.mxu0 %v1455
        %1457 = vmatprep.subr.mxu0 0.0
        %v1458 = vand.u32 %v485, 4294901760
        %1459 = vmatpush1.xpose.msra.mxu0 %v1458
        %1460 = vmatprep.subr.mxu0 0.0
        %v1461 = vand.u32 %v488, 4294901760
        %1462 = vmatpush1.xpose.msra.mxu0 %v1461
        %1463 = vmatprep.subr.mxu0 0.0
        %v1464 = vand.u32 %v491, 4294901760
        %1465 = vmatpush1.xpose.msra.mxu0 %v1464
        %1466 = vmatprep.subr.mxu0 0.0
        %v1467 = vand.u32 %v494, 4294901760
        %1468 = vmatpush1.xpose.msra.mxu0 %v1467
        %1469 = vmatprep.subr.mxu0 0.0
        %v1470 = vand.u32 %v497, 4294901760
        %1471 = vmatpush1.xpose.msra.mxu0 %v1470
        %1472 = vmatprep.subr.mxu0 0.0
        %v1473 = vand.u32 %v500, 4294901760
        %1474 = vmatpush1.xpose.msra.mxu0 %v1473
        %1475 = vmatprep.subr.mxu0 0.0
        %v1476 = vand.u32 %v503, 4294901760
        %1477 = vmatpush1.xpose.msra.mxu0 %v1476
        %1478 = vmatprep.subr.mxu0 0.0
        %v1479 = vand.u32 %v506, 4294901760
        %1480 = vmatpush1.xpose.msra.mxu0 %v1479
        %1481 = vmatprep.subr.mxu0 0.0
        %v1482 = vand.u32 %v509, 4294901760
        %1483 = vmatpush1.xpose.msra.mxu0 %v1482
        %1484 = vmatprep.subr.mxu0 0.0
        %v1485 = vand.u32 %v512, 4294901760
        %1486 = vmatpush1.xpose.msra.mxu0 %v1485
        %1487 = vmatprep.subr.mxu0 0.0
        %v1488 = vand.u32 %v515, 4294901760
        %1489 = vmatpush1.xpose.msra.mxu0 %v1488
        %1490 = vmatprep.subr.mxu0 0.0
        %v1491 = vand.u32 %v518, 4294901760
        %1492 = vmatpush1.xpose.msra.mxu0 %v1491
        %1493 = vmatprep.subr.mxu0 0.0
        %v1494 = vand.u32 %v521, 4294901760
        %1495 = vmatpush1.xpose.msra.mxu0 %v1494
        %1496 = vmatprep.mubr.f32.mxu0 0.0
        %v1497 = vand.u32 %v416, 4294901760
        %1498 = vmatmul.mubr.f32.gmra.mrb[0].mxu0 %v1497
        %v1499 = vpop.f32.mrb[0].mxu0
        %v1500 = vadd.f32 %v1375, %v1499
        %v1501 = vpop.f32.mrb[0].mxu0
        %v1502 = vadd.f32 %v1377, %v1501
        %1503 = vmatprep.mubr.f32.mxu0 0.0
        %v1504 = vand.u32 %v419, 4294901760
        %1505 = vmatmul.mubr.f32.gmra.mrb[0].mxu0 %v1504
        %v1506 = vpop.f32.mrb[0].mxu0
        %v1507 = vadd.f32 %v1382, %v1506
        %v1508 = vpop.f32.mrb[0].mxu0
        %v1509 = vadd.f32 %v1384, %v1508
        %1510 = vmatprep.mubr.f32.mxu0 0.0
        %v1511 = vand.u32 %v422, 4294901760
        %1512 = vmatmul.mubr.f32.gmra.mrb[0].mxu0 %v1511
        %v1513 = vpop.f32.mrb[0].mxu0
        %v1514 = vadd.f32 %v1389, %v1513
        %v1515 = vpop.f32.mrb[0].mxu0
        %v1516 = vadd.f32 %v1391, %v1515
        %1517 = vmatprep.mubr.f32.mxu0 0.0
        %v1518 = vand.u32 %v425, 4294901760
        %1519 = vmatmul.mubr.f32.gmra.mrb[0].mxu0 %v1518
        %v1520 = vpop.f32.mrb[0].mxu0
        %v1521 = vadd.f32 %v1396, %v1520
        %v1522 = vpop.f32.mrb[0].mxu0
        %v1523 = vadd.f32 %v1398, %v1522
        %1524 = vdwg.mxu0
        %v1525 = vld [vmem:[%s3] sm:$0xff]
        %v1526 = vld [vmem:[%s3 + $0x8] sm:$0xff]
        %v1527 = vld [vmem:[%s3 + $0x10] sm:$0xff]
        %v1528 = vld [vmem:[%s3 + $0x18] sm:$0x3f]
        %v1529 = vld [vmem:[%s4] sm:$0xff]
        %v1530 = vld [vmem:[%s4 + $0x8] sm:$0xff]
        %v1531 = vld [vmem:[%s4 + $0x10] sm:$0xff]
        %v1532 = vld [vmem:[%s4 + $0x18] sm:$0x3f]
        %1534 = vset.pattern.permute.xlu0 0
        %1535 = vperm.xlu0 %1534, %v1529
        %v1536 = vpop.permute.xlu0 %1535
        %1539 = vset.pattern.permute.xlu0 0
        %1540 = vperm.xlu0 %1539, %v1530
        %v1541 = vpop.permute.xlu0 %1540
        %1544 = vset.pattern.permute.xlu0 0
        %1545 = vperm.xlu0 %1544, %v1531
        %v1546 = vpop.permute.xlu0 %1545
        %1549 = vset.pattern.permute.xlu0 0
        %1550 = vperm.xlu0 %1549, %v1532
        %v1551 = vpop.permute.xlu0 %1550
        %v1554 = vsel %vm414, %v1525, 0
        %v1557 = vsel %vm414, %v1526, 0
        %v1560 = vsel %vm414, %v1527, 0
        %v1563 = vsel %vm414, %v1528, 0
        %1565 = vmatprep.subr.mxu0 0.0
        %v1566 = vand.u32 %v428, 4294901760
        %1567 = vmatpush1.xpose.msra.mxu0 %v1566
        %1568 = vmatprep.subr.mxu0 0.0
        %v1569 = vand.u32 %v431, 4294901760
        %1570 = vmatpush1.xpose.msra.mxu0 %v1569
        %1571 = vmatprep.subr.mxu0 0.0
        %v1572 = vand.u32 %v434, 4294901760
        %1573 = vmatpush1.xpose.msra.mxu0 %v1572
        %1574 = vmatprep.subr.mxu0 0.0
        %v1575 = vand.u32 %v437, 4294901760
        %1576 = vmatpush1.xpose.msra.mxu0 %v1575
        %1577 = vmatprep.subr.mxu0 0.0
        %v1578 = vand.u32 %v440, 4294901760
        %1579 = vmatpush1.xpose.msra.mxu0 %v1578
        %1580 = vmatprep.subr.mxu0 0.0
        %v1581 = vand.u32 %v443, 4294901760
        %1582 = vmatpush1.xpose.msra.mxu0 %v1581
        %1583 = vmatprep.subr.mxu0 0.0
        %v1584 = vand.u32 %v446, 4294901760
        %1585 = vmatpush1.xpose.msra.mxu0 %v1584
        %1586 = vmatprep.subr.mxu0 0.0
        %v1587 = vand.u32 %v449, 4294901760
        %1588 = vmatpush1.xpose.msra.mxu0 %v1587
        %1589 = vmatprep.subr.mxu0 0.0
        %v1590 = vand.u32 %v452, 4294901760
        %1591 = vmatpush1.xpose.msra.mxu0 %v1590
        %1592 = vmatprep.subr.mxu0 0.0
        %v1593 = vand.u32 %v455, 4294901760
        %1594 = vmatpush1.xpose.msra.mxu0 %v1593
        %1595 = vmatprep.subr.mxu0 0.0
        %v1596 = vand.u32 %v458, 4294901760
        %1597 = vmatpush1.xpose.msra.mxu0 %v1596
        %1598 = vmatprep.subr.mxu0 0.0
        %v1599 = vand.u32 %v461, 4294901760
        %1600 = vmatpush1.xpose.msra.mxu0 %v1599
        %1601 = vmatprep.subr.mxu0 0.0
        %v1602 = vand.u32 %v464, 4294901760
        %1603 = vmatpush1.xpose.msra.mxu0 %v1602
        %1604 = vmatprep.subr.mxu0 0.0
        %v1605 = vand.u32 %v467, 4294901760
        %1606 = vmatpush1.xpose.msra.mxu0 %v1605
        %1607 = vmatprep.subr.mxu0 0.0
        %v1608 = vand.u32 %v470, 4294901760
        %1609 = vmatpush1.xpose.msra.mxu0 %v1608
        %1610 = vmatprep.subr.mxu0 0.0
        %v1611 = vand.u32 %v473, 4294901760
        %1612 = vmatpush1.xpose.msra.mxu0 %v1611
        %1613 = vmatprep.subr.mxu0 0.0
        %v1614 = vand.u32 %v476, 4294901760
        %1615 = vmatpush1.xpose.msra.mxu0 %v1614
        %1616 = vmatprep.subr.mxu0 0.0
        %v1617 = vand.u32 %v479, 4294901760
        %1618 = vmatpush1.xpose.msra.mxu0 %v1617
        %1619 = vmatprep.subr.mxu0 0.0
        %v1620 = vand.u32 %v482, 4294901760
        %1621 = vmatpush1.xpose.msra.mxu0 %v1620
        %1622 = vmatprep.subr.mxu0 0.0
        %v1623 = vand.u32 %v485, 4294901760
        %1624 = vmatpush1.xpose.msra.mxu0 %v1623
        %1625 = vmatprep.subr.mxu0 0.0
        %v1626 = vand.u32 %v488, 4294901760
        %1627 = vmatpush1.xpose.msra.mxu0 %v1626
        %1628 = vmatprep.subr.mxu0 0.0
        %v1629 = vand.u32 %v491, 4294901760
        %1630 = vmatpush1.xpose.msra.mxu0 %v1629
        %1631 = vmatprep.subr.mxu0 0.0
        %v1632 = vand.u32 %v494, 4294901760
        %1633 = vmatpush1.xpose.msra.mxu0 %v1632
        %1634 = vmatprep.subr.mxu0 0.0
        %v1635 = vand.u32 %v497, 4294901760
        %1636 = vmatpush1.xpose.msra.mxu0 %v1635
        %1637 = vmatprep.subr.mxu0 0.0
        %v1638 = vand.u32 %v500, 4294901760
        %1639 = vmatpush1.xpose.msra.mxu0 %v1638
        %1640 = vmatprep.subr.mxu0 0.0
        %v1641 = vand.u32 %v503, 4294901760
        %1642 = vmatpush1.xpose.msra.mxu0 %v1641
        %1643 = vmatprep.subr.mxu0 0.0
        %v1644 = vand.u32 %v506, 4294901760
        %1645 = vmatpush1.xpose.msra.mxu0 %v1644
        %1646 = vmatprep.subr.mxu0 0.0
        %v1647 = vand.u32 %v509, 4294901760
        %1648 = vmatpush1.xpose.msra.mxu0 %v1647
        %1649 = vmatprep.subr.mxu0 0.0
        %v1650 = vand.u32 %v512, 4294901760
        %1651 = vmatpush1.xpose.msra.mxu0 %v1650
        %1652 = vmatprep.subr.mxu0 0.0
        %v1653 = vand.u32 %v515, 4294901760
        %1654 = vmatpush1.xpose.msra.mxu0 %v1653
        %1655 = vmatprep.subr.mxu0 0.0
        %v1656 = vand.u32 %v518, 4294901760
        %1657 = vmatpush1.xpose.msra.mxu0 %v1656
        %1658 = vmatprep.subr.mxu0 0.0
        %v1659 = vand.u32 %v521, 4294901760
        %1660 = vmatpush1.xpose.msra.mxu0 %v1659
        %1661 = vmatprep.mubr.f32.mxu0 0.0
        %v1662 = vand.u32 %v1554, 4294901760
        %v1663 = vsub.f32 %v1554, %v1662
        %v1664 = vand.u32 %v1663, 4294901760
        %v1665 = vsub.f32 %v1663, %v1664
        %v1666 = vand.u32 %v1665, 4294901760
        %1667 = vmatmul.mubr.f32.gmra.mrb[0].mxu0 %v1666
        %v1668 = vpop.f32.mrb[0].mxu0
        %v1669 = vadd.f32 %v1536, %v1668
        %v1670 = vpop.f32.mrb[0].mxu0
        %v1671 = vadd.f32 %v1536, %v1670
        %1672 = vmatprep.mubr.f32.mxu0 0.0
        %v1673 = vand.u32 %v1557, 4294901760
        %v1674 = vsub.f32 %v1557, %v1673
        %v1675 = vand.u32 %v1674, 4294901760
        %v1676 = vsub.f32 %v1674, %v1675
        %v1677 = vand.u32 %v1676, 4294901760
        %1678 = vmatmul.mubr.f32.gmra.mrb[0].mxu0 %v1677
        %v1679 = vpop.f32.mrb[0].mxu0
        %v1680 = vadd.f32 %v1541, %v1679
        %v1681 = vpop.f32.mrb[0].mxu0
        %v1682 = vadd.f32 %v1541, %v1681
        %1683 = vmatprep.mubr.f32.mxu0 0.0
        %v1684 = vand.u32 %v1560, 4294901760
        %v1685 = vsub.f32 %v1560, %v1684
        %v1686 = vand.u32 %v1685, 4294901760
        %v1687 = vsub.f32 %v1685, %v1686
        %v1688 = vand.u32 %v1687, 4294901760
        %1689 = vmatmul.mubr.f32.gmra.mrb[0].mxu0 %v1688
        %v1690 = vpop.f32.mrb[0].mxu0
        %v1691 = vadd.f32 %v1546, %v1690
        %v1692 = vpop.f32.mrb[0].mxu0
        %v1693 = vadd.f32 %v1546, %v1692
        %1694 = vmatprep.mubr.f32.mxu0 0.0
        %v1695 = vand.u32 %v1563, 4294901760
        %v1696 = vsub.f32 %v1563, %v1695
        %v1697 = vand.u32 %v1696, 4294901760
        %v1698 = vsub.f32 %v1696, %v1697
        %v1699 = vand.u32 %v1698, 4294901760
        %1700 = vmatmul.mubr.f32.gmra.mrb[0].mxu0 %v1699
        %v1701 = vpop.f32.mrb[0].mxu0
        %v1702 = vadd.f32 %v1551, %v1701
        %v1703 = vpop.f32.mrb[0].mxu0
        %v1704 = vadd.f32 %v1551, %v1703
        %1705 = vdwg.mxu0
        %1706 = vmatprep.subr.mxu0 0.0
        %v1707 = vand.u32 %v428, 4294901760
        %v1708 = vsub.f32 %v428, %v1707
        %v1709 = vand.u32 %v1708, 4294901760
        %v1710 = vsub.f32 %v1708, %v1709
        %v1711 = vand.u32 %v1710, 4294901760
        %1712 = vmatpush1.xpose.msra.mxu0 %v1711
        %1713 = vmatprep.subr.mxu0 0.0
        %v1714 = vand.u32 %v431, 4294901760
        %v1715 = vsub.f32 %v431, %v1714
        %v1716 = vand.u32 %v1715, 4294901760
        %v1717 = vsub.f32 %v1715, %v1716
        %v1718 = vand.u32 %v1717, 4294901760
        %1719 = vmatpush1.xpose.msra.mxu0 %v1718
        %1720 = vmatprep.subr.mxu0 0.0
        %v1721 = vand.u32 %v434, 4294901760
        %v1722 = vsub.f32 %v434, %v1721
        %v1723 = vand.u32 %v1722, 4294901760
        %v1724 = vsub.f32 %v1722, %v1723
        %v1725 = vand.u32 %v1724, 4294901760
        %1726 = vmatpush1.xpose.msra.mxu0 %v1725
        %1727 = vmatprep.subr.mxu0 0.0
        %v1728 = vand.u32 %v437, 4294901760
        %v1729 = vsub.f32 %v437, %v1728
        %v1730 = vand.u32 %v1729, 4294901760
        %v1731 = vsub.f32 %v1729, %v1730
        %v1732 = vand.u32 %v1731, 4294901760
        %1733 = vmatpush1.xpose.msra.mxu0 %v1732
        %1734 = vmatprep.subr.mxu0 0.0
        %v1735 = vand.u32 %v440, 4294901760
        %v1736 = vsub.f32 %v440, %v1735
        %v1737 = vand.u32 %v1736, 4294901760
        %v1738 = vsub.f32 %v1736, %v1737
        %v1739 = vand.u32 %v1738, 4294901760
        %1740 = vmatpush1.xpose.msra.mxu0 %v1739
        %1741 = vmatprep.subr.mxu0 0.0
        %v1742 = vand.u32 %v443, 4294901760
        %v1743 = vsub.f32 %v443, %v1742
        %v1744 = vand.u32 %v1743, 4294901760
        %v1745 = vsub.f32 %v1743, %v1744
        %v1746 = vand.u32 %v1745, 4294901760
        %1747 = vmatpush1.xpose.msra.mxu0 %v1746
        %1748 = vmatprep.subr.mxu0 0.0
        %v1749 = vand.u32 %v446, 4294901760
        %v1750 = vsub.f32 %v446, %v1749
        %v1751 = vand.u32 %v1750, 4294901760
        %v1752 = vsub.f32 %v1750, %v1751
        %v1753 = vand.u32 %v1752, 4294901760
        %1754 = vmatpush1.xpose.msra.mxu0 %v1753
        %1755 = vmatprep.subr.mxu0 0.0
        %v1756 = vand.u32 %v449, 4294901760
        %v1757 = vsub.f32 %v449, %v1756
        %v1758 = vand.u32 %v1757, 4294901760
        %v1759 = vsub.f32 %v1757, %v1758
        %v1760 = vand.u32 %v1759, 4294901760
        %1761 = vmatpush1.xpose.msra.mxu0 %v1760
        %1762 = vmatprep.subr.mxu0 0.0
        %v1763 = vand.u32 %v452, 4294901760
        %v1764 = vsub.f32 %v452, %v1763
        %v1765 = vand.u32 %v1764, 4294901760
        %v1766 = vsub.f32 %v1764, %v1765
        %v1767 = vand.u32 %v1766, 4294901760
        %1768 = vmatpush1.xpose.msra.mxu0 %v1767
        %1769 = vmatprep.subr.mxu0 0.0
        %v1770 = vand.u32 %v455, 4294901760
        %v1771 = vsub.f32 %v455, %v1770
        %v1772 = vand.u32 %v1771, 4294901760
        %v1773 = vsub.f32 %v1771, %v1772
        %v1774 = vand.u32 %v1773, 4294901760
        %1775 = vmatpush1.xpose.msra.mxu0 %v1774
        %1776 = vmatprep.subr.mxu0 0.0
        %v1777 = vand.u32 %v458, 4294901760
        %v1778 = vsub.f32 %v458, %v1777
        %v1779 = vand.u32 %v1778, 4294901760
        %v1780 = vsub.f32 %v1778, %v1779
        %v1781 = vand.u32 %v1780, 4294901760
        %1782 = vmatpush1.xpose.msra.mxu0 %v1781
        %1783 = vmatprep.subr.mxu0 0.0
        %v1784 = vand.u32 %v461, 4294901760
        %v1785 = vsub.f32 %v461, %v1784
        %v1786 = vand.u32 %v1785, 4294901760
        %v1787 = vsub.f32 %v1785, %v1786
        %v1788 = vand.u32 %v1787, 4294901760
        %1789 = vmatpush1.xpose.msra.mxu0 %v1788
        %1790 = vmatprep.subr.mxu0 0.0
        %v1791 = vand.u32 %v464, 4294901760
        %v1792 = vsub.f32 %v464, %v1791
        %v1793 = vand.u32 %v1792, 4294901760
        %v1794 = vsub.f32 %v1792, %v1793
        %v1795 = vand.u32 %v1794, 4294901760
        %1796 = vmatpush1.xpose.msra.mxu0 %v1795
        %1797 = vmatprep.subr.mxu0 0.0
        %v1798 = vand.u32 %v467, 4294901760
        %v1799 = vsub.f32 %v467, %v1798
        %v1800 = vand.u32 %v1799, 4294901760
        %v1801 = vsub.f32 %v1799, %v1800
        %v1802 = vand.u32 %v1801, 4294901760
        %1803 = vmatpush1.xpose.msra.mxu0 %v1802
        %1804 = vmatprep.subr.mxu0 0.0
        %v1805 = vand.u32 %v470, 4294901760
        %v1806 = vsub.f32 %v470, %v1805
        %v1807 = vand.u32 %v1806, 4294901760
        %v1808 = vsub.f32 %v1806, %v1807
        %v1809 = vand.u32 %v1808, 4294901760
        %1810 = vmatpush1.xpose.msra.mxu0 %v1809
        %1811 = vmatprep.subr.mxu0 0.0
        %v1812 = vand.u32 %v473, 4294901760
        %v1813 = vsub.f32 %v473, %v1812
        %v1814 = vand.u32 %v1813, 4294901760
        %v1815 = vsub.f32 %v1813, %v1814
        %v1816 = vand.u32 %v1815, 4294901760
        %1817 = vmatpush1.xpose.msra.mxu0 %v1816
        %1818 = vmatprep.subr.mxu0 0.0
        %v1819 = vand.u32 %v476, 4294901760
        %v1820 = vsub.f32 %v476, %v1819
        %v1821 = vand.u32 %v1820, 4294901760
        %v1822 = vsub.f32 %v1820, %v1821
        %v1823 = vand.u32 %v1822, 4294901760
        %1824 = vmatpush1.xpose.msra.mxu0 %v1823
        %1825 = vmatprep.subr.mxu0 0.0
        %v1826 = vand.u32 %v479, 4294901760
        %v1827 = vsub.f32 %v479, %v1826
        %v1828 = vand.u32 %v1827, 4294901760
        %v1829 = vsub.f32 %v1827, %v1828
        %v1830 = vand.u32 %v1829, 4294901760
        %1831 = vmatpush1.xpose.msra.mxu0 %v1830
        %1832 = vmatprep.subr.mxu0 0.0
        %v1833 = vand.u32 %v482, 4294901760
        %v1834 = vsub.f32 %v482, %v1833
        %v1835 = vand.u32 %v1834, 4294901760
        %v1836 = vsub.f32 %v1834, %v1835
        %v1837 = vand.u32 %v1836, 4294901760
        %1838 = vmatpush1.xpose.msra.mxu0 %v1837
        %1839 = vmatprep.subr.mxu0 0.0
        %v1840 = vand.u32 %v485, 4294901760
        %v1841 = vsub.f32 %v485, %v1840
        %v1842 = vand.u32 %v1841, 4294901760
        %v1843 = vsub.f32 %v1841, %v1842
        %v1844 = vand.u32 %v1843, 4294901760
        %1845 = vmatpush1.xpose.msra.mxu0 %v1844
        %1846 = vmatprep.subr.mxu0 0.0
        %v1847 = vand.u32 %v488, 4294901760
        %v1848 = vsub.f32 %v488, %v1847
        %v1849 = vand.u32 %v1848, 4294901760
        %v1850 = vsub.f32 %v1848, %v1849
        %v1851 = vand.u32 %v1850, 4294901760
        %1852 = vmatpush1.xpose.msra.mxu0 %v1851
        %1853 = vmatprep.subr.mxu0 0.0
        %v1854 = vand.u32 %v491, 4294901760
        %v1855 = vsub.f32 %v491, %v1854
        %v1856 = vand.u32 %v1855, 4294901760
        %v1857 = vsub.f32 %v1855, %v1856
        %v1858 = vand.u32 %v1857, 4294901760
        %1859 = vmatpush1.xpose.msra.mxu0 %v1858
        %1860 = vmatprep.subr.mxu0 0.0
        %v1861 = vand.u32 %v494, 4294901760
        %v1862 = vsub.f32 %v494, %v1861
        %v1863 = vand.u32 %v1862, 4294901760
        %v1864 = vsub.f32 %v1862, %v1863
        %v1865 = vand.u32 %v1864, 4294901760
        %1866 = vmatpush1.xpose.msra.mxu0 %v1865
        %1867 = vmatprep.subr.mxu0 0.0
        %v1868 = vand.u32 %v497, 4294901760
        %v1869 = vsub.f32 %v497, %v1868
        %v1870 = vand.u32 %v1869, 4294901760
        %v1871 = vsub.f32 %v1869, %v1870
        %v1872 = vand.u32 %v1871, 4294901760
        %1873 = vmatpush1.xpose.msra.mxu0 %v1872
        %1874 = vmatprep.subr.mxu0 0.0
        %v1875 = vand.u32 %v500, 4294901760
        %v1876 = vsub.f32 %v500, %v1875
        %v1877 = vand.u32 %v1876, 4294901760
        %v1878 = vsub.f32 %v1876, %v1877
        %v1879 = vand.u32 %v1878, 4294901760
        %1880 = vmatpush1.xpose.msra.mxu0 %v1879
        %1881 = vmatprep.subr.mxu0 0.0
        %v1882 = vand.u32 %v503, 4294901760
        %v1883 = vsub.f32 %v503, %v1882
        %v1884 = vand.u32 %v1883, 4294901760
        %v1885 = vsub.f32 %v1883, %v1884
        %v1886 = vand.u32 %v1885, 4294901760
        %1887 = vmatpush1.xpose.msra.mxu0 %v1886
        %1888 = vmatprep.subr.mxu0 0.0
        %v1889 = vand.u32 %v506, 4294901760
        %v1890 = vsub.f32 %v506, %v1889
        %v1891 = vand.u32 %v1890, 4294901760
        %v1892 = vsub.f32 %v1890, %v1891
        %v1893 = vand.u32 %v1892, 4294901760
        %1894 = vmatpush1.xpose.msra.mxu0 %v1893
        %1895 = vmatprep.subr.mxu0 0.0
        %v1896 = vand.u32 %v509, 4294901760
        %v1897 = vsub.f32 %v509, %v1896
        %v1898 = vand.u32 %v1897, 4294901760
        %v1899 = vsub.f32 %v1897, %v1898
        %v1900 = vand.u32 %v1899, 4294901760
        %1901 = vmatpush1.xpose.msra.mxu0 %v1900
        %1902 = vmatprep.subr.mxu0 0.0
        %v1903 = vand.u32 %v512, 4294901760
        %v1904 = vsub.f32 %v512, %v1903
        %v1905 = vand.u32 %v1904, 4294901760
        %v1906 = vsub.f32 %v1904, %v1905
        %v1907 = vand.u32 %v1906, 4294901760
        %1908 = vmatpush1.xpose.msra.mxu0 %v1907
        %1909 = vmatprep.subr.mxu0 0.0
        %v1910 = vand.u32 %v515, 4294901760
        %v1911 = vsub.f32 %v515, %v1910
        %v1912 = vand.u32 %v1911, 4294901760
        %v1913 = vsub.f32 %v1911, %v1912
        %v1914 = vand.u32 %v1913, 4294901760
        %1915 = vmatpush1.xpose.msra.mxu0 %v1914
        %1916 = vmatprep.subr.mxu0 0.0
        %v1917 = vand.u32 %v518, 4294901760
        %v1918 = vsub.f32 %v518, %v1917
        %v1919 = vand.u32 %v1918, 4294901760
        %v1920 = vsub.f32 %v1918, %v1919
        %v1921 = vand.u32 %v1920, 4294901760
        %1922 = vmatpush1.xpose.msra.mxu0 %v1921
        %1923 = vmatprep.subr.mxu0 0.0
        %v1924 = vand.u32 %v521, 4294901760
        %v1925 = vsub.f32 %v521, %v1924
        %v1926 = vand.u32 %v1925, 4294901760
        %v1927 = vsub.f32 %v1925, %v1926
        %v1928 = vand.u32 %v1927, 4294901760
        %1929 = vmatpush1.xpose.msra.mxu0 %v1928
        %1930 = vmatprep.mubr.f32.mxu0 0.0
        %v1931 = vand.u32 %v1554, 4294901760
        %1932 = vmatmul.mubr.f32.gmra.mrb[0].mxu0 %v1931
        %v1933 = vpop.f32.mrb[0].mxu0
        %v1934 = vadd.f32 %v1669, %v1933
        %v1935 = vpop.f32.mrb[0].mxu0
        %v1936 = vadd.f32 %v1671, %v1935
        %1937 = vmatprep.mubr.f32.mxu0 0.0
        %v1938 = vand.u32 %v1557, 4294901760
        %1939 = vmatmul.mubr.f32.gmra.mrb[0].mxu0 %v1938
        %v1940 = vpop.f32.mrb[0].mxu0
        %v1941 = vadd.f32 %v1680, %v1940
        %v1942 = vpop.f32.mrb[0].mxu0
        %v1943 = vadd.f32 %v1682, %v1942
        %1944 = vmatprep.mubr.f32.mxu0 0.0
        %v1945 = vand.u32 %v1560, 4294901760
        %1946 = vmatmul.mubr.f32.gmra.mrb[0].mxu0 %v1945
        %v1947 = vpop.f32.mrb[0].mxu0
        %v1948 = vadd.f32 %v1691, %v1947
        %v1949 = vpop.f32.mrb[0].mxu0
        %v1950 = vadd.f32 %v1693, %v1949
        %1951 = vmatprep.mubr.f32.mxu0 0.0
        %v1952 = vand.u32 %v1563, 4294901760
        %1953 = vmatmul.mubr.f32.gmra.mrb[0].mxu0 %v1952
        %v1954 = vpop.f32.mrb[0].mxu0
        %v1955 = vadd.f32 %v1702, %v1954
        %v1956 = vpop.f32.mrb[0].mxu0
        %v1957 = vadd.f32 %v1704, %v1956
        %1958 = vdwg.mxu0
        %1959 = vmatprep.subr.mxu0 0.0
        %v1960 = vand.u32 %v428, 4294901760
        %v1961 = vsub.f32 %v428, %v1960
        %1962 = vmatpush1.xpose.msra.mxu0 %v1961
        %1963 = vmatprep.subr.mxu0 0.0
        %v1964 = vand.u32 %v431, 4294901760
        %v1965 = vsub.f32 %v431, %v1964
        %1966 = vmatpush1.xpose.msra.mxu0 %v1965
        %1967 = vmatprep.subr.mxu0 0.0
        %v1968 = vand.u32 %v434, 4294901760
        %v1969 = vsub.f32 %v434, %v1968
        %1970 = vmatpush1.xpose.msra.mxu0 %v1969
        %1971 = vmatprep.subr.mxu0 0.0
        %v1972 = vand.u32 %v437, 4294901760
        %v1973 = vsub.f32 %v437, %v1972
        %1974 = vmatpush1.xpose.msra.mxu0 %v1973
        %1975 = vmatprep.subr.mxu0 0.0
        %v1976 = vand.u32 %v440, 4294901760
        %v1977 = vsub.f32 %v440, %v1976
        %1978 = vmatpush1.xpose.msra.mxu0 %v1977
        %1979 = vmatprep.subr.mxu0 0.0
        %v1980 = vand.u32 %v443, 4294901760
        %v1981 = vsub.f32 %v443, %v1980
        %1982 = vmatpush1.xpose.msra.mxu0 %v1981
        %1983 = vmatprep.subr.mxu0 0.0
        %v1984 = vand.u32 %v446, 4294901760
        %v1985 = vsub.f32 %v446, %v1984
        %1986 = vmatpush1.xpose.msra.mxu0 %v1985
        %1987 = vmatprep.subr.mxu0 0.0
        %v1988 = vand.u32 %v449, 4294901760
        %v1989 = vsub.f32 %v449, %v1988
        %1990 = vmatpush1.xpose.msra.mxu0 %v1989
        %1991 = vmatprep.subr.mxu0 0.0
        %v1992 = vand.u32 %v452, 4294901760
        %v1993 = vsub.f32 %v452, %v1992
        %1994 = vmatpush1.xpose.msra.mxu0 %v1993
        %1995 = vmatprep.subr.mxu0 0.0
        %v1996 = vand.u32 %v455, 4294901760
        %v1997 = vsub.f32 %v455, %v1996
        %1998 = vmatpush1.xpose.msra.mxu0 %v1997
        %1999 = vmatprep.subr.mxu0 0.0
        %v2000 = vand.u32 %v458, 4294901760
        %v2001 = vsub.f32 %v458, %v2000
        %2002 = vmatpush1.xpose.msra.mxu0 %v2001
        %2003 = vmatprep.subr.mxu0 0.0
        %v2004 = vand.u32 %v461, 4294901760
        %v2005 = vsub.f32 %v461, %v2004
        %2006 = vmatpush1.xpose.msra.mxu0 %v2005
        %2007 = vmatprep.subr.mxu0 0.0
        %v2008 = vand.u32 %v464, 4294901760
        %v2009 = vsub.f32 %v464, %v2008
        %2010 = vmatpush1.xpose.msra.mxu0 %v2009
        %2011 = vmatprep.subr.mxu0 0.0
        %v2012 = vand.u32 %v467, 4294901760
        %v2013 = vsub.f32 %v467, %v2012
        %2014 = vmatpush1.xpose.msra.mxu0 %v2013
        %2015 = vmatprep.subr.mxu0 0.0
        %v2016 = vand.u32 %v470, 4294901760
        %v2017 = vsub.f32 %v470, %v2016
        %2018 = vmatpush1.xpose.msra.mxu0 %v2017
        %2019 = vmatprep.subr.mxu0 0.0
        %v2020 = vand.u32 %v473, 4294901760
        %v2021 = vsub.f32 %v473, %v2020
        %2022 = vmatpush1.xpose.msra.mxu0 %v2021
        %2023 = vmatprep.subr.mxu0 0.0
        %v2024 = vand.u32 %v476, 4294901760
        %v2025 = vsub.f32 %v476, %v2024
        %2026 = vmatpush1.xpose.msra.mxu0 %v2025
        %2027 = vmatprep.subr.mxu0 0.0
        %v2028 = vand.u32 %v479, 4294901760
        %v2029 = vsub.f32 %v479, %v2028
        %2030 = vmatpush1.xpose.msra.mxu0 %v2029
        %2031 = vmatprep.subr.mxu0 0.0
        %v2032 = vand.u32 %v482, 4294901760
        %v2033 = vsub.f32 %v482, %v2032
        %2034 = vmatpush1.xpose.msra.mxu0 %v2033
        %2035 = vmatprep.subr.mxu0 0.0
        %v2036 = vand.u32 %v485, 4294901760
        %v2037 = vsub.f32 %v485, %v2036
        %2038 = vmatpush1.xpose.msra.mxu0 %v2037
        %2039 = vmatprep.subr.mxu0 0.0
        %v2040 = vand.u32 %v488, 4294901760
        %v2041 = vsub.f32 %v488, %v2040
        %2042 = vmatpush1.xpose.msra.mxu0 %v2041
        %2043 = vmatprep.subr.mxu0 0.0
        %v2044 = vand.u32 %v491, 4294901760
        %v2045 = vsub.f32 %v491, %v2044
        %2046 = vmatpush1.xpose.msra.mxu0 %v2045
        %2047 = vmatprep.subr.mxu0 0.0
        %v2048 = vand.u32 %v494, 4294901760
        %v2049 = vsub.f32 %v494, %v2048
        %2050 = vmatpush1.xpose.msra.mxu0 %v2049
        %2051 = vmatprep.subr.mxu0 0.0
        %v2052 = vand.u32 %v497, 4294901760
        %v2053 = vsub.f32 %v497, %v2052
        %2054 = vmatpush1.xpose.msra.mxu0 %v2053
        %2055 = vmatprep.subr.mxu0 0.0
        %v2056 = vand.u32 %v500, 4294901760
        %v2057 = vsub.f32 %v500, %v2056
        %2058 = vmatpush1.xpose.msra.mxu0 %v2057
        %2059 = vmatprep.subr.mxu0 0.0
        %v2060 = vand.u32 %v503, 4294901760
        %v2061 = vsub.f32 %v503, %v2060
        %2062 = vmatpush1.xpose.msra.mxu0 %v2061
        %2063 = vmatprep.subr.mxu0 0.0
        %v2064 = vand.u32 %v506, 4294901760
        %v2065 = vsub.f32 %v506, %v2064
        %2066 = vmatpush1.xpose.msra.mxu0 %v2065
        %2067 = vmatprep.subr.mxu0 0.0
        %v2068 = vand.u32 %v509, 4294901760
        %v2069 = vsub.f32 %v509, %v2068
        %2070 = vmatpush1.xpose.msra.mxu0 %v2069
        %2071 = vmatprep.subr.mxu0 0.0
        %v2072 = vand.u32 %v512, 4294901760
        %v2073 = vsub.f32 %v512, %v2072
        %2074 = vmatpush1.xpose.msra.mxu0 %v2073
        %2075 = vmatprep.subr.mxu0 0.0
        %v2076 = vand.u32 %v515, 4294901760
        %v2077 = vsub.f32 %v515, %v2076
        %2078 = vmatpush1.xpose.msra.mxu0 %v2077
        %2079 = vmatprep.subr.mxu0 0.0
        %v2080 = vand.u32 %v518, 4294901760
        %v2081 = vsub.f32 %v518, %v2080
        %2082 = vmatpush1.xpose.msra.mxu0 %v2081
        %2083 = vmatprep.subr.mxu0 0.0
        %v2084 = vand.u32 %v521, 4294901760
        %v2085 = vsub.f32 %v521, %v2084
        %2086 = vmatpush1.xpose.msra.mxu0 %v2085
        %2087 = vmatprep.mubr.f32.mxu0 0.0
        %v2088 = vand.u32 %v1554, 4294901760
        %v2089 = vsub.f32 %v1554, %v2088
        %2090 = vmatmul.mubr.f32.gmra.mrb[0].mxu0 %v2089
        %v2091 = vpop.f32.mrb[0].mxu0
        %v2092 = vadd.f32 %v1934, %v2091
        %v2093 = vpop.f32.mrb[0].mxu0
        %v2094 = vadd.f32 %v1936, %v2093
        %2095 = vmatprep.mubr.f32.mxu0 0.0
        %v2096 = vand.u32 %v1557, 4294901760
        %v2097 = vsub.f32 %v1557, %v2096
        %2098 = vmatmul.mubr.f32.gmra.mrb[0].mxu0 %v2097
        %v2099 = vpop.f32.mrb[0].mxu0
        %v2100 = vadd.f32 %v1941, %v2099
        %v2101 = vpop.f32.mrb[0].mxu0
        %v2102 = vadd.f32 %v1943, %v2101
        %2103 = vmatprep.mubr.f32.mxu0 0.0
        %v2104 = vand.u32 %v1560, 4294901760
        %v2105 = vsub.f32 %v1560, %v2104
        %2106 = vmatmul.mubr.f32.gmra.mrb[0].mxu0 %v2105
        %v2107 = vpop.f32.mrb[0].mxu0
        %v2108 = vadd.f32 %v1948, %v2107
        %v2109 = vpop.f32.mrb[0].mxu0
        %v2110 = vadd.f32 %v1950, %v2109
        %2111 = vmatprep.mubr.f32.mxu0 0.0
        %v2112 = vand.u32 %v1563, 4294901760
        %v2113 = vsub.f32 %v1563, %v2112
        %2114 = vmatmul.mubr.f32.gmra.mrb[0].mxu0 %v2113
        %v2115 = vpop.f32.mrb[0].mxu0
        %v2116 = vadd.f32 %v1955, %v2115
        %v2117 = vpop.f32.mrb[0].mxu0
        %v2118 = vadd.f32 %v1957, %v2117
        %2119 = vdwg.mxu0
        %2120 = vmatprep.subr.mxu0 0.0
        %v2121 = vand.u32 %v428, 4294901760
        %2122 = vmatpush1.xpose.msra.mxu0 %v2121
        %2123 = vmatprep.subr.mxu0 0.0
        %v2124 = vand.u32 %v431, 4294901760
        %2125 = vmatpush1.xpose.msra.mxu0 %v2124
        %2126 = vmatprep.subr.mxu0 0.0
        %v2127 = vand.u32 %v434, 4294901760
        %2128 = vmatpush1.xpose.msra.mxu0 %v2127
        %2129 = vmatprep.subr.mxu0 0.0
        %v2130 = vand.u32 %v437, 4294901760
        %2131 = vmatpush1.xpose.msra.mxu0 %v2130
        %2132 = vmatprep.subr.mxu0 0.0
        %v2133 = vand.u32 %v440, 4294901760
        %2134 = vmatpush1.xpose.msra.mxu0 %v2133
        %2135 = vmatprep.subr.mxu0 0.0
        %v2136 = vand.u32 %v443, 4294901760
        %2137 = vmatpush1.xpose.msra.mxu0 %v2136
        %2138 = vmatprep.subr.mxu0 0.0
        %v2139 = vand.u32 %v446, 4294901760
        %2140 = vmatpush1.xpose.msra.mxu0 %v2139
        %2141 = vmatprep.subr.mxu0 0.0
        %v2142 = vand.u32 %v449, 4294901760
        %2143 = vmatpush1.xpose.msra.mxu0 %v2142
        %2144 = vmatprep.subr.mxu0 0.0
        %v2145 = vand.u32 %v452, 4294901760
        %2146 = vmatpush1.xpose.msra.mxu0 %v2145
        %2147 = vmatprep.subr.mxu0 0.0
        %v2148 = vand.u32 %v455, 4294901760
        %2149 = vmatpush1.xpose.msra.mxu0 %v2148
        %2150 = vmatprep.subr.mxu0 0.0
        %v2151 = vand.u32 %v458, 4294901760
        %2152 = vmatpush1.xpose.msra.mxu0 %v2151
        %2153 = vmatprep.subr.mxu0 0.0
        %v2154 = vand.u32 %v461, 4294901760
        %2155 = vmatpush1.xpose.msra.mxu0 %v2154
        %2156 = vmatprep.subr.mxu0 0.0
        %v2157 = vand.u32 %v464, 4294901760
        %2158 = vmatpush1.xpose.msra.mxu0 %v2157
        %2159 = vmatprep.subr.mxu0 0.0
        %v2160 = vand.u32 %v467, 4294901760
        %2161 = vmatpush1.xpose.msra.mxu0 %v2160
        %2162 = vmatprep.subr.mxu0 0.0
        %v2163 = vand.u32 %v470, 4294901760
        %2164 = vmatpush1.xpose.msra.mxu0 %v2163
        %2165 = vmatprep.subr.mxu0 0.0
        %v2166 = vand.u32 %v473, 4294901760
        %2167 = vmatpush1.xpose.msra.mxu0 %v2166
        %2168 = vmatprep.subr.mxu0 0.0
        %v2169 = vand.u32 %v476, 4294901760
        %2170 = vmatpush1.xpose.msra.mxu0 %v2169
        %2171 = vmatprep.subr.mxu0 0.0
        %v2172 = vand.u32 %v479, 4294901760
        %2173 = vmatpush1.xpose.msra.mxu0 %v2172
        %2174 = vmatprep.subr.mxu0 0.0
        %v2175 = vand.u32 %v482, 4294901760
        %2176 = vmatpush1.xpose.msra.mxu0 %v2175
        %2177 = vmatprep.subr.mxu0 0.0
        %v2178 = vand.u32 %v485, 4294901760
        %2179 = vmatpush1.xpose.msra.mxu0 %v2178
        %2180 = vmatprep.subr.mxu0 0.0
        %v2181 = vand.u32 %v488, 4294901760
        %2182 = vmatpush1.xpose.msra.mxu0 %v2181
        %2183 = vmatprep.subr.mxu0 0.0
        %v2184 = vand.u32 %v491, 4294901760
        %2185 = vmatpush1.xpose.msra.mxu0 %v2184
        %2186 = vmatprep.subr.mxu0 0.0
        %v2187 = vand.u32 %v494, 4294901760
        %2188 = vmatpush1.xpose.msra.mxu0 %v2187
        %2189 = vmatprep.subr.mxu0 0.0
        %v2190 = vand.u32 %v497, 4294901760
        %2191 = vmatpush1.xpose.msra.mxu0 %v2190
        %2192 = vmatprep.subr.mxu0 0.0
        %v2193 = vand.u32 %v500, 4294901760
        %2194 = vmatpush1.xpose.msra.mxu0 %v2193
        %2195 = vmatprep.subr.mxu0 0.0
        %v2196 = vand.u32 %v503, 4294901760
        %2197 = vmatpush1.xpose.msra.mxu0 %v2196
        %2198 = vmatprep.subr.mxu0 0.0
        %v2199 = vand.u32 %v506, 4294901760
        %2200 = vmatpush1.xpose.msra.mxu0 %v2199
        %2201 = vmatprep.subr.mxu0 0.0
        %v2202 = vand.u32 %v509, 4294901760
        %2203 = vmatpush1.xpose.msra.mxu0 %v2202
        %2204 = vmatprep.subr.mxu0 0.0
        %v2205 = vand.u32 %v512, 4294901760
        %2206 = vmatpush1.xpose.msra.mxu0 %v2205
        %2207 = vmatprep.subr.mxu0 0.0
        %v2208 = vand.u32 %v515, 4294901760
        %2209 = vmatpush1.xpose.msra.mxu0 %v2208
        %2210 = vmatprep.subr.mxu0 0.0
        %v2211 = vand.u32 %v518, 4294901760
        %2212 = vmatpush1.xpose.msra.mxu0 %v2211
        %2213 = vmatprep.subr.mxu0 0.0
        %v2214 = vand.u32 %v521, 4294901760
        %2215 = vmatpush1.xpose.msra.mxu0 %v2214
        %2216 = vmatprep.mubr.f32.mxu0 0.0
        %v2217 = vand.u32 %v1554, 4294901760
        %v2218 = vsub.f32 %v1554, %v2217
        %v2219 = vand.u32 %v2218, 4294901760
        %2220 = vmatmul.mubr.f32.gmra.mrb[0].mxu0 %v2219
        %v2221 = vpop.f32.mrb[0].mxu0
        %v2222 = vadd.f32 %v2092, %v2221
        %v2223 = vpop.f32.mrb[0].mxu0
        %v2224 = vadd.f32 %v2094, %v2223
        %2225 = vmatprep.mubr.f32.mxu0 0.0
        %v2226 = vand.u32 %v1557, 4294901760
        %v2227 = vsub.f32 %v1557, %v2226
        %v2228 = vand.u32 %v2227, 4294901760
        %2229 = vmatmul.mubr.f32.gmra.mrb[0].mxu0 %v2228
        %v2230 = vpop.f32.mrb[0].mxu0
        %v2231 = vadd.f32 %v2100, %v2230
        %v2232 = vpop.f32.mrb[0].mxu0
        %v2233 = vadd.f32 %v2102, %v2232
        %2234 = vmatprep.mubr.f32.mxu0 0.0
        %v2235 = vand.u32 %v1560, 4294901760
        %v2236 = vsub.f32 %v1560, %v2235
        %v2237 = vand.u32 %v2236, 4294901760
        %2238 = vmatmul.mubr.f32.gmra.mrb[0].mxu0 %v2237
        %v2239 = vpop.f32.mrb[0].mxu0
        %v2240 = vadd.f32 %v2108, %v2239
        %v2241 = vpop.f32.mrb[0].mxu0
        %v2242 = vadd.f32 %v2110, %v2241
        %2243 = vmatprep.mubr.f32.mxu0 0.0
        %v2244 = vand.u32 %v1563, 4294901760
        %v2245 = vsub.f32 %v1563, %v2244
        %v2246 = vand.u32 %v2245, 4294901760
        %2247 = vmatmul.mubr.f32.gmra.mrb[0].mxu0 %v2246
        %v2248 = vpop.f32.mrb[0].mxu0
        %v2249 = vadd.f32 %v2116, %v2248
        %v2250 = vpop.f32.mrb[0].mxu0
        %v2251 = vadd.f32 %v2118, %v2250
        %2252 = vdwg.mxu0
        %2253 = vmatprep.subr.mxu0 0.0
        %v2254 = vand.u32 %v428, 4294901760
        %v2255 = vsub.f32 %v428, %v2254
        %v2256 = vand.u32 %v2255, 4294901760
        %2257 = vmatpush1.xpose.msra.mxu0 %v2256
        %2258 = vmatprep.subr.mxu0 0.0
        %v2259 = vand.u32 %v431, 4294901760
        %v2260 = vsub.f32 %v431, %v2259
        %v2261 = vand.u32 %v2260, 4294901760
        %2262 = vmatpush1.xpose.msra.mxu0 %v2261
        %2263 = vmatprep.subr.mxu0 0.0
        %v2264 = vand.u32 %v434, 4294901760
        %v2265 = vsub.f32 %v434, %v2264
        %v2266 = vand.u32 %v2265, 4294901760
        %2267 = vmatpush1.xpose.msra.mxu0 %v2266
        %2268 = vmatprep.subr.mxu0 0.0
        %v2269 = vand.u32 %v437, 4294901760
        %v2270 = vsub.f32 %v437, %v2269
        %v2271 = vand.u32 %v2270, 4294901760
        %2272 = vmatpush1.xpose.msra.mxu0 %v2271
        %2273 = vmatprep.subr.mxu0 0.0
        %v2274 = vand.u32 %v440, 4294901760
        %v2275 = vsub.f32 %v440, %v2274
        %v2276 = vand.u32 %v2275, 4294901760
        %2277 = vmatpush1.xpose.msra.mxu0 %v2276
        %2278 = vmatprep.subr.mxu0 0.0
        %v2279 = vand.u32 %v443, 4294901760
        %v2280 = vsub.f32 %v443, %v2279
        %v2281 = vand.u32 %v2280, 4294901760
        %2282 = vmatpush1.xpose.msra.mxu0 %v2281
        %2283 = vmatprep.subr.mxu0 0.0
        %v2284 = vand.u32 %v446, 4294901760
        %v2285 = vsub.f32 %v446, %v2284
        %v2286 = vand.u32 %v2285, 4294901760
        %2287 = vmatpush1.xpose.msra.mxu0 %v2286
        %2288 = vmatprep.subr.mxu0 0.0
        %v2289 = vand.u32 %v449, 4294901760
        %v2290 = vsub.f32 %v449, %v2289
        %v2291 = vand.u32 %v2290, 4294901760
        %2292 = vmatpush1.xpose.msra.mxu0 %v2291
        %2293 = vmatprep.subr.mxu0 0.0
        %v2294 = vand.u32 %v452, 4294901760
        %v2295 = vsub.f32 %v452, %v2294
        %v2296 = vand.u32 %v2295, 4294901760
        %2297 = vmatpush1.xpose.msra.mxu0 %v2296
        %2298 = vmatprep.subr.mxu0 0.0
        %v2299 = vand.u32 %v455, 4294901760
        %v2300 = vsub.f32 %v455, %v2299
        %v2301 = vand.u32 %v2300, 4294901760
        %2302 = vmatpush1.xpose.msra.mxu0 %v2301
        %2303 = vmatprep.subr.mxu0 0.0
        %v2304 = vand.u32 %v458, 4294901760
        %v2305 = vsub.f32 %v458, %v2304
        %v2306 = vand.u32 %v2305, 4294901760
        %2307 = vmatpush1.xpose.msra.mxu0 %v2306
        %2308 = vmatprep.subr.mxu0 0.0
        %v2309 = vand.u32 %v461, 4294901760
        %v2310 = vsub.f32 %v461, %v2309
        %v2311 = vand.u32 %v2310, 4294901760
        %2312 = vmatpush1.xpose.msra.mxu0 %v2311
        %2313 = vmatprep.subr.mxu0 0.0
        %v2314 = vand.u32 %v464, 4294901760
        %v2315 = vsub.f32 %v464, %v2314
        %v2316 = vand.u32 %v2315, 4294901760
        %2317 = vmatpush1.xpose.msra.mxu0 %v2316
        %2318 = vmatprep.subr.mxu0 0.0
        %v2319 = vand.u32 %v467, 4294901760
        %v2320 = vsub.f32 %v467, %v2319
        %v2321 = vand.u32 %v2320, 4294901760
        %2322 = vmatpush1.xpose.msra.mxu0 %v2321
        %2323 = vmatprep.subr.mxu0 0.0
        %v2324 = vand.u32 %v470, 4294901760
        %v2325 = vsub.f32 %v470, %v2324
        %v2326 = vand.u32 %v2325, 4294901760
        %2327 = vmatpush1.xpose.msra.mxu0 %v2326
        %2328 = vmatprep.subr.mxu0 0.0
        %v2329 = vand.u32 %v473, 4294901760
        %v2330 = vsub.f32 %v473, %v2329
        %v2331 = vand.u32 %v2330, 4294901760
        %2332 = vmatpush1.xpose.msra.mxu0 %v2331
        %2333 = vmatprep.subr.mxu0 0.0
        %v2334 = vand.u32 %v476, 4294901760
        %v2335 = vsub.f32 %v476, %v2334
        %v2336 = vand.u32 %v2335, 4294901760
        %2337 = vmatpush1.xpose.msra.mxu0 %v2336
        %2338 = vmatprep.subr.mxu0 0.0
        %v2339 = vand.u32 %v479, 4294901760
        %v2340 = vsub.f32 %v479, %v2339
        %v2341 = vand.u32 %v2340, 4294901760
        %2342 = vmatpush1.xpose.msra.mxu0 %v2341
        %2343 = vmatprep.subr.mxu0 0.0
        %v2344 = vand.u32 %v482, 4294901760
        %v2345 = vsub.f32 %v482, %v2344
        %v2346 = vand.u32 %v2345, 4294901760
        %2347 = vmatpush1.xpose.msra.mxu0 %v2346
        %2348 = vmatprep.subr.mxu0 0.0
        %v2349 = vand.u32 %v485, 4294901760
        %v2350 = vsub.f32 %v485, %v2349
        %v2351 = vand.u32 %v2350, 4294901760
        %2352 = vmatpush1.xpose.msra.mxu0 %v2351
        %2353 = vmatprep.subr.mxu0 0.0
        %v2354 = vand.u32 %v488, 4294901760
        %v2355 = vsub.f32 %v488, %v2354
        %v2356 = vand.u32 %v2355, 4294901760
        %2357 = vmatpush1.xpose.msra.mxu0 %v2356
        %2358 = vmatprep.subr.mxu0 0.0
        %v2359 = vand.u32 %v491, 4294901760
        %v2360 = vsub.f32 %v491, %v2359
        %v2361 = vand.u32 %v2360, 4294901760
        %2362 = vmatpush1.xpose.msra.mxu0 %v2361
        %2363 = vmatprep.subr.mxu0 0.0
        %v2364 = vand.u32 %v494, 4294901760
        %v2365 = vsub.f32 %v494, %v2364
        %v2366 = vand.u32 %v2365, 4294901760
        %2367 = vmatpush1.xpose.msra.mxu0 %v2366
        %2368 = vmatprep.subr.mxu0 0.0
        %v2369 = vand.u32 %v497, 4294901760
        %v2370 = vsub.f32 %v497, %v2369
        %v2371 = vand.u32 %v2370, 4294901760
        %2372 = vmatpush1.xpose.msra.mxu0 %v2371
        %2373 = vmatprep.subr.mxu0 0.0
        %v2374 = vand.u32 %v500, 4294901760
        %v2375 = vsub.f32 %v500, %v2374
        %v2376 = vand.u32 %v2375, 4294901760
        %2377 = vmatpush1.xpose.msra.mxu0 %v2376
        %2378 = vmatprep.subr.mxu0 0.0
        %v2379 = vand.u32 %v503, 4294901760
        %v2380 = vsub.f32 %v503, %v2379
        %v2381 = vand.u32 %v2380, 4294901760
        %2382 = vmatpush1.xpose.msra.mxu0 %v2381
        %2383 = vmatprep.subr.mxu0 0.0
        %v2384 = vand.u32 %v506, 4294901760
        %v2385 = vsub.f32 %v506, %v2384
        %v2386 = vand.u32 %v2385, 4294901760
        %2387 = vmatpush1.xpose.msra.mxu0 %v2386
        %2388 = vmatprep.subr.mxu0 0.0
        %v2389 = vand.u32 %v509, 4294901760
        %v2390 = vsub.f32 %v509, %v2389
        %v2391 = vand.u32 %v2390, 4294901760
        %2392 = vmatpush1.xpose.msra.mxu0 %v2391
        %2393 = vmatprep.subr.mxu0 0.0
        %v2394 = vand.u32 %v512, 4294901760
        %v2395 = vsub.f32 %v512, %v2394
        %v2396 = vand.u32 %v2395, 4294901760
        %2397 = vmatpush1.xpose.msra.mxu0 %v2396
        %2398 = vmatprep.subr.mxu0 0.0
        %v2399 = vand.u32 %v515, 4294901760
        %v2400 = vsub.f32 %v515, %v2399
        %v2401 = vand.u32 %v2400, 4294901760
        %2402 = vmatpush1.xpose.msra.mxu0 %v2401
        %2403 = vmatprep.subr.mxu0 0.0
        %v2404 = vand.u32 %v518, 4294901760
        %v2405 = vsub.f32 %v518, %v2404
        %v2406 = vand.u32 %v2405, 4294901760
        %2407 = vmatpush1.xpose.msra.mxu0 %v2406
        %2408 = vmatprep.subr.mxu0 0.0
        %v2409 = vand.u32 %v521, 4294901760
        %v2410 = vsub.f32 %v521, %v2409
        %v2411 = vand.u32 %v2410, 4294901760
        %2412 = vmatpush1.xpose.msra.mxu0 %v2411
        %2413 = vmatprep.mubr.f32.mxu0 0.0
        %v2414 = vand.u32 %v1554, 4294901760
        %2415 = vmatmul.mubr.f32.gmra.mrb[0].mxu0 %v2414
        %v2416 = vpop.f32.mrb[0].mxu0
        %v2417 = vadd.f32 %v2222, %v2416
        %v2418 = vpop.f32.mrb[0].mxu0
        %v2419 = vadd.f32 %v2224, %v2418
        %2420 = vmatprep.mubr.f32.mxu0 0.0
        %v2421 = vand.u32 %v1557, 4294901760
        %2422 = vmatmul.mubr.f32.gmra.mrb[0].mxu0 %v2421
        %v2423 = vpop.f32.mrb[0].mxu0
        %v2424 = vadd.f32 %v2231, %v2423
        %v2425 = vpop.f32.mrb[0].mxu0
        %v2426 = vadd.f32 %v2233, %v2425
        %2427 = vmatprep.mubr.f32.mxu0 0.0
        %v2428 = vand.u32 %v1560, 4294901760
        %2429 = vmatmul.mubr.f32.gmra.mrb[0].mxu0 %v2428
        %v2430 = vpop.f32.mrb[0].mxu0
        %v2431 = vadd.f32 %v2240, %v2430
        %v2432 = vpop.f32.mrb[0].mxu0
        %v2433 = vadd.f32 %v2242, %v2432
        %2434 = vmatprep.mubr.f32.mxu0 0.0
        %v2435 = vand.u32 %v1563, 4294901760
        %2436 = vmatmul.mubr.f32.gmra.mrb[0].mxu0 %v2435
        %v2437 = vpop.f32.mrb[0].mxu0
        %v2438 = vadd.f32 %v2249, %v2437
        %v2439 = vpop.f32.mrb[0].mxu0
        %v2440 = vadd.f32 %v2251, %v2439
        %2441 = vdwg.mxu0
        %2442 = vmatprep.subr.mxu0 0.0
        %v2443 = vand.u32 %v428, 4294901760
        %2444 = vmatpush1.xpose.msra.mxu0 %v2443
        %2445 = vmatprep.subr.mxu0 0.0
        %v2446 = vand.u32 %v431, 4294901760
        %2447 = vmatpush1.xpose.msra.mxu0 %v2446
        %2448 = vmatprep.subr.mxu0 0.0
        %v2449 = vand.u32 %v434, 4294901760
        %2450 = vmatpush1.xpose.msra.mxu0 %v2449
        %2451 = vmatprep.subr.mxu0 0.0
        %v2452 = vand.u32 %v437, 4294901760
        %2453 = vmatpush1.xpose.msra.mxu0 %v2452
        %2454 = vmatprep.subr.mxu0 0.0
        %v2455 = vand.u32 %v440, 4294901760
        %2456 = vmatpush1.xpose.msra.mxu0 %v2455
        %2457 = vmatprep.subr.mxu0 0.0
        %v2458 = vand.u32 %v443, 4294901760
        %2459 = vmatpush1.xpose.msra.mxu0 %v2458
        %2460 = vmatprep.subr.mxu0 0.0
        %v2461 = vand.u32 %v446, 4294901760
        %2462 = vmatpush1.xpose.msra.mxu0 %v2461
        %2463 = vmatprep.subr.mxu0 0.0
        %v2464 = vand.u32 %v449, 4294901760
        %2465 = vmatpush1.xpose.msra.mxu0 %v2464
        %2466 = vmatprep.subr.mxu0 0.0
        %v2467 = vand.u32 %v452, 4294901760
        %2468 = vmatpush1.xpose.msra.mxu0 %v2467
        %2469 = vmatprep.subr.mxu0 0.0
        %v2470 = vand.u32 %v455, 4294901760
        %2471 = vmatpush1.xpose.msra.mxu0 %v2470
        %2472 = vmatprep.subr.mxu0 0.0
        %v2473 = vand.u32 %v458, 4294901760
        %2474 = vmatpush1.xpose.msra.mxu0 %v2473
        %2475 = vmatprep.subr.mxu0 0.0
        %v2476 = vand.u32 %v461, 4294901760
        %2477 = vmatpush1.xpose.msra.mxu0 %v2476
        %2478 = vmatprep.subr.mxu0 0.0
        %v2479 = vand.u32 %v464, 4294901760
        %2480 = vmatpush1.xpose.msra.mxu0 %v2479
        %2481 = vmatprep.subr.mxu0 0.0
        %v2482 = vand.u32 %v467, 4294901760
        %2483 = vmatpush1.xpose.msra.mxu0 %v2482
        %2484 = vmatprep.subr.mxu0 0.0
        %v2485 = vand.u32 %v470, 4294901760
        %2486 = vmatpush1.xpose.msra.mxu0 %v2485
        %2487 = vmatprep.subr.mxu0 0.0
        %v2488 = vand.u32 %v473, 4294901760
        %2489 = vmatpush1.xpose.msra.mxu0 %v2488
        %2490 = vmatprep.subr.mxu0 0.0
        %v2491 = vand.u32 %v476, 4294901760
        %2492 = vmatpush1.xpose.msra.mxu0 %v2491
        %2493 = vmatprep.subr.mxu0 0.0
        %v2494 = vand.u32 %v479, 4294901760
        %2495 = vmatpush1.xpose.msra.mxu0 %v2494
        %2496 = vmatprep.subr.mxu0 0.0
        %v2497 = vand.u32 %v482, 4294901760
        %2498 = vmatpush1.xpose.msra.mxu0 %v2497
        %2499 = vmatprep.subr.mxu0 0.0
        %v2500 = vand.u32 %v485, 4294901760
        %2501 = vmatpush1.xpose.msra.mxu0 %v2500
        %2502 = vmatprep.subr.mxu0 0.0
        %v2503 = vand.u32 %v488, 4294901760
        %2504 = vmatpush1.xpose.msra.mxu0 %v2503
        %2505 = vmatprep.subr.mxu0 0.0
        %v2506 = vand.u32 %v491, 4294901760
        %2507 = vmatpush1.xpose.msra.mxu0 %v2506
        %2508 = vmatprep.subr.mxu0 0.0
        %v2509 = vand.u32 %v494, 4294901760
        %2510 = vmatpush1.xpose.msra.mxu0 %v2509
        %2511 = vmatprep.subr.mxu0 0.0
        %v2512 = vand.u32 %v497, 4294901760
        %2513 = vmatpush1.xpose.msra.mxu0 %v2512
        %2514 = vmatprep.subr.mxu0 0.0
        %v2515 = vand.u32 %v500, 4294901760
        %2516 = vmatpush1.xpose.msra.mxu0 %v2515
        %2517 = vmatprep.subr.mxu0 0.0
        %v2518 = vand.u32 %v503, 4294901760
        %2519 = vmatpush1.xpose.msra.mxu0 %v2518
        %2520 = vmatprep.subr.mxu0 0.0
        %v2521 = vand.u32 %v506, 4294901760
        %2522 = vmatpush1.xpose.msra.mxu0 %v2521
        %2523 = vmatprep.subr.mxu0 0.0
        %v2524 = vand.u32 %v509, 4294901760
        %2525 = vmatpush1.xpose.msra.mxu0 %v2524
        %2526 = vmatprep.subr.mxu0 0.0
        %v2527 = vand.u32 %v512, 4294901760
        %2528 = vmatpush1.xpose.msra.mxu0 %v2527
        %2529 = vmatprep.subr.mxu0 0.0
        %v2530 = vand.u32 %v515, 4294901760
        %2531 = vmatpush1.xpose.msra.mxu0 %v2530
        %2532 = vmatprep.subr.mxu0 0.0
        %v2533 = vand.u32 %v518, 4294901760
        %2534 = vmatpush1.xpose.msra.mxu0 %v2533
        %2535 = vmatprep.subr.mxu0 0.0
        %v2536 = vand.u32 %v521, 4294901760
        %2537 = vmatpush1.xpose.msra.mxu0 %v2536
        %2538 = vmatprep.mubr.f32.mxu0 0.0
        %v2539 = vand.u32 %v1554, 4294901760
        %2540 = vmatmul.mubr.f32.gmra.mrb[0].mxu0 %v2539
        %v2541 = vpop.f32.mrb[0].mxu0
        %v2542 = vadd.f32 %v2417, %v2541
        %v2543 = vpop.f32.mrb[0].mxu0
        %v2544 = vadd.f32 %v2419, %v2543
        %2545 = vmatprep.mubr.f32.mxu0 0.0
        %v2546 = vand.u32 %v1557, 4294901760
        %2547 = vmatmul.mubr.f32.gmra.mrb[0].mxu0 %v2546
        %v2548 = vpop.f32.mrb[0].mxu0
        %v2549 = vadd.f32 %v2424, %v2548
        %v2550 = vpop.f32.mrb[0].mxu0
        %v2551 = vadd.f32 %v2426, %v2550
        %2552 = vmatprep.mubr.f32.mxu0 0.0
        %v2553 = vand.u32 %v1560, 4294901760
        %2554 = vmatmul.mubr.f32.gmra.mrb[0].mxu0 %v2553
        %v2555 = vpop.f32.mrb[0].mxu0
        %v2556 = vadd.f32 %v2431, %v2555
        %v2557 = vpop.f32.mrb[0].mxu0
        %v2558 = vadd.f32 %v2433, %v2557
        %2559 = vmatprep.mubr.f32.mxu0 0.0
        %v2560 = vand.u32 %v1563, 4294901760
        %2561 = vmatmul.mubr.f32.gmra.mrb[0].mxu0 %v2560
        %v2562 = vpop.f32.mrb[0].mxu0
        %v2563 = vadd.f32 %v2438, %v2562
        %v2564 = vpop.f32.mrb[0].mxu0
        %v2565 = vadd.f32 %v2440, %v2564
        %2566 = vdwg.mxu0
        %v2567 = vmax.f32 %v2542, 0.0
        %v2568 = vmax.f32 %v2544, 0.0
        %v2569 = vmax.f32 %v2549, 0.0
        %v2570 = vmax.f32 %v2551, 0.0
        %v2571 = vmax.f32 %v2556, 0.0
        %v2572 = vmax.f32 %v2558, 0.0
        %v2573 = vmax.f32 %v2563, 0.0
        %v2574 = vmax.f32 %v2565, 0.0
        %v2575 = vld [vmem:[%s5] sm:$0xff]
        %v2576 = vld [vmem:[%s5 + $0x8] sm:$0xff]
        %v2577 = vld [vmem:[%s5 + $0x10] sm:$0xff]
        %v2578 = vld [vmem:[%s5 + $0x18] sm:$0x3f]
        %v2579 = vld [vmem:[%s6] sm:$0xff]
        %v2580 = vld [vmem:[%s6 + $0x8] sm:$0xff]
        %v2581 = vld [vmem:[%s6 + $0x10] sm:$0xff]
        %v2582 = vld [vmem:[%s6 + $0x18] sm:$0x3f]
        %2584 = vset.pattern.permute.xlu0 0
        %2585 = vperm.xlu0 %2584, %v2579
        %v2586 = vpop.permute.xlu0 %2585
        %2589 = vset.pattern.permute.xlu0 0
        %2590 = vperm.xlu0 %2589, %v2580
        %v2591 = vpop.permute.xlu0 %2590
        %2594 = vset.pattern.permute.xlu0 0
        %2595 = vperm.xlu0 %2594, %v2581
        %v2596 = vpop.permute.xlu0 %2595
        %2599 = vset.pattern.permute.xlu0 0
        %2600 = vperm.xlu0 %2599, %v2582
        %v2601 = vpop.permute.xlu0 %2600
        %v2604 = vsel %vm414, %v2575, 0
        %v2607 = vsel %vm414, %v2576, 0
        %v2610 = vsel %vm414, %v2577, 0
        %v2613 = vsel %vm414, %v2578, 0
        %vm2615 = vcmask 1045504
        %v2617 = vsel %vm2615, %v2573, 0
        %v2620 = vsel %vm2615, %v2574, 0
        %v2622 = vand.u32 %v2568, 4294901760
        %2623 = vmatprep.subr.mxu0 %v2622
        %v2624 = vand.u32 %v2567, 4294901760
        %2625 = vmatpush1.msra.mxu0 %v2624
        %v2626 = vand.u32 %v2570, 4294901760
        %2627 = vmatprep.subr.mxu0 %v2626
        %v2628 = vand.u32 %v2569, 4294901760
        %2629 = vmatpush1.msra.mxu0 %v2628
        %v2630 = vand.u32 %v2572, 4294901760
        %2631 = vmatprep.subr.mxu0 %v2630
        %v2632 = vand.u32 %v2571, 4294901760
        %2633 = vmatpush1.msra.mxu0 %v2632
        %v2634 = vand.u32 %v2620, 4294901760
        %2635 = vmatprep.subr.mxu0 %v2634
        %v2636 = vand.u32 %v2617, 4294901760
        %2637 = vmatpush1.msra.mxu0 %v2636
        %2638 = vmatprep.subr.mxu0 0.0
        %2639 = vmatpush1.msra.mxu0 0.0
        %2640 = vmatprep.subr.mxu0 0.0
        %2641 = vmatpush1.msra.mxu0 0.0
        %2642 = vmatprep.subr.mxu0 0.0
        %2643 = vmatpush1.msra.mxu0 0.0
        %2644 = vmatprep.subr.mxu0 0.0
        %2645 = vmatpush1.msra.mxu0 0.0
        %2646 = vmatprep.subr.mxu0 0.0
        %2647 = vmatpush1.msra.mxu0 0.0
        %2648 = vmatprep.subr.mxu0 0.0
        %2649 = vmatpush1.msra.mxu0 0.0
        %2650 = vmatprep.subr.mxu0 0.0
        %2651 = vmatpush1.msra.mxu0 0.0
        %2652 = vmatprep.subr.mxu0 0.0
        %2653 = vmatpush1.msra.mxu0 0.0
        %2654 = vmatprep.subr.mxu0 0.0
        %2655 = vmatpush1.msra.mxu0 0.0
        %2656 = vmatprep.subr.mxu0 0.0
        %2657 = vmatpush1.msra.mxu0 0.0
        %2658 = vmatprep.subr.mxu0 0.0
        %2659 = vmatpush1.msra.mxu0 0.0
        %2660 = vmatprep.subr.mxu0 0.0
        %2661 = vmatpush1.msra.mxu0 0.0
        %2662 = vmatprep.subr.mxu0 0.0
        %2663 = vmatpush1.msra.mxu0 0.0
        %2664 = vmatprep.subr.mxu0 0.0
        %2665 = vmatpush1.msra.mxu0 0.0
        %2666 = vmatprep.subr.mxu0 0.0
        %2667 = vmatpush1.msra.mxu0 0.0
        %2668 = vmatprep.subr.mxu0 0.0
        %2669 = vmatpush1.msra.mxu0 0.0
        %2670 = vmatprep.subr.mxu0 0.0
        %2671 = vmatpush1.msra.mxu0 0.0
        %2672 = vmatprep.subr.mxu0 0.0
        %2673 = vmatpush1.msra.mxu0 0.0
        %2674 = vmatprep.subr.mxu0 0.0
        %2675 = vmatpush1.msra.mxu0 0.0
        %2676 = vmatprep.subr.mxu0 0.0
        %2677 = vmatpush1.msra.mxu0 0.0
        %2678 = vmatprep.subr.mxu0 0.0
        %2679 = vmatpush1.msra.mxu0 0.0
        %2680 = vmatprep.subr.mxu0 0.0
        %2681 = vmatpush1.msra.mxu0 0.0
        %2682 = vmatprep.subr.mxu0 0.0
        %2683 = vmatpush1.msra.mxu0 0.0
        %2684 = vmatprep.subr.mxu0 0.0
        %2685 = vmatpush1.msra.mxu0 0.0
        %2686 = vmatprep.subr.mxu0 0.0
        %2687 = vmatpush1.msra.mxu0 0.0
        %2688 = vmatprep.subr.mxu0 0.0
        %2689 = vmatpush1.msra.mxu0 0.0
        %2690 = vmatprep.subr.mxu0 0.0
        %2691 = vmatpush1.msra.mxu0 0.0
        %2692 = vmatprep.subr.mxu0 0.0
        %2693 = vmatpush1.msra.mxu0 0.0
        %2694 = vmatprep.mubr.f32.mxu0 0.0
        %v2695 = vand.u32 %v2604, 4294901760
        %v2696 = vsub.f32 %v2604, %v2695
        %v2697 = vand.u32 %v2696, 4294901760
        %v2698 = vsub.f32 %v2696, %v2697
        %v2699 = vand.u32 %v2698, 4294901760
        %2700 = vmatmul.mubr.f32.gmra.mrb[0].mxu0 %v2699
        %v2701 = vpop.f32.mrb[0].mxu0
        %v2702 = vadd.f32 %v2586, %v2701
        %v2703 = vpop.f32.mrb[0].mxu0
        %v2704 = vadd.f32 %v2586, %v2703
        %2705 = vmatprep.mubr.f32.mxu0 0.0
        %v2706 = vand.u32 %v2607, 4294901760
        %v2707 = vsub.f32 %v2607, %v2706
        %v2708 = vand.u32 %v2707, 4294901760
        %v2709 = vsub.f32 %v2707, %v2708
        %v2710 = vand.u32 %v2709, 4294901760
        %2711 = vmatmul.mubr.f32.gmra.mrb[0].mxu0 %v2710
        %v2712 = vpop.f32.mrb[0].mxu0
        %v2713 = vadd.f32 %v2591, %v2712
        %v2714 = vpop.f32.mrb[0].mxu0
        %v2715 = vadd.f32 %v2591, %v2714
        %2716 = vmatprep.mubr.f32.mxu0 0.0
        %v2717 = vand.u32 %v2610, 4294901760
        %v2718 = vsub.f32 %v2610, %v2717
        %v2719 = vand.u32 %v2718, 4294901760
        %v2720 = vsub.f32 %v2718, %v2719
        %v2721 = vand.u32 %v2720, 4294901760
        %2722 = vmatmul.mubr.f32.gmra.mrb[0].mxu0 %v2721
        %v2723 = vpop.f32.mrb[0].mxu0
        %v2724 = vadd.f32 %v2596, %v2723
        %v2725 = vpop.f32.mrb[0].mxu0
        %v2726 = vadd.f32 %v2596, %v2725
        %2727 = vmatprep.mubr.f32.mxu0 0.0
        %v2728 = vand.u32 %v2613, 4294901760
        %v2729 = vsub.f32 %v2613, %v2728
        %v2730 = vand.u32 %v2729, 4294901760
        %v2731 = vsub.f32 %v2729, %v2730
        %v2732 = vand.u32 %v2731, 4294901760
        %2733 = vmatmul.mubr.f32.gmra.mrb[0].mxu0 %v2732
        %v2734 = vpop.f32.mrb[0].mxu0
        %v2735 = vadd.f32 %v2601, %v2734
        %v2736 = vpop.f32.mrb[0].mxu0
        %v2737 = vadd.f32 %v2601, %v2736
        %2738 = vdwg.mxu0
        %v2739 = vand.u32 %v2568, 4294901760
        %v2740 = vsub.f32 %v2568, %v2739
        %v2741 = vand.u32 %v2740, 4294901760
        %v2742 = vsub.f32 %v2740, %v2741
        %v2743 = vand.u32 %v2742, 4294901760
        %2744 = vmatprep.subr.mxu0 %v2743
        %v2745 = vand.u32 %v2567, 4294901760
        %v2746 = vsub.f32 %v2567, %v2745
        %v2747 = vand.u32 %v2746, 4294901760
        %v2748 = vsub.f32 %v2746, %v2747
        %v2749 = vand.u32 %v2748, 4294901760
        %2750 = vmatpush1.msra.mxu0 %v2749
        %v2751 = vand.u32 %v2570, 4294901760
        %v2752 = vsub.f32 %v2570, %v2751
        %v2753 = vand.u32 %v2752, 4294901760
        %v2754 = vsub.f32 %v2752, %v2753
        %v2755 = vand.u32 %v2754, 4294901760
        %2756 = vmatprep.subr.mxu0 %v2755
        %v2757 = vand.u32 %v2569, 4294901760
        %v2758 = vsub.f32 %v2569, %v2757
        %v2759 = vand.u32 %v2758, 4294901760
        %v2760 = vsub.f32 %v2758, %v2759
        %v2761 = vand.u32 %v2760, 4294901760
        %2762 = vmatpush1.msra.mxu0 %v2761
        %v2763 = vand.u32 %v2572, 4294901760
        %v2764 = vsub.f32 %v2572, %v2763
        %v2765 = vand.u32 %v2764, 4294901760
        %v2766 = vsub.f32 %v2764, %v2765
        %v2767 = vand.u32 %v2766, 4294901760
        %2768 = vmatprep.subr.mxu0 %v2767
        %v2769 = vand.u32 %v2571, 4294901760
        %v2770 = vsub.f32 %v2571, %v2769
        %v2771 = vand.u32 %v2770, 4294901760
        %v2772 = vsub.f32 %v2770, %v2771
        %v2773 = vand.u32 %v2772, 4294901760
        %2774 = vmatpush1.msra.mxu0 %v2773
        %v2775 = vand.u32 %v2620, 4294901760
        %v2776 = vsub.f32 %v2620, %v2775
        %v2777 = vand.u32 %v2776, 4294901760
        %v2778 = vsub.f32 %v2776, %v2777
        %v2779 = vand.u32 %v2778, 4294901760
        %2780 = vmatprep.subr.mxu0 %v2779
        %v2781 = vand.u32 %v2617, 4294901760
        %v2782 = vsub.f32 %v2617, %v2781
        %v2783 = vand.u32 %v2782, 4294901760
        %v2784 = vsub.f32 %v2782, %v2783
        %v2785 = vand.u32 %v2784, 4294901760
        %2786 = vmatpush1.msra.mxu0 %v2785
        %2787 = vmatprep.subr.mxu0 0.0
        %2788 = vmatpush1.msra.mxu0 0.0
        %2789 = vmatprep.subr.mxu0 0.0
        %2790 = vmatpush1.msra.mxu0 0.0
        %2791 = vmatprep.subr.mxu0 0.0
        %2792 = vmatpush1.msra.mxu0 0.0
        %2793 = vmatprep.subr.mxu0 0.0
        %2794 = vmatpush1.msra.mxu0 0.0
        %2795 = vmatprep.subr.mxu0 0.0
        %2796 = vmatpush1.msra.mxu0 0.0
        %2797 = vmatprep.subr.mxu0 0.0
        %2798 = vmatpush1.msra.mxu0 0.0
        %2799 = vmatprep.subr.mxu0 0.0
        %2800 = vmatpush1.msra.mxu0 0.0
        %2801 = vmatprep.subr.mxu0 0.0
        %2802 = vmatpush1.msra.mxu0 0.0
        %2803 = vmatprep.subr.mxu0 0.0
        %2804 = vmatpush1.msra.mxu0 0.0
        %2805 = vmatprep.subr.mxu0 0.0
        %2806 = vmatpush1.msra.mxu0 0.0
        %2807 = vmatprep.subr.mxu0 0.0
        %2808 = vmatpush1.msra.mxu0 0.0
        %2809 = vmatprep.subr.mxu0 0.0
        %2810 = vmatpush1.msra.mxu0 0.0
        %2811 = vmatprep.subr.mxu0 0.0
        %2812 = vmatpush1.msra.mxu0 0.0
        %2813 = vmatprep.subr.mxu0 0.0
        %2814 = vmatpush1.msra.mxu0 0.0
        %2815 = vmatprep.subr.mxu0 0.0
        %2816 = vmatpush1.msra.mxu0 0.0
        %2817 = vmatprep.subr.mxu0 0.0
        %2818 = vmatpush1.msra.mxu0 0.0
        %2819 = vmatprep.subr.mxu0 0.0
        %2820 = vmatpush1.msra.mxu0 0.0
        %2821 = vmatprep.subr.mxu0 0.0
        %2822 = vmatpush1.msra.mxu0 0.0
        %2823 = vmatprep.subr.mxu0 0.0
        %2824 = vmatpush1.msra.mxu0 0.0
        %2825 = vmatprep.subr.mxu0 0.0
        %2826 = vmatpush1.msra.mxu0 0.0
        %2827 = vmatprep.subr.mxu0 0.0
        %2828 = vmatpush1.msra.mxu0 0.0
        %2829 = vmatprep.subr.mxu0 0.0
        %2830 = vmatpush1.msra.mxu0 0.0
        %2831 = vmatprep.subr.mxu0 0.0
        %2832 = vmatpush1.msra.mxu0 0.0
        %2833 = vmatprep.subr.mxu0 0.0
        %2834 = vmatpush1.msra.mxu0 0.0
        %2835 = vmatprep.subr.mxu0 0.0
        %2836 = vmatpush1.msra.mxu0 0.0
        %2837 = vmatprep.subr.mxu0 0.0
        %2838 = vmatpush1.msra.mxu0 0.0
        %2839 = vmatprep.subr.mxu0 0.0
        %2840 = vmatpush1.msra.mxu0 0.0
        %2841 = vmatprep.subr.mxu0 0.0
        %2842 = vmatpush1.msra.mxu0 0.0
        %2843 = vmatprep.mubr.f32.mxu0 0.0
        %v2844 = vand.u32 %v2604, 4294901760
        %2845 = vmatmul.mubr.f32.gmra.mrb[0].mxu0 %v2844
        %v2846 = vpop.f32.mrb[0].mxu0
        %v2847 = vadd.f32 %v2702, %v2846
        %v2848 = vpop.f32.mrb[0].mxu0
        %v2849 = vadd.f32 %v2704, %v2848
        %2850 = vmatprep.mubr.f32.mxu0 0.0
        %v2851 = vand.u32 %v2607, 4294901760
        %2852 = vmatmul.mubr.f32.gmra.mrb[0].mxu0 %v2851
        %v2853 = vpop.f32.mrb[0].mxu0
        %v2854 = vadd.f32 %v2713, %v2853
        %v2855 = vpop.f32.mrb[0].mxu0
        %v2856 = vadd.f32 %v2715, %v2855
        %2857 = vmatprep.mubr.f32.mxu0 0.0
        %v2858 = vand.u32 %v2610, 4294901760
        %2859 = vmatmul.mubr.f32.gmra.mrb[0].mxu0 %v2858
        %v2860 = vpop.f32.mrb[0].mxu0
        %v2861 = vadd.f32 %v2724, %v2860
        %v2862 = vpop.f32.mrb[0].mxu0
        %v2863 = vadd.f32 %v2726, %v2862
        %2864 = vmatprep.mubr.f32.mxu0 0.0
        %v2865 = vand.u32 %v2613, 4294901760
        %2866 = vmatmul.mubr.f32.gmra.mrb[0].mxu0 %v2865
        %v2867 = vpop.f32.mrb[0].mxu0
        %v2868 = vadd.f32 %v2735, %v2867
        %v2869 = vpop.f32.mrb[0].mxu0
        %v2870 = vadd.f32 %v2737, %v2869
        %2871 = vdwg.mxu0
        %v2872 = vand.u32 %v2568, 4294901760
        %v2873 = vsub.f32 %v2568, %v2872
        %2874 = vmatprep.subr.mxu0 %v2873
        %v2875 = vand.u32 %v2567, 4294901760
        %v2876 = vsub.f32 %v2567, %v2875
        %2877 = vmatpush1.msra.mxu0 %v2876
        %v2878 = vand.u32 %v2570, 4294901760
        %v2879 = vsub.f32 %v2570, %v2878
        %2880 = vmatprep.subr.mxu0 %v2879
        %v2881 = vand.u32 %v2569, 4294901760
        %v2882 = vsub.f32 %v2569, %v2881
        %2883 = vmatpush1.msra.mxu0 %v2882
        %v2884 = vand.u32 %v2572, 4294901760
        %v2885 = vsub.f32 %v2572, %v2884
        %2886 = vmatprep.subr.mxu0 %v2885
        %v2887 = vand.u32 %v2571, 4294901760
        %v2888 = vsub.f32 %v2571, %v2887
        %2889 = vmatpush1.msra.mxu0 %v2888
        %v2890 = vand.u32 %v2620, 4294901760
        %v2891 = vsub.f32 %v2620, %v2890
        %2892 = vmatprep.subr.mxu0 %v2891
        %v2893 = vand.u32 %v2617, 4294901760
        %v2894 = vsub.f32 %v2617, %v2893
        %2895 = vmatpush1.msra.mxu0 %v2894
        %2896 = vmatprep.subr.mxu0 0.0
        %2897 = vmatpush1.msra.mxu0 0.0
        %2898 = vmatprep.subr.mxu0 0.0
        %2899 = vmatpush1.msra.mxu0 0.0
        %2900 = vmatprep.subr.mxu0 0.0
        %2901 = vmatpush1.msra.mxu0 0.0
        %2902 = vmatprep.subr.mxu0 0.0
        %2903 = vmatpush1.msra.mxu0 0.0
        %2904 = vmatprep.subr.mxu0 0.0
        %2905 = vmatpush1.msra.mxu0 0.0
        %2906 = vmatprep.subr.mxu0 0.0
        %2907 = vmatpush1.msra.mxu0 0.0
        %2908 = vmatprep.subr.mxu0 0.0
        %2909 = vmatpush1.msra.mxu0 0.0
        %2910 = vmatprep.subr.mxu0 0.0
        %2911 = vmatpush1.msra.mxu0 0.0
        %2912 = vmatprep.subr.mxu0 0.0
        %2913 = vmatpush1.msra.mxu0 0.0
        %2914 = vmatprep.subr.mxu0 0.0
        %2915 = vmatpush1.msra.mxu0 0.0
        %2916 = vmatprep.subr.mxu0 0.0
        %2917 = vmatpush1.msra.mxu0 0.0
        %2918 = vmatprep.subr.mxu0 0.0
        %2919 = vmatpush1.msra.mxu0 0.0
        %2920 = vmatprep.subr.mxu0 0.0
        %2921 = vmatpush1.msra.mxu0 0.0
        %2922 = vmatprep.subr.mxu0 0.0
        %2923 = vmatpush1.msra.mxu0 0.0
        %2924 = vmatprep.subr.mxu0 0.0
        %2925 = vmatpush1.msra.mxu0 0.0
        %2926 = vmatprep.subr.mxu0 0.0
        %2927 = vmatpush1.msra.mxu0 0.0
        %2928 = vmatprep.subr.mxu0 0.0
        %2929 = vmatpush1.msra.mxu0 0.0
        %2930 = vmatprep.subr.mxu0 0.0
        %2931 = vmatpush1.msra.mxu0 0.0
        %2932 = vmatprep.subr.mxu0 0.0
        %2933 = vmatpush1.msra.mxu0 0.0
        %2934 = vmatprep.subr.mxu0 0.0
        %2935 = vmatpush1.msra.mxu0 0.0
        %2936 = vmatprep.subr.mxu0 0.0
        %2937 = vmatpush1.msra.mxu0 0.0
        %2938 = vmatprep.subr.mxu0 0.0
        %2939 = vmatpush1.msra.mxu0 0.0
        %2940 = vmatprep.subr.mxu0 0.0
        %2941 = vmatpush1.msra.mxu0 0.0
        %2942 = vmatprep.subr.mxu0 0.0
        %2943 = vmatpush1.msra.mxu0 0.0
        %2944 = vmatprep.subr.mxu0 0.0
        %2945 = vmatpush1.msra.mxu0 0.0
        %2946 = vmatprep.subr.mxu0 0.0
        %2947 = vmatpush1.msra.mxu0 0.0
        %2948 = vmatprep.subr.mxu0 0.0
        %2949 = vmatpush1.msra.mxu0 0.0
        %2950 = vmatprep.subr.mxu0 0.0
        %2951 = vmatpush1.msra.mxu0 0.0
        %2952 = vmatprep.mubr.f32.mxu0 0.0
        %v2953 = vand.u32 %v2604, 4294901760
        %v2954 = vsub.f32 %v2604, %v2953
        %2955 = vmatmul.mubr.f32.gmra.mrb[0].mxu0 %v2954
        %v2956 = vpop.f32.mrb[0].mxu0
        %v2957 = vadd.f32 %v2847, %v2956
        %v2958 = vpop.f32.mrb[0].mxu0
        %v2959 = vadd.f32 %v2849, %v2958
        %2960 = vmatprep.mubr.f32.mxu0 0.0
        %v2961 = vand.u32 %v2607, 4294901760
        %v2962 = vsub.f32 %v2607, %v2961
        %2963 = vmatmul.mubr.f32.gmra.mrb[0].mxu0 %v2962
        %v2964 = vpop.f32.mrb[0].mxu0
        %v2965 = vadd.f32 %v2854, %v2964
        %v2966 = vpop.f32.mrb[0].mxu0
        %v2967 = vadd.f32 %v2856, %v2966
        %2968 = vmatprep.mubr.f32.mxu0 0.0
        %v2969 = vand.u32 %v2610, 4294901760
        %v2970 = vsub.f32 %v2610, %v2969
        %2971 = vmatmul.mubr.f32.gmra.mrb[0].mxu0 %v2970
        %v2972 = vpop.f32.mrb[0].mxu0
        %v2973 = vadd.f32 %v2861, %v2972
        %v2974 = vpop.f32.mrb[0].mxu0
        %v2975 = vadd.f32 %v2863, %v2974
        %2976 = vmatprep.mubr.f32.mxu0 0.0
        %v2977 = vand.u32 %v2613, 4294901760
        %v2978 = vsub.f32 %v2613, %v2977
        %2979 = vmatmul.mubr.f32.gmra.mrb[0].mxu0 %v2978
        %v2980 = vpop.f32.mrb[0].mxu0
        %v2981 = vadd.f32 %v2868, %v2980
        %v2982 = vpop.f32.mrb[0].mxu0
        %v2983 = vadd.f32 %v2870, %v2982
        %2984 = vdwg.mxu0
        %v2985 = vand.u32 %v2568, 4294901760
        %2986 = vmatprep.subr.mxu0 %v2985
        %v2987 = vand.u32 %v2567, 4294901760
        %2988 = vmatpush1.msra.mxu0 %v2987
        %v2989 = vand.u32 %v2570, 4294901760
        %2990 = vmatprep.subr.mxu0 %v2989
        %v2991 = vand.u32 %v2569, 4294901760
        %2992 = vmatpush1.msra.mxu0 %v2991
        %v2993 = vand.u32 %v2572, 4294901760
        %2994 = vmatprep.subr.mxu0 %v2993
        %v2995 = vand.u32 %v2571, 4294901760
        %2996 = vmatpush1.msra.mxu0 %v2995
        %v2997 = vand.u32 %v2620, 4294901760
        %2998 = vmatprep.subr.mxu0 %v2997
        %v2999 = vand.u32 %v2617, 4294901760
        %3000 = vmatpush1.msra.mxu0 %v2999
        %3001 = vmatprep.subr.mxu0 0.0
        %3002 = vmatpush1.msra.mxu0 0.0
        %3003 = vmatprep.subr.mxu0 0.0
        %3004 = vmatpush1.msra.mxu0 0.0
        %3005 = vmatprep.subr.mxu0 0.0
        %3006 = vmatpush1.msra.mxu0 0.0
        %3007 = vmatprep.subr.mxu0 0.0
        %3008 = vmatpush1.msra.mxu0 0.0
        %3009 = vmatprep.subr.mxu0 0.0
        %3010 = vmatpush1.msra.mxu0 0.0
        %3011 = vmatprep.subr.mxu0 0.0
        %3012 = vmatpush1.msra.mxu0 0.0
        %3013 = vmatprep.subr.mxu0 0.0
        %3014 = vmatpush1.msra.mxu0 0.0
        %3015 = vmatprep.subr.mxu0 0.0
        %3016 = vmatpush1.msra.mxu0 0.0
        %3017 = vmatprep.subr.mxu0 0.0
        %3018 = vmatpush1.msra.mxu0 0.0
        %3019 = vmatprep.subr.mxu0 0.0
        %3020 = vmatpush1.msra.mxu0 0.0
        %3021 = vmatprep.subr.mxu0 0.0
        %3022 = vmatpush1.msra.mxu0 0.0
        %3023 = vmatprep.subr.mxu0 0.0
        %3024 = vmatpush1.msra.mxu0 0.0
        %3025 = vmatprep.subr.mxu0 0.0
        %3026 = vmatpush1.msra.mxu0 0.0
        %3027 = vmatprep.subr.mxu0 0.0
        %3028 = vmatpush1.msra.mxu0 0.0
        %3029 = vmatprep.subr.mxu0 0.0
        %3030 = vmatpush1.msra.mxu0 0.0
        %3031 = vmatprep.subr.mxu0 0.0
        %3032 = vmatpush1.msra.mxu0 0.0
        %3033 = vmatprep.subr.mxu0 0.0
        %3034 = vmatpush1.msra.mxu0 0.0
        %3035 = vmatprep.subr.mxu0 0.0
        %3036 = vmatpush1.msra.mxu0 0.0
        %3037 = vmatprep.subr.mxu0 0.0
        %3038 = vmatpush1.msra.mxu0 0.0
        %3039 = vmatprep.subr.mxu0 0.0
        %3040 = vmatpush1.msra.mxu0 0.0
        %3041 = vmatprep.subr.mxu0 0.0
        %3042 = vmatpush1.msra.mxu0 0.0
        %3043 = vmatprep.subr.mxu0 0.0
        %3044 = vmatpush1.msra.mxu0 0.0
        %3045 = vmatprep.subr.mxu0 0.0
        %3046 = vmatpush1.msra.mxu0 0.0
        %3047 = vmatprep.subr.mxu0 0.0
        %3048 = vmatpush1.msra.mxu0 0.0
        %3049 = vmatprep.subr.mxu0 0.0
        %3050 = vmatpush1.msra.mxu0 0.0
        %3051 = vmatprep.subr.mxu0 0.0
        %3052 = vmatpush1.msra.mxu0 0.0
        %3053 = vmatprep.subr.mxu0 0.0
        %3054 = vmatpush1.msra.mxu0 0.0
        %3055 = vmatprep.subr.mxu0 0.0
        %3056 = vmatpush1.msra.mxu0 0.0
        %3057 = vmatprep.mubr.f32.mxu0 0.0
        %v3058 = vand.u32 %v2604, 4294901760
        %v3059 = vsub.f32 %v2604, %v3058
        %v3060 = vand.u32 %v3059, 4294901760
        %3061 = vmatmul.mubr.f32.gmra.mrb[0].mxu0 %v3060
        %v3062 = vpop.f32.mrb[0].mxu0
        %v3063 = vadd.f32 %v2957, %v3062
        %v3064 = vpop.f32.mrb[0].mxu0
        %v3065 = vadd.f32 %v2959, %v3064
        %3066 = vmatprep.mubr.f32.mxu0 0.0
        %v3067 = vand.u32 %v2607, 4294901760
        %v3068 = vsub.f32 %v2607, %v3067
        %v3069 = vand.u32 %v3068, 4294901760
        %3070 = vmatmul.mubr.f32.gmra.mrb[0].mxu0 %v3069
        %v3071 = vpop.f32.mrb[0].mxu0
        %v3072 = vadd.f32 %v2965, %v3071
        %v3073 = vpop.f32.mrb[0].mxu0
        %v3074 = vadd.f32 %v2967, %v3073
        %3075 = vmatprep.mubr.f32.mxu0 0.0
        %v3076 = vand.u32 %v2610, 4294901760
        %v3077 = vsub.f32 %v2610, %v3076
        %v3078 = vand.u32 %v3077, 4294901760
        %3079 = vmatmul.mubr.f32.gmra.mrb[0].mxu0 %v3078
        %v3080 = vpop.f32.mrb[0].mxu0
        %v3081 = vadd.f32 %v2973, %v3080
        %v3082 = vpop.f32.mrb[0].mxu0
        %v3083 = vadd.f32 %v2975, %v3082
        %3084 = vmatprep.mubr.f32.mxu0 0.0
        %v3085 = vand.u32 %v2613, 4294901760
        %v3086 = vsub.f32 %v2613, %v3085
        %v3087 = vand.u32 %v3086, 4294901760
        %3088 = vmatmul.mubr.f32.gmra.mrb[0].mxu0 %v3087
        %v3089 = vpop.f32.mrb[0].mxu0
        %v3090 = vadd.f32 %v2981, %v3089
        %v3091 = vpop.f32.mrb[0].mxu0
        %v3092 = vadd.f32 %v2983, %v3091
        %3093 = vdwg.mxu0
        %v3094 = vand.u32 %v2568, 4294901760
        %v3095 = vsub.f32 %v2568, %v3094
        %v3096 = vand.u32 %v3095, 4294901760
        %3097 = vmatprep.subr.mxu0 %v3096
        %v3098 = vand.u32 %v2567, 4294901760
        %v3099 = vsub.f32 %v2567, %v3098
        %v3100 = vand.u32 %v3099, 4294901760
        %3101 = vmatpush1.msra.mxu0 %v3100
        %v3102 = vand.u32 %v2570, 4294901760
        %v3103 = vsub.f32 %v2570, %v3102
        %v3104 = vand.u32 %v3103, 4294901760
        %3105 = vmatprep.subr.mxu0 %v3104
        %v3106 = vand.u32 %v2569, 4294901760
        %v3107 = vsub.f32 %v2569, %v3106
        %v3108 = vand.u32 %v3107, 4294901760
        %3109 = vmatpush1.msra.mxu0 %v3108
        %v3110 = vand.u32 %v2572, 4294901760
        %v3111 = vsub.f32 %v2572, %v3110
        %v3112 = vand.u32 %v3111, 4294901760
        %3113 = vmatprep.subr.mxu0 %v3112
        %v3114 = vand.u32 %v2571, 4294901760
        %v3115 = vsub.f32 %v2571, %v3114
        %v3116 = vand.u32 %v3115, 4294901760
        %3117 = vmatpush1.msra.mxu0 %v3116
        %v3118 = vand.u32 %v2620, 4294901760
        %v3119 = vsub.f32 %v2620, %v3118
        %v3120 = vand.u32 %v3119, 4294901760
        %3121 = vmatprep.subr.mxu0 %v3120
        %v3122 = vand.u32 %v2617, 4294901760
        %v3123 = vsub.f32 %v2617, %v3122
        %v3124 = vand.u32 %v3123, 4294901760
        %3125 = vmatpush1.msra.mxu0 %v3124
        %3126 = vmatprep.subr.mxu0 0.0
        %3127 = vmatpush1.msra.mxu0 0.0
        %3128 = vmatprep.subr.mxu0 0.0
        %3129 = vmatpush1.msra.mxu0 0.0
        %3130 = vmatprep.subr.mxu0 0.0
        %3131 = vmatpush1.msra.mxu0 0.0
        %3132 = vmatprep.subr.mxu0 0.0
        %3133 = vmatpush1.msra.mxu0 0.0
        %3134 = vmatprep.subr.mxu0 0.0
        %3135 = vmatpush1.msra.mxu0 0.0
        %3136 = vmatprep.subr.mxu0 0.0
        %3137 = vmatpush1.msra.mxu0 0.0
        %3138 = vmatprep.subr.mxu0 0.0
        %3139 = vmatpush1.msra.mxu0 0.0
        %3140 = vmatprep.subr.mxu0 0.0
        %3141 = vmatpush1.msra.mxu0 0.0
        %3142 = vmatprep.subr.mxu0 0.0
        %3143 = vmatpush1.msra.mxu0 0.0
        %3144 = vmatprep.subr.mxu0 0.0
        %3145 = vmatpush1.msra.mxu0 0.0
        %3146 = vmatprep.subr.mxu0 0.0
        %3147 = vmatpush1.msra.mxu0 0.0
        %3148 = vmatprep.subr.mxu0 0.0
        %3149 = vmatpush1.msra.mxu0 0.0
        %3150 = vmatprep.subr.mxu0 0.0
        %3151 = vmatpush1.msra.mxu0 0.0
        %3152 = vmatprep.subr.mxu0 0.0
        %3153 = vmatpush1.msra.mxu0 0.0
        %3154 = vmatprep.subr.mxu0 0.0
        %3155 = vmatpush1.msra.mxu0 0.0
        %3156 = vmatprep.subr.mxu0 0.0
        %3157 = vmatpush1.msra.mxu0 0.0
        %3158 = vmatprep.subr.mxu0 0.0
        %3159 = vmatpush1.msra.mxu0 0.0
        %3160 = vmatprep.subr.mxu0 0.0
        %3161 = vmatpush1.msra.mxu0 0.0
        %3162 = vmatprep.subr.mxu0 0.0
        %3163 = vmatpush1.msra.mxu0 0.0
        %3164 = vmatprep.subr.mxu0 0.0
        %3165 = vmatpush1.msra.mxu0 0.0
        %3166 = vmatprep.subr.mxu0 0.0
        %3167 = vmatpush1.msra.mxu0 0.0
        %3168 = vmatprep.subr.mxu0 0.0
        %3169 = vmatpush1.msra.mxu0 0.0
        %3170 = vmatprep.subr.mxu0 0.0
        %3171 = vmatpush1.msra.mxu0 0.0
        %3172 = vmatprep.subr.mxu0 0.0
        %3173 = vmatpush1.msra.mxu0 0.0
        %3174 = vmatprep.subr.mxu0 0.0
        %3175 = vmatpush1.msra.mxu0 0.0
        %3176 = vmatprep.subr.mxu0 0.0
        %3177 = vmatpush1.msra.mxu0 0.0
        %3178 = vmatprep.subr.mxu0 0.0
        %3179 = vmatpush1.msra.mxu0 0.0
        %3180 = vmatprep.subr.mxu0 0.0
        %3181 = vmatpush1.msra.mxu0 0.0
        %3182 = vmatprep.mubr.f32.mxu0 0.0
        %v3183 = vand.u32 %v2604, 4294901760
        %3184 = vmatmul.mubr.f32.gmra.mrb[0].mxu0 %v3183
        %v3185 = vpop.f32.mrb[0].mxu0
        %v3186 = vadd.f32 %v3063, %v3185
        %v3187 = vpop.f32.mrb[0].mxu0
        %v3188 = vadd.f32 %v3065, %v3187
        %3189 = vmatprep.mubr.f32.mxu0 0.0
        %v3190 = vand.u32 %v2607, 4294901760
        %3191 = vmatmul.mubr.f32.gmra.mrb[0].mxu0 %v3190
        %v3192 = vpop.f32.mrb[0].mxu0
        %v3193 = vadd.f32 %v3072, %v3192
        %v3194 = vpop.f32.mrb[0].mxu0
        %v3195 = vadd.f32 %v3074, %v3194
        %3196 = vmatprep.mubr.f32.mxu0 0.0
        %v3197 = vand.u32 %v2610, 4294901760
        %3198 = vmatmul.mubr.f32.gmra.mrb[0].mxu0 %v3197
        %v3199 = vpop.f32.mrb[0].mxu0
        %v3200 = vadd.f32 %v3081, %v3199
        %v3201 = vpop.f32.mrb[0].mxu0
        %v3202 = vadd.f32 %v3083, %v3201
        %3203 = vmatprep.mubr.f32.mxu0 0.0
        %v3204 = vand.u32 %v2613, 4294901760
        %3205 = vmatmul.mubr.f32.gmra.mrb[0].mxu0 %v3204
        %v3206 = vpop.f32.mrb[0].mxu0
        %v3207 = vadd.f32 %v3090, %v3206
        %v3208 = vpop.f32.mrb[0].mxu0
        %v3209 = vadd.f32 %v3092, %v3208
        %3210 = vdwg.mxu0
        %v3211 = vand.u32 %v2568, 4294901760
        %3212 = vmatprep.subr.mxu0 %v3211
        %v3213 = vand.u32 %v2567, 4294901760
        %3214 = vmatpush1.msra.mxu0 %v3213
        %v3215 = vand.u32 %v2570, 4294901760
        %3216 = vmatprep.subr.mxu0 %v3215
        %v3217 = vand.u32 %v2569, 4294901760
        %3218 = vmatpush1.msra.mxu0 %v3217
        %v3219 = vand.u32 %v2572, 4294901760
        %3220 = vmatprep.subr.mxu0 %v3219
        %v3221 = vand.u32 %v2571, 4294901760
        %3222 = vmatpush1.msra.mxu0 %v3221
        %v3223 = vand.u32 %v2620, 4294901760
        %3224 = vmatprep.subr.mxu0 %v3223
        %v3225 = vand.u32 %v2617, 4294901760
        %3226 = vmatpush1.msra.mxu0 %v3225
        %3227 = vmatprep.subr.mxu0 0.0
        %3228 = vmatpush1.msra.mxu0 0.0
        %3229 = vmatprep.subr.mxu0 0.0
        %3230 = vmatpush1.msra.mxu0 0.0
        %3231 = vmatprep.subr.mxu0 0.0
        %3232 = vmatpush1.msra.mxu0 0.0
        %3233 = vmatprep.subr.mxu0 0.0
        %3234 = vmatpush1.msra.mxu0 0.0
        %3235 = vmatprep.subr.mxu0 0.0
        %3236 = vmatpush1.msra.mxu0 0.0
        %3237 = vmatprep.subr.mxu0 0.0
        %3238 = vmatpush1.msra.mxu0 0.0
        %3239 = vmatprep.subr.mxu0 0.0
        %3240 = vmatpush1.msra.mxu0 0.0
        %3241 = vmatprep.subr.mxu0 0.0
        %3242 = vmatpush1.msra.mxu0 0.0
        %3243 = vmatprep.subr.mxu0 0.0
        %3244 = vmatpush1.msra.mxu0 0.0
        %3245 = vmatprep.subr.mxu0 0.0
        %3246 = vmatpush1.msra.mxu0 0.0
        %3247 = vmatprep.subr.mxu0 0.0
        %3248 = vmatpush1.msra.mxu0 0.0
        %3249 = vmatprep.subr.mxu0 0.0
        %3250 = vmatpush1.msra.mxu0 0.0
        %3251 = vmatprep.subr.mxu0 0.0
        %3252 = vmatpush1.msra.mxu0 0.0
        %3253 = vmatprep.subr.mxu0 0.0
        %3254 = vmatpush1.msra.mxu0 0.0
        %3255 = vmatprep.subr.mxu0 0.0
        %3256 = vmatpush1.msra.mxu0 0.0
        %3257 = vmatprep.subr.mxu0 0.0
        %3258 = vmatpush1.msra.mxu0 0.0
        %3259 = vmatprep.subr.mxu0 0.0
        %3260 = vmatpush1.msra.mxu0 0.0
        %3261 = vmatprep.subr.mxu0 0.0
        %3262 = vmatpush1.msra.mxu0 0.0
        %3263 = vmatprep.subr.mxu0 0.0
        %3264 = vmatpush1.msra.mxu0 0.0
        %3265 = vmatprep.subr.mxu0 0.0
        %3266 = vmatpush1.msra.mxu0 0.0
        %3267 = vmatprep.subr.mxu0 0.0
        %3268 = vmatpush1.msra.mxu0 0.0
        %3269 = vmatprep.subr.mxu0 0.0
        %3270 = vmatpush1.msra.mxu0 0.0
        %3271 = vmatprep.subr.mxu0 0.0
        %3272 = vmatpush1.msra.mxu0 0.0
        %3273 = vmatprep.subr.mxu0 0.0
        %3274 = vmatpush1.msra.mxu0 0.0
        %3275 = vmatprep.subr.mxu0 0.0
        %3276 = vmatpush1.msra.mxu0 0.0
        %3277 = vmatprep.subr.mxu0 0.0
        %3278 = vmatpush1.msra.mxu0 0.0
        %3279 = vmatprep.subr.mxu0 0.0
        %3280 = vmatpush1.msra.mxu0 0.0
        %3281 = vmatprep.subr.mxu0 0.0
        %3282 = vmatpush1.msra.mxu0 0.0
        %3283 = vmatprep.mubr.f32.mxu0 0.0
        %v3284 = vand.u32 %v2604, 4294901760
        %3285 = vmatmul.mubr.f32.gmra.mrb[0].mxu0 %v3284
        %v3286 = vpop.f32.mrb[0].mxu0
        %v3287 = vadd.f32 %v3186, %v3286
        %v3288 = vpop.f32.mrb[0].mxu0
        %v3289 = vadd.f32 %v3188, %v3288
        %3290 = vmatprep.mubr.f32.mxu0 0.0
        %v3291 = vand.u32 %v2607, 4294901760
        %3292 = vmatmul.mubr.f32.gmra.mrb[0].mxu0 %v3291
        %v3293 = vpop.f32.mrb[0].mxu0
        %v3294 = vadd.f32 %v3193, %v3293
        %v3295 = vpop.f32.mrb[0].mxu0
        %v3296 = vadd.f32 %v3195, %v3295
        %3297 = vmatprep.mubr.f32.mxu0 0.0
        %v3298 = vand.u32 %v2610, 4294901760
        %3299 = vmatmul.mubr.f32.gmra.mrb[0].mxu0 %v3298
        %v3300 = vpop.f32.mrb[0].mxu0
        %v3301 = vadd.f32 %v3200, %v3300
        %v3302 = vpop.f32.mrb[0].mxu0
        %v3303 = vadd.f32 %v3202, %v3302
        %3304 = vmatprep.mubr.f32.mxu0 0.0
        %v3305 = vand.u32 %v2613, 4294901760
        %3306 = vmatmul.mubr.f32.gmra.mrb[0].mxu0 %v3305
        %v3307 = vpop.f32.mrb[0].mxu0
        %v3308 = vadd.f32 %v3207, %v3307
        %v3309 = vpop.f32.mrb[0].mxu0
        %v3310 = vadd.f32 %v3209, %v3309
        %3311 = vdwg.mxu0
        %v3312 = vmax.f32 %v3287, 0.0
        %v3313 = vmax.f32 %v3289, 0.0
        %v3314 = vmax.f32 %v3294, 0.0
        %v3315 = vmax.f32 %v3296, 0.0
        %v3316 = vmax.f32 %v3301, 0.0
        %v3317 = vmax.f32 %v3303, 0.0
        %v3318 = vmax.f32 %v3308, 0.0
        %v3319 = vmax.f32 %v3310, 0.0
        %v3320 = vld [vmem:[%s7] sm:$0x3]
        %v3321 = vld [vmem:[%s8] sm:$0x3]
        %3323 = vset.pattern.permute.xlu0 0
        %3324 = vperm.xlu0 %3323, %v3321
        %v3325 = vpop.permute.xlu0 %3324
        %v3328 = vsel %vm414, %v3320, 0
        %v3331 = vsel %vm2615, %v3318, 0
        %v3334 = vsel %vm2615, %v3319, 0
        %v3336 = vand.u32 %v3313, 4294901760
        %3337 = vmatprep.subr.mxu0 %v3336
        %v3338 = vand.u32 %v3312, 4294901760
        %3339 = vmatpush1.msra.mxu0 %v3338
        %v3340 = vand.u32 %v3315, 4294901760
        %3341 = vmatprep.subr.mxu0 %v3340
        %v3342 = vand.u32 %v3314, 4294901760
        %3343 = vmatpush1.msra.mxu0 %v3342
        %v3344 = vand.u32 %v3317, 4294901760
        %3345 = vmatprep.subr.mxu0 %v3344
        %v3346 = vand.u32 %v3316, 4294901760
        %3347 = vmatpush1.msra.mxu0 %v3346
        %v3348 = vand.u32 %v3334, 4294901760
        %3349 = vmatprep.subr.mxu0 %v3348
        %v3350 = vand.u32 %v3331, 4294901760
        %3351 = vmatpush1.msra.mxu0 %v3350
        %3352 = vmatprep.subr.mxu0 0.0
        %3353 = vmatpush1.msra.mxu0 0.0
        %3354 = vmatprep.subr.mxu0 0.0
        %3355 = vmatpush1.msra.mxu0 0.0
        %3356 = vmatprep.subr.mxu0 0.0
        %3357 = vmatpush1.msra.mxu0 0.0
        %3358 = vmatprep.subr.mxu0 0.0
        %3359 = vmatpush1.msra.mxu0 0.0
        %3360 = vmatprep.subr.mxu0 0.0
        %3361 = vmatpush1.msra.mxu0 0.0
        %3362 = vmatprep.subr.mxu0 0.0
        %3363 = vmatpush1.msra.mxu0 0.0
        %3364 = vmatprep.subr.mxu0 0.0
        %3365 = vmatpush1.msra.mxu0 0.0
        %3366 = vmatprep.subr.mxu0 0.0
        %3367 = vmatpush1.msra.mxu0 0.0
        %3368 = vmatprep.subr.mxu0 0.0
        %3369 = vmatpush1.msra.mxu0 0.0
        %3370 = vmatprep.subr.mxu0 0.0
        %3371 = vmatpush1.msra.mxu0 0.0
        %3372 = vmatprep.subr.mxu0 0.0
        %3373 = vmatpush1.msra.mxu0 0.0
        %3374 = vmatprep.subr.mxu0 0.0
        %3375 = vmatpush1.msra.mxu0 0.0
        %3376 = vmatprep.subr.mxu0 0.0
        %3377 = vmatpush1.msra.mxu0 0.0
        %3378 = vmatprep.subr.mxu0 0.0
        %3379 = vmatpush1.msra.mxu0 0.0
        %3380 = vmatprep.subr.mxu0 0.0
        %3381 = vmatpush1.msra.mxu0 0.0
        %3382 = vmatprep.subr.mxu0 0.0
        %3383 = vmatpush1.msra.mxu0 0.0
        %3384 = vmatprep.subr.mxu0 0.0
        %3385 = vmatpush1.msra.mxu0 0.0
        %3386 = vmatprep.subr.mxu0 0.0
        %3387 = vmatpush1.msra.mxu0 0.0
        %3388 = vmatprep.subr.mxu0 0.0
        %3389 = vmatpush1.msra.mxu0 0.0
        %3390 = vmatprep.subr.mxu0 0.0
        %3391 = vmatpush1.msra.mxu0 0.0
        %3392 = vmatprep.subr.mxu0 0.0
        %3393 = vmatpush1.msra.mxu0 0.0
        %3394 = vmatprep.subr.mxu0 0.0
        %3395 = vmatpush1.msra.mxu0 0.0
        %3396 = vmatprep.subr.mxu0 0.0
        %3397 = vmatpush1.msra.mxu0 0.0
        %3398 = vmatprep.subr.mxu0 0.0
        %3399 = vmatpush1.msra.mxu0 0.0
        %3400 = vmatprep.subr.mxu0 0.0
        %3401 = vmatpush1.msra.mxu0 0.0
        %3402 = vmatprep.subr.mxu0 0.0
        %3403 = vmatpush1.msra.mxu0 0.0
        %3404 = vmatprep.subr.mxu0 0.0
        %3405 = vmatpush1.msra.mxu0 0.0
        %3406 = vmatprep.subr.mxu0 0.0
        %3407 = vmatpush1.msra.mxu0 0.0
        %3408 = vmatprep.mubr.f32.mxu0 0.0
        %v3409 = vand.u32 %v3328, 4294901760
        %v3410 = vsub.f32 %v3328, %v3409
        %v3411 = vand.u32 %v3410, 4294901760
        %v3412 = vsub.f32 %v3410, %v3411
        %v3413 = vand.u32 %v3412, 4294901760
        %3414 = vmatmul.mubr.f32.gmra.mrb[0].mxu0 %v3413
        %v3415 = vpop.f32.mrb[0].mxu0
        %v3416 = vadd.f32 %v3325, %v3415
        %v3417 = vpop.f32.mrb[0].mxu0
        %v3418 = vadd.f32 %v3325, %v3417
        %3419 = vdwg.mxu0
        %v3420 = vand.u32 %v3313, 4294901760
        %v3421 = vsub.f32 %v3313, %v3420
        %v3422 = vand.u32 %v3421, 4294901760
        %v3423 = vsub.f32 %v3421, %v3422
        %v3424 = vand.u32 %v3423, 4294901760
        %3425 = vmatprep.subr.mxu0 %v3424
        %v3426 = vand.u32 %v3312, 4294901760
        %v3427 = vsub.f32 %v3312, %v3426
        %v3428 = vand.u32 %v3427, 4294901760
        %v3429 = vsub.f32 %v3427, %v3428
        %v3430 = vand.u32 %v3429, 4294901760
        %3431 = vmatpush1.msra.mxu0 %v3430
        %v3432 = vand.u32 %v3315, 4294901760
        %v3433 = vsub.f32 %v3315, %v3432
        %v3434 = vand.u32 %v3433, 4294901760
        %v3435 = vsub.f32 %v3433, %v3434
        %v3436 = vand.u32 %v3435, 4294901760
        %3437 = vmatprep.subr.mxu0 %v3436
        %v3438 = vand.u32 %v3314, 4294901760
        %v3439 = vsub.f32 %v3314, %v3438
        %v3440 = vand.u32 %v3439, 4294901760
        %v3441 = vsub.f32 %v3439, %v3440
        %v3442 = vand.u32 %v3441, 4294901760
        %3443 = vmatpush1.msra.mxu0 %v3442
        %v3444 = vand.u32 %v3317, 4294901760
        %v3445 = vsub.f32 %v3317, %v3444
        %v3446 = vand.u32 %v3445, 4294901760
        %v3447 = vsub.f32 %v3445, %v3446
        %v3448 = vand.u32 %v3447, 4294901760
        %3449 = vmatprep.subr.mxu0 %v3448
        %v3450 = vand.u32 %v3316, 4294901760
        %v3451 = vsub.f32 %v3316, %v3450
        %v3452 = vand.u32 %v3451, 4294901760
        %v3453 = vsub.f32 %v3451, %v3452
        %v3454 = vand.u32 %v3453, 4294901760
        %3455 = vmatpush1.msra.mxu0 %v3454
        %v3456 = vand.u32 %v3334, 4294901760
        %v3457 = vsub.f32 %v3334, %v3456
        %v3458 = vand.u32 %v3457, 4294901760
        %v3459 = vsub.f32 %v3457, %v3458
        %v3460 = vand.u32 %v3459, 4294901760
        %3461 = vmatprep.subr.mxu0 %v3460
        %v3462 = vand.u32 %v3331, 4294901760
        %v3463 = vsub.f32 %v3331, %v3462
        %v3464 = vand.u32 %v3463, 4294901760
        %v3465 = vsub.f32 %v3463, %v3464
        %v3466 = vand.u32 %v3465, 4294901760
        %3467 = vmatpush1.msra.mxu0 %v3466
        %3468 = vmatprep.subr.mxu0 0.0
        %3469 = vmatpush1.msra.mxu0 0.0
        %3470 = vmatprep.subr.mxu0 0.0
        %3471 = vmatpush1.msra.mxu0 0.0
        %3472 = vmatprep.subr.mxu0 0.0
        %3473 = vmatpush1.msra.mxu0 0.0
        %3474 = vmatprep.subr.mxu0 0.0
        %3475 = vmatpush1.msra.mxu0 0.0
        %3476 = vmatprep.subr.mxu0 0.0
        %3477 = vmatpush1.msra.mxu0 0.0
        %3478 = vmatprep.subr.mxu0 0.0
        %3479 = vmatpush1.msra.mxu0 0.0
        %3480 = vmatprep.subr.mxu0 0.0
        %3481 = vmatpush1.msra.mxu0 0.0
        %3482 = vmatprep.subr.mxu0 0.0
        %3483 = vmatpush1.msra.mxu0 0.0
        %3484 = vmatprep.subr.mxu0 0.0
        %3485 = vmatpush1.msra.mxu0 0.0
        %3486 = vmatprep.subr.mxu0 0.0
        %3487 = vmatpush1.msra.mxu0 0.0
        %3488 = vmatprep.subr.mxu0 0.0
        %3489 = vmatpush1.msra.mxu0 0.0
        %3490 = vmatprep.subr.mxu0 0.0
        %3491 = vmatpush1.msra.mxu0 0.0
        %3492 = vmatprep.subr.mxu0 0.0
        %3493 = vmatpush1.msra.mxu0 0.0
        %3494 = vmatprep.subr.mxu0 0.0
        %3495 = vmatpush1.msra.mxu0 0.0
        %3496 = vmatprep.subr.mxu0 0.0
        %3497 = vmatpush1.msra.mxu0 0.0
        %3498 = vmatprep.subr.mxu0 0.0
        %3499 = vmatpush1.msra.mxu0 0.0
        %3500 = vmatprep.subr.mxu0 0.0
        %3501 = vmatpush1.msra.mxu0 0.0
        %3502 = vmatprep.subr.mxu0 0.0
        %3503 = vmatpush1.msra.mxu0 0.0
        %3504 = vmatprep.subr.mxu0 0.0
        %3505 = vmatpush1.msra.mxu0 0.0
        %3506 = vmatprep.subr.mxu0 0.0
        %3507 = vmatpush1.msra.mxu0 0.0
        %3508 = vmatprep.subr.mxu0 0.0
        %3509 = vmatpush1.msra.mxu0 0.0
        %3510 = vmatprep.subr.mxu0 0.0
        %3511 = vmatpush1.msra.mxu0 0.0
        %3512 = vmatprep.subr.mxu0 0.0
        %3513 = vmatpush1.msra.mxu0 0.0
        %3514 = vmatprep.subr.mxu0 0.0
        %3515 = vmatpush1.msra.mxu0 0.0
        %3516 = vmatprep.subr.mxu0 0.0
        %3517 = vmatpush1.msra.mxu0 0.0
        %3518 = vmatprep.subr.mxu0 0.0
        %3519 = vmatpush1.msra.mxu0 0.0
        %3520 = vmatprep.subr.mxu0 0.0
        %3521 = vmatpush1.msra.mxu0 0.0
        %3522 = vmatprep.subr.mxu0 0.0
        %3523 = vmatpush1.msra.mxu0 0.0
        %3524 = vmatprep.mubr.f32.mxu0 0.0
        %v3525 = vand.u32 %v3328, 4294901760
        %3526 = vmatmul.mubr.f32.gmra.mrb[0].mxu0 %v3525
        %v3527 = vpop.f32.mrb[0].mxu0
        %v3528 = vadd.f32 %v3416, %v3527
        %v3529 = vpop.f32.mrb[0].mxu0
        %v3530 = vadd.f32 %v3418, %v3529
        %3531 = vdwg.mxu0
        %v3532 = vand.u32 %v3313, 4294901760
        %v3533 = vsub.f32 %v3313, %v3532
        %3534 = vmatprep.subr.mxu0 %v3533
        %v3535 = vand.u32 %v3312, 4294901760
        %v3536 = vsub.f32 %v3312, %v3535
        %3537 = vmatpush1.msra.mxu0 %v3536
        %v3538 = vand.u32 %v3315, 4294901760
        %v3539 = vsub.f32 %v3315, %v3538
        %3540 = vmatprep.subr.mxu0 %v3539
        %v3541 = vand.u32 %v3314, 4294901760
        %v3542 = vsub.f32 %v3314, %v3541
        %3543 = vmatpush1.msra.mxu0 %v3542
        %v3544 = vand.u32 %v3317, 4294901760
        %v3545 = vsub.f32 %v3317, %v3544
        %3546 = vmatprep.subr.mxu0 %v3545
        %v3547 = vand.u32 %v3316, 4294901760
        %v3548 = vsub.f32 %v3316, %v3547
        %3549 = vmatpush1.msra.mxu0 %v3548
        %v3550 = vand.u32 %v3334, 4294901760
        %v3551 = vsub.f32 %v3334, %v3550
        %3552 = vmatprep.subr.mxu0 %v3551
        %v3553 = vand.u32 %v3331, 4294901760
        %v3554 = vsub.f32 %v3331, %v3553
        %3555 = vmatpush1.msra.mxu0 %v3554
        %3556 = vmatprep.subr.mxu0 0.0
        %3557 = vmatpush1.msra.mxu0 0.0
        %3558 = vmatprep.subr.mxu0 0.0
        %3559 = vmatpush1.msra.mxu0 0.0
        %3560 = vmatprep.subr.mxu0 0.0
        %3561 = vmatpush1.msra.mxu0 0.0
        %3562 = vmatprep.subr.mxu0 0.0
        %3563 = vmatpush1.msra.mxu0 0.0
        %3564 = vmatprep.subr.mxu0 0.0
        %3565 = vmatpush1.msra.mxu0 0.0
        %3566 = vmatprep.subr.mxu0 0.0
        %3567 = vmatpush1.msra.mxu0 0.0
        %3568 = vmatprep.subr.mxu0 0.0
        %3569 = vmatpush1.msra.mxu0 0.0
        %3570 = vmatprep.subr.mxu0 0.0
        %3571 = vmatpush1.msra.mxu0 0.0
        %3572 = vmatprep.subr.mxu0 0.0
        %3573 = vmatpush1.msra.mxu0 0.0
        %3574 = vmatprep.subr.mxu0 0.0
        %3575 = vmatpush1.msra.mxu0 0.0
        %3576 = vmatprep.subr.mxu0 0.0
        %3577 = vmatpush1.msra.mxu0 0.0
        %3578 = vmatprep.subr.mxu0 0.0
        %3579 = vmatpush1.msra.mxu0 0.0
        %3580 = vmatprep.subr.mxu0 0.0
        %3581 = vmatpush1.msra.mxu0 0.0
        %3582 = vmatprep.subr.mxu0 0.0
        %3583 = vmatpush1.msra.mxu0 0.0
        %3584 = vmatprep.subr.mxu0 0.0
        %3585 = vmatpush1.msra.mxu0 0.0
        %3586 = vmatprep.subr.mxu0 0.0
        %3587 = vmatpush1.msra.mxu0 0.0
        %3588 = vmatprep.subr.mxu0 0.0
        %3589 = vmatpush1.msra.mxu0 0.0
        %3590 = vmatprep.subr.mxu0 0.0
        %3591 = vmatpush1.msra.mxu0 0.0
        %3592 = vmatprep.subr.mxu0 0.0
        %3593 = vmatpush1.msra.mxu0 0.0
        %3594 = vmatprep.subr.mxu0 0.0
        %3595 = vmatpush1.msra.mxu0 0.0
        %3596 = vmatprep.subr.mxu0 0.0
        %3597 = vmatpush1.msra.mxu0 0.0
        %3598 = vmatprep.subr.mxu0 0.0
        %3599 = vmatpush1.msra.mxu0 0.0
        %3600 = vmatprep.subr.mxu0 0.0
        %3601 = vmatpush1.msra.mxu0 0.0
        %3602 = vmatprep.subr.mxu0 0.0
        %3603 = vmatpush1.msra.mxu0 0.0
        %3604 = vmatprep.subr.mxu0 0.0
        %3605 = vmatpush1.msra.mxu0 0.0
        %3606 = vmatprep.subr.mxu0 0.0
        %3607 = vmatpush1.msra.mxu0 0.0
        %3608 = vmatprep.subr.mxu0 0.0
        %3609 = vmatpush1.msra.mxu0 0.0
        %3610 = vmatprep.subr.mxu0 0.0
        %3611 = vmatpush1.msra.mxu0 0.0
        %3612 = vmatprep.mubr.f32.mxu0 0.0
        %v3613 = vand.u32 %v3328, 4294901760
        %v3614 = vsub.f32 %v3328, %v3613
        %3615 = vmatmul.mubr.f32.gmra.mrb[0].mxu0 %v3614
        %v3616 = vpop.f32.mrb[0].mxu0
        %v3617 = vadd.f32 %v3528, %v3616
        %v3618 = vpop.f32.mrb[0].mxu0
        %v3619 = vadd.f32 %v3530, %v3618
        %3620 = vdwg.mxu0
        %v3621 = vand.u32 %v3313, 4294901760
        %3622 = vmatprep.subr.mxu0 %v3621
        %v3623 = vand.u32 %v3312, 4294901760
        %3624 = vmatpush1.msra.mxu0 %v3623
        %v3625 = vand.u32 %v3315, 4294901760
        %3626 = vmatprep.subr.mxu0 %v3625
        %v3627 = vand.u32 %v3314, 4294901760
        %3628 = vmatpush1.msra.mxu0 %v3627
        %v3629 = vand.u32 %v3317, 4294901760
        %3630 = vmatprep.subr.mxu0 %v3629
        %v3631 = vand.u32 %v3316, 4294901760
        %3632 = vmatpush1.msra.mxu0 %v3631
        %v3633 = vand.u32 %v3334, 4294901760
        %3634 = vmatprep.subr.mxu0 %v3633
        %v3635 = vand.u32 %v3331, 4294901760
        %3636 = vmatpush1.msra.mxu0 %v3635
        %3637 = vmatprep.subr.mxu0 0.0
        %3638 = vmatpush1.msra.mxu0 0.0
        %3639 = vmatprep.subr.mxu0 0.0
        %3640 = vmatpush1.msra.mxu0 0.0
        %3641 = vmatprep.subr.mxu0 0.0
        %3642 = vmatpush1.msra.mxu0 0.0
        %3643 = vmatprep.subr.mxu0 0.0
        %3644 = vmatpush1.msra.mxu0 0.0
        %3645 = vmatprep.subr.mxu0 0.0
        %3646 = vmatpush1.msra.mxu0 0.0
        %3647 = vmatprep.subr.mxu0 0.0
        %3648 = vmatpush1.msra.mxu0 0.0
        %3649 = vmatprep.subr.mxu0 0.0
        %3650 = vmatpush1.msra.mxu0 0.0
        %3651 = vmatprep.subr.mxu0 0.0
        %3652 = vmatpush1.msra.mxu0 0.0
        %3653 = vmatprep.subr.mxu0 0.0
        %3654 = vmatpush1.msra.mxu0 0.0
        %3655 = vmatprep.subr.mxu0 0.0
        %3656 = vmatpush1.msra.mxu0 0.0
        %3657 = vmatprep.subr.mxu0 0.0
        %3658 = vmatpush1.msra.mxu0 0.0
        %3659 = vmatprep.subr.mxu0 0.0
        %3660 = vmatpush1.msra.mxu0 0.0
        %3661 = vmatprep.subr.mxu0 0.0
        %3662 = vmatpush1.msra.mxu0 0.0
        %3663 = vmatprep.subr.mxu0 0.0
        %3664 = vmatpush1.msra.mxu0 0.0
        %3665 = vmatprep.subr.mxu0 0.0
        %3666 = vmatpush1.msra.mxu0 0.0
        %3667 = vmatprep.subr.mxu0 0.0
        %3668 = vmatpush1.msra.mxu0 0.0
        %3669 = vmatprep.subr.mxu0 0.0
        %3670 = vmatpush1.msra.mxu0 0.0
        %3671 = vmatprep.subr.mxu0 0.0
        %3672 = vmatpush1.msra.mxu0 0.0
        %3673 = vmatprep.subr.mxu0 0.0
        %3674 = vmatpush1.msra.mxu0 0.0
        %3675 = vmatprep.subr.mxu0 0.0
        %3676 = vmatpush1.msra.mxu0 0.0
        %3677 = vmatprep.subr.mxu0 0.0
        %3678 = vmatpush1.msra.mxu0 0.0
        %3679 = vmatprep.subr.mxu0 0.0
        %3680 = vmatpush1.msra.mxu0 0.0
        %3681 = vmatprep.subr.mxu0 0.0
        %3682 = vmatpush1.msra.mxu0 0.0
        %3683 = vmatprep.subr.mxu0 0.0
        %3684 = vmatpush1.msra.mxu0 0.0
        %3685 = vmatprep.subr.mxu0 0.0
        %3686 = vmatpush1.msra.mxu0 0.0
        %3687 = vmatprep.subr.mxu0 0.0
        %3688 = vmatpush1.msra.mxu0 0.0
        %3689 = vmatprep.subr.mxu0 0.0
        %3690 = vmatpush1.msra.mxu0 0.0
        %3691 = vmatprep.subr.mxu0 0.0
        %3692 = vmatpush1.msra.mxu0 0.0
        %3693 = vmatprep.mubr.f32.mxu0 0.0
        %v3694 = vand.u32 %v3328, 4294901760
        %v3695 = vsub.f32 %v3328, %v3694
        %v3696 = vand.u32 %v3695, 4294901760
        %3697 = vmatmul.mubr.f32.gmra.mrb[0].mxu0 %v3696
        %v3698 = vpop.f32.mrb[0].mxu0
        %v3699 = vadd.f32 %v3617, %v3698
        %v3700 = vpop.f32.mrb[0].mxu0
        %v3701 = vadd.f32 %v3619, %v3700
        %3702 = vdwg.mxu0
        %v3703 = vand.u32 %v3313, 4294901760
        %v3704 = vsub.f32 %v3313, %v3703
        %v3705 = vand.u32 %v3704, 4294901760
        %3706 = vmatprep.subr.mxu0 %v3705
        %v3707 = vand.u32 %v3312, 4294901760
        %v3708 = vsub.f32 %v3312, %v3707
        %v3709 = vand.u32 %v3708, 4294901760
        %3710 = vmatpush1.msra.mxu0 %v3709
        %v3711 = vand.u32 %v3315, 4294901760
        %v3712 = vsub.f32 %v3315, %v3711
        %v3713 = vand.u32 %v3712, 4294901760
        %3714 = vmatprep.subr.mxu0 %v3713
        %v3715 = vand.u32 %v3314, 4294901760
        %v3716 = vsub.f32 %v3314, %v3715
        %v3717 = vand.u32 %v3716, 4294901760
        %3718 = vmatpush1.msra.mxu0 %v3717
        %v3719 = vand.u32 %v3317, 4294901760
        %v3720 = vsub.f32 %v3317, %v3719
        %v3721 = vand.u32 %v3720, 4294901760
        %3722 = vmatprep.subr.mxu0 %v3721
        %v3723 = vand.u32 %v3316, 4294901760
        %v3724 = vsub.f32 %v3316, %v3723
        %v3725 = vand.u32 %v3724, 4294901760
        %3726 = vmatpush1.msra.mxu0 %v3725
        %v3727 = vand.u32 %v3334, 4294901760
        %v3728 = vsub.f32 %v3334, %v3727
        %v3729 = vand.u32 %v3728, 4294901760
        %3730 = vmatprep.subr.mxu0 %v3729
        %v3731 = vand.u32 %v3331, 4294901760
        %v3732 = vsub.f32 %v3331, %v3731
        %v3733 = vand.u32 %v3732, 4294901760
        %3734 = vmatpush1.msra.mxu0 %v3733
        %3735 = vmatprep.subr.mxu0 0.0
        %3736 = vmatpush1.msra.mxu0 0.0
        %3737 = vmatprep.subr.mxu0 0.0
        %3738 = vmatpush1.msra.mxu0 0.0
        %3739 = vmatprep.subr.mxu0 0.0
        %3740 = vmatpush1.msra.mxu0 0.0
        %3741 = vmatprep.subr.mxu0 0.0
        %3742 = vmatpush1.msra.mxu0 0.0
        %3743 = vmatprep.subr.mxu0 0.0
        %3744 = vmatpush1.msra.mxu0 0.0
        %3745 = vmatprep.subr.mxu0 0.0
        %3746 = vmatpush1.msra.mxu0 0.0
        %3747 = vmatprep.subr.mxu0 0.0
        %3748 = vmatpush1.msra.mxu0 0.0
        %3749 = vmatprep.subr.mxu0 0.0
        %3750 = vmatpush1.msra.mxu0 0.0
        %3751 = vmatprep.subr.mxu0 0.0
        %3752 = vmatpush1.msra.mxu0 0.0
        %3753 = vmatprep.subr.mxu0 0.0
        %3754 = vmatpush1.msra.mxu0 0.0
        %3755 = vmatprep.subr.mxu0 0.0
        %3756 = vmatpush1.msra.mxu0 0.0
        %3757 = vmatprep.subr.mxu0 0.0
        %3758 = vmatpush1.msra.mxu0 0.0
        %3759 = vmatprep.subr.mxu0 0.0
        %3760 = vmatpush1.msra.mxu0 0.0
        %3761 = vmatprep.subr.mxu0 0.0
        %3762 = vmatpush1.msra.mxu0 0.0
        %3763 = vmatprep.subr.mxu0 0.0
        %3764 = vmatpush1.msra.mxu0 0.0
        %3765 = vmatprep.subr.mxu0 0.0
        %3766 = vmatpush1.msra.mxu0 0.0
        %3767 = vmatprep.subr.mxu0 0.0
        %3768 = vmatpush1.msra.mxu0 0.0
        %3769 = vmatprep.subr.mxu0 0.0
        %3770 = vmatpush1.msra.mxu0 0.0
        %3771 = vmatprep.subr.mxu0 0.0
        %3772 = vmatpush1.msra.mxu0 0.0
        %3773 = vmatprep.subr.mxu0 0.0
        %3774 = vmatpush1.msra.mxu0 0.0
        %3775 = vmatprep.subr.mxu0 0.0
        %3776 = vmatpush1.msra.mxu0 0.0
        %3777 = vmatprep.subr.mxu0 0.0
        %3778 = vmatpush1.msra.mxu0 0.0
        %3779 = vmatprep.subr.mxu0 0.0
        %3780 = vmatpush1.msra.mxu0 0.0
        %3781 = vmatprep.subr.mxu0 0.0
        %3782 = vmatpush1.msra.mxu0 0.0
        %3783 = vmatprep.subr.mxu0 0.0
        %3784 = vmatpush1.msra.mxu0 0.0
        %3785 = vmatprep.subr.mxu0 0.0
        %3786 = vmatpush1.msra.mxu0 0.0
        %3787 = vmatprep.subr.mxu0 0.0
        %3788 = vmatpush1.msra.mxu0 0.0
        %3789 = vmatprep.subr.mxu0 0.0
        %3790 = vmatpush1.msra.mxu0 0.0
        %3791 = vmatprep.mubr.f32.mxu0 0.0
        %v3792 = vand.u32 %v3328, 4294901760
        %3793 = vmatmul.mubr.f32.gmra.mrb[0].mxu0 %v3792
        %v3794 = vpop.f32.mrb[0].mxu0
        %v3795 = vadd.f32 %v3699, %v3794
        %v3796 = vpop.f32.mrb[0].mxu0
        %v3797 = vadd.f32 %v3701, %v3796
        %3798 = vdwg.mxu0
        %v3799 = vand.u32 %v3313, 4294901760
        %3800 = vmatprep.subr.mxu0 %v3799
        %v3801 = vand.u32 %v3312, 4294901760
        %3802 = vmatpush1.msra.mxu0 %v3801
        %v3803 = vand.u32 %v3315, 4294901760
        %3804 = vmatprep.subr.mxu0 %v3803
        %v3805 = vand.u32 %v3314, 4294901760
        %3806 = vmatpush1.msra.mxu0 %v3805
        %v3807 = vand.u32 %v3317, 4294901760
        %3808 = vmatprep.subr.mxu0 %v3807
        %v3809 = vand.u32 %v3316, 4294901760
        %3810 = vmatpush1.msra.mxu0 %v3809
        %v3811 = vand.u32 %v3334, 4294901760
        %3812 = vmatprep.subr.mxu0 %v3811
        %v3813 = vand.u32 %v3331, 4294901760
        %3814 = vmatpush1.msra.mxu0 %v3813
        %3815 = vmatprep.subr.mxu0 0.0
        %3816 = vmatpush1.msra.mxu0 0.0
        %3817 = vmatprep.subr.mxu0 0.0
        %3818 = vmatpush1.msra.mxu0 0.0
        %3819 = vmatprep.subr.mxu0 0.0
        %3820 = vmatpush1.msra.mxu0 0.0
        %3821 = vmatprep.subr.mxu0 0.0
        %3822 = vmatpush1.msra.mxu0 0.0
        %3823 = vmatprep.subr.mxu0 0.0
        %3824 = vmatpush1.msra.mxu0 0.0
        %3825 = vmatprep.subr.mxu0 0.0
        %3826 = vmatpush1.msra.mxu0 0.0
        %3827 = vmatprep.subr.mxu0 0.0
        %3828 = vmatpush1.msra.mxu0 0.0
        %3829 = vmatprep.subr.mxu0 0.0
        %3830 = vmatpush1.msra.mxu0 0.0
        %3831 = vmatprep.subr.mxu0 0.0
        %3832 = vmatpush1.msra.mxu0 0.0
        %3833 = vmatprep.subr.mxu0 0.0
        %3834 = vmatpush1.msra.mxu0 0.0
        %3835 = vmatprep.subr.mxu0 0.0
        %3836 = vmatpush1.msra.mxu0 0.0
        %3837 = vmatprep.subr.mxu0 0.0
        %3838 = vmatpush1.msra.mxu0 0.0
        %3839 = vmatprep.subr.mxu0 0.0
        %3840 = vmatpush1.msra.mxu0 0.0
        %3841 = vmatprep.subr.mxu0 0.0
        %3842 = vmatpush1.msra.mxu0 0.0
        %3843 = vmatprep.subr.mxu0 0.0
        %3844 = vmatpush1.msra.mxu0 0.0
        %3845 = vmatprep.subr.mxu0 0.0
        %3846 = vmatpush1.msra.mxu0 0.0
        %3847 = vmatprep.subr.mxu0 0.0
        %3848 = vmatpush1.msra.mxu0 0.0
        %3849 = vmatprep.subr.mxu0 0.0
        %3850 = vmatpush1.msra.mxu0 0.0
        %3851 = vmatprep.subr.mxu0 0.0
        %3852 = vmatpush1.msra.mxu0 0.0
        %3853 = vmatprep.subr.mxu0 0.0
        %3854 = vmatpush1.msra.mxu0 0.0
        %3855 = vmatprep.subr.mxu0 0.0
        %3856 = vmatpush1.msra.mxu0 0.0
        %3857 = vmatprep.subr.mxu0 0.0
        %3858 = vmatpush1.msra.mxu0 0.0
        %3859 = vmatprep.subr.mxu0 0.0
        %3860 = vmatpush1.msra.mxu0 0.0
        %3861 = vmatprep.subr.mxu0 0.0
        %3862 = vmatpush1.msra.mxu0 0.0
        %3863 = vmatprep.subr.mxu0 0.0
        %3864 = vmatpush1.msra.mxu0 0.0
        %3865 = vmatprep.subr.mxu0 0.0
        %3866 = vmatpush1.msra.mxu0 0.0
        %3867 = vmatprep.subr.mxu0 0.0
        %3868 = vmatpush1.msra.mxu0 0.0
        %3869 = vmatprep.subr.mxu0 0.0
        %3870 = vmatpush1.msra.mxu0 0.0
        %3871 = vmatprep.mubr.f32.mxu0 0.0
        %v3872 = vand.u32 %v3328, 4294901760
        %3873 = vmatmul.mubr.f32.gmra.mrb[0].mxu0 %v3872
        %v3874 = vpop.f32.mrb[0].mxu0
        %v3875 = vadd.f32 %v3795, %v3874
        %v3876 = vpop.f32.mrb[0].mxu0
        %v3877 = vadd.f32 %v3797, %v3876
        %3878 = vdwg.mxu0
        %3879 = vst [vmem:[%s334] sm:$0xff] %v1500
        %3880 = vst [vmem:[%s334 + $0x8] sm:$0xff] %v1502
        %3881 = vst [vmem:[%s334 + $0x10] sm:$0xff] %v1507
        %3882 = vst [vmem:[%s334 + $0x18] sm:$0xff] %v1509
        %3883 = vst [vmem:[%s334 + $0x20] sm:$0xff] %v1514
        %3884 = vst [vmem:[%s334 + $0x28] sm:$0xff] %v1516
        %3885 = vst [vmem:[%s334 + $0x30] sm:$0x3f] %v1521
        %3886 = vst [vmem:[%s334 + $0x38] sm:$0x3f] %v1523
        %v3889 = vrot.slane %v3875, 2
        %v3890 = vrot.slane %v3877, 2
        %3893 = vst [vmem:[%s334 + $0x30] sm:$0xc0] %v3889
        %3894 = vst [vmem:[%s334 + $0x38] sm:$0xc0] %v3890
        %s3895 = sand.u32 %s222, 1
        %s3896 = sand.u32 %s222, 1
        %s3897 = smul.addr %s3896, 64
        %s3898 = scalar_lea.vmem [#allocation2], %s3897
        // Predicated region
        $region57: #{_forward_jit.1} parent=55 // pred_check
          %p3899 = pneg %p232
        $region58: #{_forward_jit.1} parent=55 // pred_check_branch
          %3901 = sbr.rel (%p3899) target = $region60
        $region59: #{_forward_jit.1} parent=55 // pred_region
          %s3902 = smul.u32 2, %s20
          %s3903 = ssub.s32 3, %s3902
          %p3904 = scmp.lt.s32.totalorder %s3903, 2
          %s3905 = scalar_select %p3904, %s3903, 2
          %s3906 = smul.u32 512, %s3905
          %p3907 = scmp.ne.s32.totalorder 0, %s3906
          %s3908 = smul.addr %s3902, 8
          %s3909 = scalar_lea.vmem %s9, %s3908
          %s3910 = smul.u32 %s3905, 8
          // Predicated region
          $region61: #{_forward_jit.1} parent=59 // pred_check
            %p3911 = pneg %p3907
          $region62: #{_forward_jit.1} parent=59 // pred_check_branch
            %3913 = sbr.rel (%p3911) target = $region64
          $region63: #{_forward_jit.1} parent=59 // pred_region
            %p3914 = scmp.lt.u32.totalorder %s3910, 8
            %p3915 = pneg %p3914
            // Predicated region
            $region65: #{_forward_jit.1} parent=63 // pred_check
              _
            $region66: #{_forward_jit.1} parent=63 // pred_check_branch
              %3917 = sbr.rel (%p3914) target = $region68
            $region67: #{_forward_jit.1} parent=63 // pred_region
              %s3938 = sand.u32 %s3910, 7
              %p3939 = scmp.eq.s32.totalorder %s3938, 0
              // Predicated region
              $region80: #{_forward_jit.1} parent=67 // pred_check
                %p3940 = pneg %p3939
              $region81: #{_forward_jit.1} parent=67 // pred_check_branch
                %3942 = sbr.rel (%p3940) target = $region83
              $region82: #{_forward_jit.1} parent=67 // pred_region
                %s3943 = sshrl.u32 %s3910, 3
                %s3944 = sshrl.u32 %s3943, 4
                // While loop
                $region84: #{_forward_jit.1} parent=82 // loop_pre_header
                  _
                $region85: #{_forward_jit.1} parent=82 // loop_header
                  %s3948 = sphi 0, %s3950
                  %p3949 = scmp.ge.s32.totalorder %s3948, %s3944
                  %s3953 = sphi 0, %s4086
                  %s3954 = sphi %s3898, %s4089
                  %s3955 = sphi %s3909, %s4090
                $region86: #{_forward_jit.1} parent=82 // loop_header_branch
                  %3952 = sbr.rel (%p3949) target = $region90
                $region87: #{_forward_jit.1} parent=82 // loop_body
                  %v3956 = vld [vmem:[%s3954] sm:$0xff]
                  %3957 = vst [vmem:[%s3955] sm:$0xff] %v3956
                  %v3958 = vld [vmem:[%s3954 + $0x8] sm:$0xff]
                  %3959 = vst [vmem:[%s3955 + $0x8] sm:$0xff] %v3958
                  %v3960 = vld [vmem:[%s3954 + $0x10] sm:$0xff]
                  %3961 = vst [vmem:[%s3955 + $0x10] sm:$0xff] %v3960
                  %v3962 = vld [vmem:[%s3954 + $0x18] sm:$0xff]
                  %3963 = vst [vmem:[%s3955 + $0x18] sm:$0xff] %v3962
                  %v3964 = vld [vmem:[%s3954 + $0x20] sm:$0xff]
                  %3965 = vst [vmem:[%s3955 + $0x20] sm:$0xff] %v3964
                  %v3966 = vld [vmem:[%s3954 + $0x28] sm:$0xff]
                  %3967 = vst [vmem:[%s3955 + $0x28] sm:$0xff] %v3966
                  %v3968 = vld [vmem:[%s3954 + $0x30] sm:$0xff]
                  %3969 = vst [vmem:[%s3955 + $0x30] sm:$0xff] %v3968
                  %v3970 = vld [vmem:[%s3954 + $0x38] sm:$0xff]
                  %3971 = vst [vmem:[%s3955 + $0x38] sm:$0xff] %v3970
                  %v3972 = vld [vmem:[%s3954 + $0x40] sm:$0xff]
                  %3973 = vst [vmem:[%s3955 + $0x40] sm:$0xff] %v3972
                  %v3974 = vld [vmem:[%s3954 + $0x48] sm:$0xff]
                  %3975 = vst [vmem:[%s3955 + $0x48] sm:$0xff] %v3974
                  %v3976 = vld [vmem:[%s3954 + $0x50] sm:$0xff]
                  %3977 = vst [vmem:[%s3955 + $0x50] sm:$0xff] %v3976
                  %v3978 = vld [vmem:[%s3954 + $0x58] sm:$0xff]
                  %3979 = vst [vmem:[%s3955 + $0x58] sm:$0xff] %v3978
                  %v3980 = vld [vmem:[%s3954 + $0x60] sm:$0xff]
                  %3981 = vst [vmem:[%s3955 + $0x60] sm:$0xff] %v3980
                  %v3982 = vld [vmem:[%s3954 + $0x68] sm:$0xff]
                  %3983 = vst [vmem:[%s3955 + $0x68] sm:$0xff] %v3982
                  %v3984 = vld [vmem:[%s3954 + $0x70] sm:$0xff]
                  %3985 = vst [vmem:[%s3955 + $0x70] sm:$0xff] %v3984
                  %v3986 = vld [vmem:[%s3954 + $0x78] sm:$0xff]
                  %3987 = vst [vmem:[%s3955 + $0x78] sm:$0xff] %v3986
                  %v3988 = vld [vmem:[%s3954 + $0x10] sm:$0xff]
                  %3989 = vst [vmem:[%s3955 + $0x18] sm:$0xff] %v3988
                  %v3990 = vld [vmem:[%s3954 + $0x18] sm:$0xff]
                  %3991 = vst [vmem:[%s3955 + $0x20] sm:$0xff] %v3990
                  %v3992 = vld [vmem:[%s3954 + $0x20] sm:$0xff]
                  %3993 = vst [vmem:[%s3955 + $0x28] sm:$0xff] %v3992
                  %v3994 = vld [vmem:[%s3954 + $0x28] sm:$0xff]
                  %3995 = vst [vmem:[%s3955 + $0x30] sm:$0xff] %v3994
                  %v3996 = vld [vmem:[%s3954 + $0x30] sm:$0xff]
                  %3997 = vst [vmem:[%s3955 + $0x38] sm:$0xff] %v3996
                  %v3998 = vld [vmem:[%s3954 + $0x38] sm:$0xff]
                  %3999 = vst [vmem:[%s3955 + $0x40] sm:$0xff] %v3998
                  %v4000 = vld [vmem:[%s3954 + $0x40] sm:$0xff]
                  %4001 = vst [vmem:[%s3955 + $0x48] sm:$0xff] %v4000
                  %v4002 = vld [vmem:[%s3954 + $0x48] sm:$0xff]
                  %4003 = vst [vmem:[%s3955 + $0x50] sm:$0xff] %v4002
                  %v4004 = vld [vmem:[%s3954 + $0x50] sm:$0xff]
                  %4005 = vst [vmem:[%s3955 + $0x58] sm:$0xff] %v4004
                  %v4006 = vld [vmem:[%s3954 + $0x58] sm:$0xff]
                  %4007 = vst [vmem:[%s3955 + $0x60] sm:$0xff] %v4006
                  %v4008 = vld [vmem:[%s3954 + $0x60] sm:$0xff]
                  %4009 = vst [vmem:[%s3955 + $0x68] sm:$0xff] %v4008
                  %v4010 = vld [vmem:[%s3954 + $0x68] sm:$0xff]
                  %4011 = vst [vmem:[%s3955 + $0x70] sm:$0xff] %v4010
                  %v4012 = vld [vmem:[%s3954 + $0x70] sm:$0xff]
                  %4013 = vst [vmem:[%s3955 + $0x78] sm:$0xff] %v4012
                  %v4014 = vld [vmem:[%s3954 + $0x78] sm:$0xff]
                  %4015 = vst [vmem:[%s3955 + $0x80] sm:$0xff] %v4014
                  %v4016 = vld [vmem:[%s3954 + $0x80] sm:$0xff]
                  %4017 = vst [vmem:[%s3955 + $0x88] sm:$0xff] %v4016
                  %v4018 = vld [vmem:[%s3954 + $0x88] sm:$0xff]
                  %4019 = vst [vmem:[%s3955 + $0x90] sm:$0xff] %v4018
                  %v4020 = vld [vmem:[%s3954 + $0x20] sm:$0xff]
                  %4021 = vst [vmem:[%s3955 + $0x30] sm:$0xff] %v4020
                  %v4022 = vld [vmem:[%s3954 + $0x28] sm:$0xff]
                  %4023 = vst [vmem:[%s3955 + $0x38] sm:$0xff] %v4022
                  %v4024 = vld [vmem:[%s3954 + $0x30] sm:$0xff]
                  %4025 = vst [vmem:[%s3955 + $0x40] sm:$0xff] %v4024
                  %v4026 = vld [vmem:[%s3954 + $0x38] sm:$0xff]
                  %4027 = vst [vmem:[%s3955 + $0x48] sm:$0xff] %v4026
                  %v4028 = vld [vmem:[%s3954 + $0x40] sm:$0xff]
                  %4029 = vst [vmem:[%s3955 + $0x50] sm:$0xff] %v4028
                  %v4030 = vld [vmem:[%s3954 + $0x48] sm:$0xff]
                  %4031 = vst [vmem:[%s3955 + $0x58] sm:$0xff] %v4030
                  %v4032 = vld [vmem:[%s3954 + $0x50] sm:$0xff]
                  %4033 = vst [vmem:[%s3955 + $0x60] sm:$0xff] %v4032
                  %v4034 = vld [vmem:[%s3954 + $0x58] sm:$0xff]
                  %4035 = vst [vmem:[%s3955 + $0x68] sm:$0xff] %v4034
                  %v4036 = vld [vmem:[%s3954 + $0x60] sm:$0xff]
                  %4037 = vst [vmem:[%s3955 + $0x70] sm:$0xff] %v4036
                  %v4038 = vld [vmem:[%s3954 + $0x68] sm:$0xff]
                  %4039 = vst [vmem:[%s3955 + $0x78] sm:$0xff] %v4038
                  %v4040 = vld [vmem:[%s3954 + $0x70] sm:$0xff]
                  %4041 = vst [vmem:[%s3955 + $0x80] sm:$0xff] %v4040
                  %v4042 = vld [vmem:[%s3954 + $0x78] sm:$0xff]
                  %4043 = vst [vmem:[%s3955 + $0x88] sm:$0xff] %v4042
                  %v4044 = vld [vmem:[%s3954 + $0x80] sm:$0xff]
                  %4045 = vst [vmem:[%s3955 + $0x90] sm:$0xff] %v4044
                  %v4046 = vld [vmem:[%s3954 + $0x88] sm:$0xff]
                  %4047 = vst [vmem:[%s3955 + $0x98] sm:$0xff] %v4046
                  %v4048 = vld [vmem:[%s3954 + $0x90] sm:$0xff]
                  %4049 = vst [vmem:[%s3955 + $0xa0] sm:$0xff] %v4048
                  %v4050 = vld [vmem:[%s3954 + $0x98] sm:$0xff]
                  %4051 = vst [vmem:[%s3955 + $0xa8] sm:$0xff] %v4050
                  %v4052 = vld [vmem:[%s3954 + $0x30] sm:$0xff]
                  %4053 = vst [vmem:[%s3955 + $0x48] sm:$0xff] %v4052
                  %v4054 = vld [vmem:[%s3954 + $0x38] sm:$0xff]
                  %4055 = vst [vmem:[%s3955 + $0x50] sm:$0xff] %v4054
                  %v4056 = vld [vmem:[%s3954 + $0x40] sm:$0xff]
                  %4057 = vst [vmem:[%s3955 + $0x58] sm:$0xff] %v4056
                  %v4058 = vld [vmem:[%s3954 + $0x48] sm:$0xff]
                  %4059 = vst [vmem:[%s3955 + $0x60] sm:$0xff] %v4058
                  %v4060 = vld [vmem:[%s3954 + $0x50] sm:$0xff]
                  %4061 = vst [vmem:[%s3955 + $0x68] sm:$0xff] %v4060
                  %v4062 = vld [vmem:[%s3954 + $0x58] sm:$0xff]
                  %4063 = vst [vmem:[%s3955 + $0x70] sm:$0xff] %v4062
                  %v4064 = vld [vmem:[%s3954 + $0x60] sm:$0xff]
                  %4065 = vst [vmem:[%s3955 + $0x78] sm:$0xff] %v4064
                  %v4066 = vld [vmem:[%s3954 + $0x68] sm:$0xff]
                  %4067 = vst [vmem:[%s3955 + $0x80] sm:$0xff] %v4066
                  %v4068 = vld [vmem:[%s3954 + $0x70] sm:$0xff]
                  %4069 = vst [vmem:[%s3955 + $0x88] sm:$0xff] %v4068
                  %v4070 = vld [vmem:[%s3954 + $0x78] sm:$0xff]
                  %4071 = vst [vmem:[%s3955 + $0x90] sm:$0xff] %v4070
                  %v4072 = vld [vmem:[%s3954 + $0x80] sm:$0xff]
                  %4073 = vst [vmem:[%s3955 + $0x98] sm:$0xff] %v4072
                  %v4074 = vld [vmem:[%s3954 + $0x88] sm:$0xff]
                  %4075 = vst [vmem:[%s3955 + $0xa0] sm:$0xff] %v4074
                  %v4076 = vld [vmem:[%s3954 + $0x90] sm:$0xff]
                  %4077 = vst [vmem:[%s3955 + $0xa8] sm:$0xff] %v4076
                  %v4078 = vld [vmem:[%s3954 + $0x98] sm:$0xff]
                  %4079 = vst [vmem:[%s3955 + $0xb0] sm:$0xff] %v4078
                  %v4080 = vld [vmem:[%s3954 + $0xa0] sm:$0xff]
                  %4081 = vst [vmem:[%s3955 + $0xb8] sm:$0xff] %v4080
                  %v4082 = vld [vmem:[%s3954 + $0xa8] sm:$0xff]
                  %4083 = vst [vmem:[%s3955 + $0xc0] sm:$0xff] %v4082
                  %s4084 = sadd.s32 1, %s3953
                  %p4085 = scmp.ge.s32.totalorder %s4084, %s3944
                  %s4086 = scalar_select %p4085, 0, %s4084
                  %s4087 = smul.u32 %s4086, 128
                  %s4088 = smul.u32 %s4086, 128
                  %s4089 = scalar_lea.vmem %s3898, %s4087 [#allocation2]
                  %s4090 = scalar_lea.vmem %s3909, %s4088
                $region88: #{_forward_jit.1} parent=82 // loop_footer
                  %s3950 = sadd.s32 %s3948, 1
                $region89: #{_forward_jit.1} parent=82 // loop_footer_branch
                  %3947 = sbr.rel target = $region85
                $region90: #{_forward_jit.1} parent=82 // loop_exit
                  _
                %s4091 = sshrl.u32 %s3943, 4
                %s4092 = sand.u32 %s3943, 15
                %s4093 = smul.u32 %s4091, 16
                %s4094 = smul.u32 128, %s4093
                %s4095 = sshra.s32 %s4094, 4
                %s4096 = scalar_lea.vmem %s3898, %s4095 [#allocation2]
                %s4097 = smul.u32 128, %s4093
                %s4098 = sshra.s32 %s4097, 4
                %s4099 = scalar_lea.vmem %s3909, %s4098
                // While loop
                $region91: #{_forward_jit.1} parent=82 // loop_pre_header
                  _
                $region92: #{_forward_jit.1} parent=82 // loop_header
                  %s4103 = sphi 0, %s4105
                  %p4104 = scmp.ge.s32.totalorder %s4103, %s4092
                  %s4108 = sphi 0, %s4121
                  %s4109 = sphi %s4096, %s4124
                  %s4110 = sphi %s4099, %s4125
                $region93: #{_forward_jit.1} parent=82 // loop_header_branch
                  %4107 = sbr.rel (%p4104) target = $region97
                $region94: #{_forward_jit.1} parent=82 // loop_body
                  %v4111 = vld [vmem:[%s4109] sm:$0xff]
                  %4112 = vst [vmem:[%s4110] sm:$0xff] %v4111
                  %v4113 = vld [vmem:[%s4109 + $0x10] sm:$0xff]
                  %4114 = vst [vmem:[%s4110 + $0x18] sm:$0xff] %v4113
                  %v4115 = vld [vmem:[%s4109 + $0x20] sm:$0xff]
                  %4116 = vst [vmem:[%s4110 + $0x30] sm:$0xff] %v4115
                  %v4117 = vld [vmem:[%s4109 + $0x30] sm:$0xff]
                  %4118 = vst [vmem:[%s4110 + $0x48] sm:$0xff] %v4117
                  %s4119 = sadd.s32 1, %s4108
                  %p4120 = scmp.ge.s32.totalorder %s4119, %s4092
                  %s4121 = scalar_select %p4120, 0, %s4119
                  %s4122 = smul.u32 %s4121, 8
                  %s4123 = smul.u32 %s4121, 8
                  %s4124 = scalar_lea.vmem %s4096, %s4122 [#allocation2]
                  %s4125 = scalar_lea.vmem %s4099, %s4123
                $region95: #{_forward_jit.1} parent=82 // loop_footer
                  %s4105 = sadd.s32 %s4103, 1
                $region96: #{_forward_jit.1} parent=82 // loop_footer_branch
                  %4102 = sbr.rel target = $region92
                $region97: #{_forward_jit.1} parent=82 // loop_exit
                  _
              $region83: #{_forward_jit.1} parent=67 // pred_fallthru
                _
              %p4126 = pneg %p3939
              // Predicated region
              $region98: #{_forward_jit.1} parent=67 // pred_check
                _
              $region99: #{_forward_jit.1} parent=67 // pred_check_branch
                %4128 = sbr.rel (%p3939) target = $region101
              $region100: #{_forward_jit.1} parent=67 // pred_region
                %s4129 = sand.u32 %s3910, 7
                %s4130 = ssub.s32 %s3910, %s4129
                %s4131 = scalar_lea.vmem %s3898, %s4130 [#allocation2]
                %s4132 = ssub.s32 %s3910, %s4129
                %s4133 = scalar_lea.vmem %s3909, %s4132
                %s4134 = sshrl.u32 %s3910, 3
                %s4135 = sshrl.u32 %s4134, 4
                // While loop
                $region102: #{_forward_jit.1} parent=100 // loop_pre_header
                  _
                $region103: #{_forward_jit.1} parent=100 // loop_header
                  %s4139 = sphi 0, %s4141
                  %p4140 = scmp.ge.s32.totalorder %s4139, %s4135
                  %s4144 = sphi 0, %s4277
                  %s4145 = sphi %s3898, %s4280
                  %s4146 = sphi %s3909, %s4281
                $region104: #{_forward_jit.1} parent=100 // loop_header_branch
                  %4143 = sbr.rel (%p4140) target = $region108
                $region105: #{_forward_jit.1} parent=100 // loop_body
                  %v4147 = vld [vmem:[%s4145] sm:$0xff]
                  %4148 = vst [vmem:[%s4146] sm:$0xff] %v4147
                  %v4149 = vld [vmem:[%s4145 + $0x8] sm:$0xff]
                  %4150 = vst [vmem:[%s4146 + $0x8] sm:$0xff] %v4149
                  %v4151 = vld [vmem:[%s4145 + $0x10] sm:$0xff]
                  %4152 = vst [vmem:[%s4146 + $0x10] sm:$0xff] %v4151
                  %v4153 = vld [vmem:[%s4145 + $0x18] sm:$0xff]
                  %4154 = vst [vmem:[%s4146 + $0x18] sm:$0xff] %v4153
                  %v4155 = vld [vmem:[%s4145 + $0x20] sm:$0xff]
                  %4156 = vst [vmem:[%s4146 + $0x20] sm:$0xff] %v4155
                  %v4157 = vld [vmem:[%s4145 + $0x28] sm:$0xff]
                  %4158 = vst [vmem:[%s4146 + $0x28] sm:$0xff] %v4157
                  %v4159 = vld [vmem:[%s4145 + $0x30] sm:$0xff]
                  %4160 = vst [vmem:[%s4146 + $0x30] sm:$0xff] %v4159
                  %v4161 = vld [vmem:[%s4145 + $0x38] sm:$0xff]
                  %4162 = vst [vmem:[%s4146 + $0x38] sm:$0xff] %v4161
                  %v4163 = vld [vmem:[%s4145 + $0x40] sm:$0xff]
                  %4164 = vst [vmem:[%s4146 + $0x40] sm:$0xff] %v4163
                  %v4165 = vld [vmem:[%s4145 + $0x48] sm:$0xff]
                  %4166 = vst [vmem:[%s4146 + $0x48] sm:$0xff] %v4165
                  %v4167 = vld [vmem:[%s4145 + $0x50] sm:$0xff]
                  %4168 = vst [vmem:[%s4146 + $0x50] sm:$0xff] %v4167
                  %v4169 = vld [vmem:[%s4145 + $0x58] sm:$0xff]
                  %4170 = vst [vmem:[%s4146 + $0x58] sm:$0xff] %v4169
                  %v4171 = vld [vmem:[%s4145 + $0x60] sm:$0xff]
                  %4172 = vst [vmem:[%s4146 + $0x60] sm:$0xff] %v4171
                  %v4173 = vld [vmem:[%s4145 + $0x68] sm:$0xff]
                  %4174 = vst [vmem:[%s4146 + $0x68] sm:$0xff] %v4173
                  %v4175 = vld [vmem:[%s4145 + $0x70] sm:$0xff]
                  %4176 = vst [vmem:[%s4146 + $0x70] sm:$0xff] %v4175
                  %v4177 = vld [vmem:[%s4145 + $0x78] sm:$0xff]
                  %4178 = vst [vmem:[%s4146 + $0x78] sm:$0xff] %v4177
                  %v4179 = vld [vmem:[%s4145 + $0x10] sm:$0xff]
                  %4180 = vst [vmem:[%s4146 + $0x18] sm:$0xff] %v4179
                  %v4181 = vld [vmem:[%s4145 + $0x18] sm:$0xff]
                  %4182 = vst [vmem:[%s4146 + $0x20] sm:$0xff] %v4181
                  %v4183 = vld [vmem:[%s4145 + $0x20] sm:$0xff]
                  %4184 = vst [vmem:[%s4146 + $0x28] sm:$0xff] %v4183
                  %v4185 = vld [vmem:[%s4145 + $0x28] sm:$0xff]
                  %4186 = vst [vmem:[%s4146 + $0x30] sm:$0xff] %v4185
                  %v4187 = vld [vmem:[%s4145 + $0x30] sm:$0xff]
                  %4188 = vst [vmem:[%s4146 + $0x38] sm:$0xff] %v4187
                  %v4189 = vld [vmem:[%s4145 + $0x38] sm:$0xff]
                  %4190 = vst [vmem:[%s4146 + $0x40] sm:$0xff] %v4189
                  %v4191 = vld [vmem:[%s4145 + $0x40] sm:$0xff]
                  %4192 = vst [vmem:[%s4146 + $0x48] sm:$0xff] %v4191
                  %v4193 = vld [vmem:[%s4145 + $0x48] sm:$0xff]
                  %4194 = vst [vmem:[%s4146 + $0x50] sm:$0xff] %v4193
                  %v4195 = vld [vmem:[%s4145 + $0x50] sm:$0xff]
                  %4196 = vst [vmem:[%s4146 + $0x58] sm:$0xff] %v4195
                  %v4197 = vld [vmem:[%s4145 + $0x58] sm:$0xff]
                  %4198 = vst [vmem:[%s4146 + $0x60] sm:$0xff] %v4197
                  %v4199 = vld [vmem:[%s4145 + $0x60] sm:$0xff]
                  %4200 = vst [vmem:[%s4146 + $0x68] sm:$0xff] %v4199
                  %v4201 = vld [vmem:[%s4145 + $0x68] sm:$0xff]
                  %4202 = vst [vmem:[%s4146 + $0x70] sm:$0xff] %v4201
                  %v4203 = vld [vmem:[%s4145 + $0x70] sm:$0xff]
                  %4204 = vst [vmem:[%s4146 + $0x78] sm:$0xff] %v4203
                  %v4205 = vld [vmem:[%s4145 + $0x78] sm:$0xff]
                  %4206 = vst [vmem:[%s4146 + $0x80] sm:$0xff] %v4205
                  %v4207 = vld [vmem:[%s4145 + $0x80] sm:$0xff]
                  %4208 = vst [vmem:[%s4146 + $0x88] sm:$0xff] %v4207
                  %v4209 = vld [vmem:[%s4145 + $0x88] sm:$0xff]
                  %4210 = vst [vmem:[%s4146 + $0x90] sm:$0xff] %v4209
                  %v4211 = vld [vmem:[%s4145 + $0x20] sm:$0xff]
                  %4212 = vst [vmem:[%s4146 + $0x30] sm:$0xff] %v4211
                  %v4213 = vld [vmem:[%s4145 + $0x28] sm:$0xff]
                  %4214 = vst [vmem:[%s4146 + $0x38] sm:$0xff] %v4213
                  %v4215 = vld [vmem:[%s4145 + $0x30] sm:$0xff]
                  %4216 = vst [vmem:[%s4146 + $0x40] sm:$0xff] %v4215
                  %v4217 = vld [vmem:[%s4145 + $0x38] sm:$0xff]
                  %4218 = vst [vmem:[%s4146 + $0x48] sm:$0xff] %v4217
                  %v4219 = vld [vmem:[%s4145 + $0x40] sm:$0xff]
                  %4220 = vst [vmem:[%s4146 + $0x50] sm:$0xff] %v4219
                  %v4221 = vld [vmem:[%s4145 + $0x48] sm:$0xff]
                  %4222 = vst [vmem:[%s4146 + $0x58] sm:$0xff] %v4221
                  %v4223 = vld [vmem:[%s4145 + $0x50] sm:$0xff]
                  %4224 = vst [vmem:[%s4146 + $0x60] sm:$0xff] %v4223
                  %v4225 = vld [vmem:[%s4145 + $0x58] sm:$0xff]
                  %4226 = vst [vmem:[%s4146 + $0x68] sm:$0xff] %v4225
                  %v4227 = vld [vmem:[%s4145 + $0x60] sm:$0xff]
                  %4228 = vst [vmem:[%s4146 + $0x70] sm:$0xff] %v4227
                  %v4229 = vld [vmem:[%s4145 + $0x68] sm:$0xff]
                  %4230 = vst [vmem:[%s4146 + $0x78] sm:$0xff] %v4229
                  %v4231 = vld [vmem:[%s4145 + $0x70] sm:$0xff]
                  %4232 = vst [vmem:[%s4146 + $0x80] sm:$0xff] %v4231
                  %v4233 = vld [vmem:[%s4145 + $0x78] sm:$0xff]
                  %4234 = vst [vmem:[%s4146 + $0x88] sm:$0xff] %v4233
                  %v4235 = vld [vmem:[%s4145 + $0x80] sm:$0xff]
                  %4236 = vst [vmem:[%s4146 + $0x90] sm:$0xff] %v4235
                  %v4237 = vld [vmem:[%s4145 + $0x88] sm:$0xff]
                  %4238 = vst [vmem:[%s4146 + $0x98] sm:$0xff] %v4237
                  %v4239 = vld [vmem:[%s4145 + $0x90] sm:$0xff]
                  %4240 = vst [vmem:[%s4146 + $0xa0] sm:$0xff] %v4239
                  %v4241 = vld [vmem:[%s4145 + $0x98] sm:$0xff]
                  %4242 = vst [vmem:[%s4146 + $0xa8] sm:$0xff] %v4241
                  %v4243 = vld [vmem:[%s4145 + $0x30] sm:$0xff]
                  %4244 = vst [vmem:[%s4146 + $0x48] sm:$0xff] %v4243
                  %v4245 = vld [vmem:[%s4145 + $0x38] sm:$0xff]
                  %4246 = vst [vmem:[%s4146 + $0x50] sm:$0xff] %v4245
                  %v4247 = vld [vmem:[%s4145 + $0x40] sm:$0xff]
                  %4248 = vst [vmem:[%s4146 + $0x58] sm:$0xff] %v4247
                  %v4249 = vld [vmem:[%s4145 + $0x48] sm:$0xff]
                  %4250 = vst [vmem:[%s4146 + $0x60] sm:$0xff] %v4249
                  %v4251 = vld [vmem:[%s4145 + $0x50] sm:$0xff]
                  %4252 = vst [vmem:[%s4146 + $0x68] sm:$0xff] %v4251
                  %v4253 = vld [vmem:[%s4145 + $0x58] sm:$0xff]
                  %4254 = vst [vmem:[%s4146 + $0x70] sm:$0xff] %v4253
                  %v4255 = vld [vmem:[%s4145 + $0x60] sm:$0xff]
                  %4256 = vst [vmem:[%s4146 + $0x78] sm:$0xff] %v4255
                  %v4257 = vld [vmem:[%s4145 + $0x68] sm:$0xff]
                  %4258 = vst [vmem:[%s4146 + $0x80] sm:$0xff] %v4257
                  %v4259 = vld [vmem:[%s4145 + $0x70] sm:$0xff]
                  %4260 = vst [vmem:[%s4146 + $0x88] sm:$0xff] %v4259
                  %v4261 = vld [vmem:[%s4145 + $0x78] sm:$0xff]
                  %4262 = vst [vmem:[%s4146 + $0x90] sm:$0xff] %v4261
                  %v4263 = vld [vmem:[%s4145 + $0x80] sm:$0xff]
                  %4264 = vst [vmem:[%s4146 + $0x98] sm:$0xff] %v4263
                  %v4265 = vld [vmem:[%s4145 + $0x88] sm:$0xff]
                  %4266 = vst [vmem:[%s4146 + $0xa0] sm:$0xff] %v4265
                  %v4267 = vld [vmem:[%s4145 + $0x90] sm:$0xff]
                  %4268 = vst [vmem:[%s4146 + $0xa8] sm:$0xff] %v4267
                  %v4269 = vld [vmem:[%s4145 + $0x98] sm:$0xff]
                  %4270 = vst [vmem:[%s4146 + $0xb0] sm:$0xff] %v4269
                  %v4271 = vld [vmem:[%s4145 + $0xa0] sm:$0xff]
                  %4272 = vst [vmem:[%s4146 + $0xb8] sm:$0xff] %v4271
                  %v4273 = vld [vmem:[%s4145 + $0xa8] sm:$0xff]
                  %4274 = vst [vmem:[%s4146 + $0xc0] sm:$0xff] %v4273
                  %s4275 = sadd.s32 1, %s4144
                  %p4276 = scmp.ge.s32.totalorder %s4275, %s4135
                  %s4277 = scalar_select %p4276, 0, %s4275
                  %s4278 = smul.u32 %s4277, 128
                  %s4279 = smul.u32 %s4277, 128
                  %s4280 = scalar_lea.vmem %s3898, %s4278 [#allocation2]
                  %s4281 = scalar_lea.vmem %s3909, %s4279
                $region106: #{_forward_jit.1} parent=100 // loop_footer
                  %s4141 = sadd.s32 %s4139, 1
                $region107: #{_forward_jit.1} parent=100 // loop_footer_branch
                  %4138 = sbr.rel target = $region103
                $region108: #{_forward_jit.1} parent=100 // loop_exit
                  _
                %s4282 = sshrl.u32 %s4134, 4
                %s4283 = sand.u32 %s4134, 15
                %s4284 = smul.u32 %s4282, 16
                %s4285 = smul.u32 128, %s4284
                %s4286 = sshra.s32 %s4285, 4
                %s4287 = scalar_lea.vmem %s3898, %s4286 [#allocation2]
                %s4288 = smul.u32 128, %s4284
                %s4289 = sshra.s32 %s4288, 4
                %s4290 = scalar_lea.vmem %s3909, %s4289
                // While loop
                $region109: #{_forward_jit.1} parent=100 // loop_pre_header
                  _
                $region110: #{_forward_jit.1} parent=100 // loop_header
                  %s4294 = sphi 0, %s4296
                  %p4295 = scmp.ge.s32.totalorder %s4294, %s4283
                  %s4299 = sphi 0, %s4312
                  %s4300 = sphi %s4287, %s4315
                  %s4301 = sphi %s4290, %s4316
                $region111: #{_forward_jit.1} parent=100 // loop_header_branch
                  %4298 = sbr.rel (%p4295) target = $region115
                $region112: #{_forward_jit.1} parent=100 // loop_body
                  %v4302 = vld [vmem:[%s4300] sm:$0xff]
                  %4303 = vst [vmem:[%s4301] sm:$0xff] %v4302
                  %v4304 = vld [vmem:[%s4300 + $0x10] sm:$0xff]
                  %4305 = vst [vmem:[%s4301 + $0x18] sm:$0xff] %v4304
                  %v4306 = vld [vmem:[%s4300 + $0x20] sm:$0xff]
                  %4307 = vst [vmem:[%s4301 + $0x30] sm:$0xff] %v4306
                  %v4308 = vld [vmem:[%s4300 + $0x30] sm:$0xff]
                  %4309 = vst [vmem:[%s4301 + $0x48] sm:$0xff] %v4308
                  %s4310 = sadd.s32 1, %s4299
                  %p4311 = scmp.ge.s32.totalorder %s4310, %s4283
                  %s4312 = scalar_select %p4311, 0, %s4310
                  %s4313 = smul.u32 %s4312, 8
                  %s4314 = smul.u32 %s4312, 8
                  %s4315 = scalar_lea.vmem %s4287, %s4313 [#allocation2]
                  %s4316 = scalar_lea.vmem %s4290, %s4314
                $region113: #{_forward_jit.1} parent=100 // loop_footer
                  %s4296 = sadd.s32 %s4294, 1
                $region114: #{_forward_jit.1} parent=100 // loop_footer_branch
                  %4293 = sbr.rel target = $region110
                $region115: #{_forward_jit.1} parent=100 // loop_exit
                  _
                %s4317 = sshllo.u32 0, %s4129
                loop: start=0, step=1, limit=1
                $region116: #{_forward_jit.1} parent=100 // loop_pre_header
                  _
                $region117: #{_forward_jit.1} parent=100 // loop_header
                  %s4319 = sphi 0, %s4323
                  %p4320 = scmp.ge.s32.totalorder %s4319, 1
                  %s4324 = sphi %s4131, %s4131
                  %s4325 = sphi %s4133, %s4133
                $region118: #{_forward_jit.1} parent=100 // loop_header_branch
                  %4322 = sbr.rel (%p4320) target = $region122
                $region119: #{_forward_jit.1} parent=100 // loop_body
                  %v4326 = vld [vmem:[%s4324] sm:%s4317]
                  %4327 = vst [vmem:[%s4325] sm:%s4317] %v4326
                  %v4328 = vld [vmem:[%s4324 + $0x10] sm:%s4317]
                  %4329 = vst [vmem:[%s4325 + $0x18] sm:%s4317] %v4328
                  %v4330 = vld [vmem:[%s4324 + $0x20] sm:%s4317]
                  %4331 = vst [vmem:[%s4325 + $0x30] sm:%s4317] %v4330
                  %v4332 = vld [vmem:[%s4324 + $0x30] sm:%s4317]
                  %4333 = vst [vmem:[%s4325 + $0x48] sm:%s4317] %v4332
                $region120: #{_forward_jit.1} parent=100 // loop_footer
                  %s4323 = sadd.s32 1, %s4319
                $region121: #{_forward_jit.1} parent=100 // loop_footer_branch
                  %4318 = sbr.rel target = $region117
                $region122: #{_forward_jit.1} parent=100 // loop_exit
                  _
              $region101: #{_forward_jit.1} parent=67 // pred_fallthru
                _
            $region68: #{_forward_jit.1} parent=63 // pred_fallthru
              _
            // Predicated region
            $region69: #{_forward_jit.1} parent=63 // pred_check
              %p3918 = pneg %p3914
            $region70: #{_forward_jit.1} parent=63 // pred_check_branch
              %3920 = sbr.rel (%p3918) target = $region72
            $region71: #{_forward_jit.1} parent=63 // pred_region
              %s3921 = sshllo.u32 0, %s3910
              loop: start=0, step=1, limit=1
              $region73: #{_forward_jit.1} parent=71 // loop_pre_header
                _
              $region74: #{_forward_jit.1} parent=71 // loop_header
                %s3923 = sphi 0, %s3927
                %p3924 = scmp.ge.s32.totalorder %s3923, 1
                %s3928 = sphi %s3898, %s3898
                %s3929 = sphi %s3909, %s3909
              $region75: #{_forward_jit.1} parent=71 // loop_header_branch
                %3926 = sbr.rel (%p3924) target = $region79
              $region76: #{_forward_jit.1} parent=71 // loop_body
                %v3930 = vld [vmem:[%s3928] sm:%s3921]
                %3931 = vst [vmem:[%s3929] sm:%s3921] %v3930
                %v3932 = vld [vmem:[%s3928 + $0x10] sm:%s3921]
                %3933 = vst [vmem:[%s3929 + $0x18] sm:%s3921] %v3932
                %v3934 = vld [vmem:[%s3928 + $0x20] sm:%s3921]
                %3935 = vst [vmem:[%s3929 + $0x30] sm:%s3921] %v3934
                %v3936 = vld [vmem:[%s3928 + $0x30] sm:%s3921]
                %3937 = vst [vmem:[%s3929 + $0x48] sm:%s3921] %v3936
              $region77: #{_forward_jit.1} parent=71 // loop_footer
                %s3927 = sadd.s32 1, %s3923
              $region78: #{_forward_jit.1} parent=71 // loop_footer_branch
                %3922 = sbr.rel target = $region74
              $region79: #{_forward_jit.1} parent=71 // loop_exit
                _
            $region72: #{_forward_jit.1} parent=63 // pred_fallthru
              _
          $region64: #{_forward_jit.1} parent=59 // pred_fallthru
            _
          %4334 = vnop
        $region60: #{_forward_jit.1} parent=55 // pred_fallthru
          _
      $region56: #{_forward_jit.1} parent=5 // pred_fallthru
        _
      %p4335 = scmp.le.s32.totalorder 2, %s15
      // Predicated region
      $region123: #{_forward_jit.1} parent=5 // pred_check
        %p4336 = pneg %p4335
      $region124: #{_forward_jit.1} parent=5 // pred_check_branch
        %4338 = sbr.rel (%p4336) target = $region126
      $region125: #{_forward_jit.1} parent=5 // pred_region
        %s4339 = ssub.s32 %s15, 2
        // Predicated region
        $region127: #{_forward_jit.1} parent=125 // pred_check
          %p4340 = pneg %p238
        $region128: #{_forward_jit.1} parent=125 // pred_check_branch
          %4342 = sbr.rel (%p4340) target = $region130
        $region129: #{_forward_jit.1} parent=125 // pred_region
          %s4343 = sand.u32 %s223, 1
          %s4344 = sand.u32 %s223, 1
          %s4345 = smul.addr %s4344, 64
          %s4346 = scalar_lea.vmem [#allocation2], %s4345
        $region130: #{_forward_jit.1} parent=125 // pred_fallthru
          _
      $region126: #{_forward_jit.1} parent=5 // pred_fallthru
        _
    $region6: #{_forward_jit.1} parent=1 // loop_footer
      %s19 = sadd.s32 1, %s15
    $region7: #{_forward_jit.1} parent=1 // loop_footer_branch
      %14 = sbr.rel target = $region3
    $region8: #{_forward_jit.1} parent=1 // loop_exit
      _

</llo_original>
